<compile_context>
chip_gen: v7x
topology: tpu7x:2x2x1
jax: 0.10.0
libtpu: 0.0.40
codegen_flags: <defaults>
</compile_context>

<pallas_src>
import functools
import math

import jax
import jax.numpy as jnp
from jax import lax
from jax.experimental import pallas as pl
from jax.experimental.pallas import tpu as pltpu

LATENT_DIM = 100
INNER_DIM = 1000
OUT_DIM = 1

# padded sizes (lane-aligned)
IN_PAD = 128       # latent_dim + 1 = 101 -> 128
HID_PAD = 1024     # inner_dim = 1000     -> 1024
OUT_PAD = 128      # lane-dense output tile; the energy lives in column 0

WEIGHT_DTYPE = jnp.bfloat16   # bf16 weight storage, f32 accumulation on the MXU
APPROX_GELU = False           # True -> tanh GELU on the EUP slot (frees VALU bundles,
                              # slight drift from PyTorch's exact erf GELU)
TILE_B_DEFAULT = 256          # batch rows per grid step (~1 MiB f32 live activations)


def _gelu(x):
    if APPROX_GELU:
        return jax.nn.gelu(x, approximate=True)
    # exact erf-based GELU == torch.nn.functional.gelu default
    return 0.5 * x * (1.0 + lax.erf(x * (1.0 / math.sqrt(2.0))))


def _round_up(x, m):
    return ((x + m - 1) // m) * m


def _ebm_kernel(zt_ref, w1_ref, b1_ref, w2_ref, b2_ref, w3_ref, b3_ref, o_ref):
    # Layer 1: (tb, IN_PAD) @ (IN_PAD, HID_PAD); bf16 operands, f32 accumulate.
    zt = zt_ref[...].astype(WEIGHT_DTYPE)
    h = jnp.dot(zt, w1_ref[...], preferred_element_type=jnp.float32)
    h = _gelu(h + b1_ref[...])
    # Layer 2: (tb, HID_PAD) @ (HID_PAD, HID_PAD)
    h = jnp.dot(h.astype(WEIGHT_DTYPE), w2_ref[...], preferred_element_type=jnp.float32)
    h = _gelu(h + b2_ref[...])
    # Layer 3: the (1000, 1) weight is stored as a (1, HID_PAD) row -> VPU multiply
    # + lane reduction (XLU) instead of a 127/128-padding MXU pass.
    e = jnp.sum(h * w3_ref[...].astype(jnp.float32), axis=-1, keepdims=True)  # (tb, 1)
    o_ref[...] = e + b3_ref[...]  # broadcast into the lane-dense (tb, OUT_PAD) tile


# TODO(synk): for Langevin/MCMC sampling loops that call E_func repeatedly at small B,
# amortize the weight DMA by batching chains/steps into one large-B call (the batch
# grid below supports it) or by keeping weights VMEM-resident across calls (P10).
@functools.partial(jax.jit, static_argnames=("tile_b",))
def e_func_forward(z, t, params, *, tile_b=None):
    """z: (B, 100) f32, t: (B,) f32 -> (B, 1, 1, 1) f32."""
    w1, b1, w2, b2, w3, b3 = params
    B = z.shape[0]
    if tile_b is None:
        tile_b = min(TILE_B_DEFAULT, _round_up(B, 8))
    tile_b = max(8, _round_up(tile_b, 8))
    B_pad = _round_up(B, tile_b)
    grid = (B_pad // tile_b,)

    # zt = cat([z, t[:, None]], 1), zero-padded to (B_pad, IN_PAD) (no scatter).
    zt = jnp.concatenate(
        [z.astype(jnp.float32), t.reshape(-1, 1).astype(jnp.float32)], axis=1)
    zt_p = jnp.pad(zt, ((0, B_pad - B), (0, IN_PAD - (LATENT_DIM + 1))))

    def const(shape):  # weight/bias blocks: same block every grid step -> stay resident
        return pl.BlockSpec(shape, lambda i: (0, 0))

    out_p = pl.pallas_call(
        _ebm_kernel,
        out_shape=jax.ShapeDtypeStruct((B_pad, OUT_PAD), jnp.float32),
        grid=grid,
        in_specs=[
            pl.BlockSpec((tile_b, IN_PAD), lambda i: (i, 0)),   # zt: streamed per step
            const((IN_PAD, HID_PAD)),    # w1 (bf16, resident)
            const((1, HID_PAD)),         # b1
            const((HID_PAD, HID_PAD)),   # w2 (bf16, resident)
            const((1, HID_PAD)),         # b2
            const((1, HID_PAD)),         # w3 row (bf16)
            const((1, OUT_PAD)),         # b3
        ],
        out_specs=pl.BlockSpec((tile_b, OUT_PAD), lambda i: (i, 0)),
        compiler_params=pltpu.CompilerParams(
            dimension_semantics=("parallel",),       # shards batch tiles across v7x TCs
            vmem_limit_bytes=32 * 1024 * 1024,       # headroom over v5e's 16 MiB default
        ),
    )(zt_p, w1, b1, w2, b2, w3, b3)

    e = out_p[:B, :OUT_DIM]                # (B, 1): energy is in lane 0
    return e.reshape(-1, OUT_DIM, 1, 1)    # (B, 1, 1, 1)


def init_params(key):
    """Synthetic PyTorch-style init (uniform(-1/sqrt(fan_in), +)), stored padded.
    Weights: (in_pad, out_pad) bf16 (w3 as a (1, HID_PAD) row); biases: (1, out_pad) f32."""
    ks = jax.random.split(key, 6)

    def linear(kw, kb, fan_in, fan_out, in_pad, out_pad):
        bound = 1.0 / math.sqrt(fan_in)
        w = jax.random.uniform(kw, (fan_in, fan_out), jnp.float32, -bound, bound)
        b = jax.random.uniform(kb, (fan_out,), jnp.float32, -bound, bound)
        w_p = jnp.zeros((in_pad, out_pad), jnp.float32).at[:fan_in, :fan_out].set(w)
        b_p = jnp.zeros((1, out_pad), jnp.float32).at[0, :fan_out].set(b)
        return w_p.astype(WEIGHT_DTYPE), b_p

    w1, b1 = linear(ks[0], ks[1], LATENT_DIM + 1, INNER_DIM, IN_PAD, HID_PAD)
    w2, b2 = linear(ks[2], ks[3], INNER_DIM, INNER_DIM, HID_PAD, HID_PAD)

    bound3 = 1.0 / math.sqrt(INNER_DIM)
    w3_col = jax.random.uniform(ks[4], (INNER_DIM,), jnp.float32, -bound3, bound3)
    w3 = (jnp.zeros((1, HID_PAD), jnp.float32).at[0, :INNER_DIM].set(w3_col)
          .astype(WEIGHT_DTYPE))
    b3_val = jax.random.uniform(ks[5], (OUT_DIM,), jnp.float32, -bound3, bound3)
    b3 = jnp.zeros((1, OUT_PAD), jnp.float32).at[0, :OUT_DIM].set(b3_val)
    return (w1, b1, w2, b2, w3, b3)


def _reference(z, t, params):
    """Pure-JAX f32 reference (unpadded math, same bf16-stored weights)."""
    w1, b1, w2, b2, w3, b3 = params
    w1f = w1.astype(jnp.float32)[: LATENT_DIM + 1, :INNER_DIM]
    w2f = w2.astype(jnp.float32)[:INNER_DIM, :INNER_DIM]
    w3f = w3.astype(jnp.float32)[0, :INNER_DIM]
    zt = jnp.concatenate([z, t.reshape(-1, 1)], axis=1)
    h = _gelu(zt @ w1f + b1[0, :INNER_DIM])
    h = _gelu(h @ w2f + b2[0, :INNER_DIM])
    e = h @ w3f + b3[0, 0]
    return e.reshape(-1, OUT_DIM, 1, 1)


if __name__ == "__main__":
    key = jax.random.PRNGKey(0)
    k_p, k_z, k_t = jax.random.split(key, 3)

    params = init_params(k_p)

    B = 48
    z = jax.random.normal(k_z, (B, LATENT_DIM), jnp.float32)
    t = jax.random.uniform(k_t, (B,), jnp.float32)

    # Small tile_b so the multi-step batch grid (48 / 16 = 3 steps) is exercised.
    out = e_func_forward(z, t, params, tile_b=16)
    out = jax.block_until_ready(out)

    ref = _reference(z, t, params)
    assert out.shape == (B, OUT_DIM, 1, 1), out.shape
    max_err = float(jnp.max(jnp.abs(out - ref)))
    assert max_err < 2e-2, max_err   # bf16-operand dots vs f32 reference
    print("KERNEL_OK")
</pallas_src>

<mosaic_0001>
module attributes {stable_mosaic.version = 11 : i64} {
  func.func @_ebm_kernel(%arg0: i32, %arg1: memref<16x128xf32, #tpu.memory_space<vmem>>, %arg2: memref<128x1024xbf16, #tpu.memory_space<vmem>>, %arg3: memref<1x1024xf32, #tpu.memory_space<vmem>>, %arg4: memref<1024x1024xbf16, #tpu.memory_space<vmem>>, %arg5: memref<1x1024xf32, #tpu.memory_space<vmem>>, %arg6: memref<1x1024xbf16, #tpu.memory_space<vmem>>, %arg7: memref<1x128xf32, #tpu.memory_space<vmem>>, %arg8: memref<16x128xf32, #tpu.memory_space<vmem>>) attributes {dimension_semantics = [#tpu.dimension_semantics<parallel>], iteration_bounds = array<i64: 3>, scalar_prefetch = 0 : i64, scratch_operands = 0 : i64, tpu.core_type = #tpu.core_type<tc>, window_params = [{transform_indices = @transform_0, window_bounds = array<i64: 16, 128>}, {pipeline_mode = #tpu.pipeline_mode<synchronous>, transform_indices = @transform_1, window_bounds = array<i64: 128, 1024>}, {pipeline_mode = #tpu.pipeline_mode<synchronous>, transform_indices = @transform_2, window_bounds = array<i64: 1, 1024>}, {pipeline_mode = #tpu.pipeline_mode<synchronous>, transform_indices = @transform_3, window_bounds = array<i64: 1024, 1024>}, {pipeline_mode = #tpu.pipeline_mode<synchronous>, transform_indices = @transform_4, window_bounds = array<i64: 1, 1024>}, {pipeline_mode = #tpu.pipeline_mode<synchronous>, transform_indices = @transform_5, window_bounds = array<i64: 1, 1024>}, {pipeline_mode = #tpu.pipeline_mode<synchronous>, transform_indices = @transform_6, window_bounds = array<i64: 1, 128>}, {transform_indices = @transform_7, window_bounds = array<i64: 16, 128>}]} {
    %c0 = arith.constant 0 : index
    %c0_0 = arith.constant 0 : index
    %0 = vector.load %arg1[%c0, %c0_0] : memref<16x128xf32, #tpu.memory_space<vmem>>, vector<16x128xf32>
    %1 = arith.truncf %0 : vector<16x128xf32> to vector<16x128xbf16>
    %c0_1 = arith.constant 0 : index
    %c0_2 = arith.constant 0 : index
    %2 = vector.load %arg2[%c0_1, %c0_2] : memref<128x1024xbf16, #tpu.memory_space<vmem>>, vector<128x1024xbf16>
    %cst = arith.constant dense<0.000000e+00> : vector<16x1024xf32>
    %3 = tpu.matmul %1, %2, %cst {dimension_numbers = #tpu.dot_dimension_numbers<[1], [0], [0], [1], [0, 0, 1, 1], [], []>} : vector<16x128xbf16>, vector<128x1024xbf16>, vector<16x1024xf32> -> vector<16x1024xf32>
    %c0_3 = arith.constant 0 : index
    %c0_4 = arith.constant 0 : index
    %4 = vector.load %arg3[%c0_3, %c0_4] : memref<1x1024xf32, #tpu.memory_space<vmem>>, vector<1x1024xf32>
    %5 = vector.broadcast %4 : vector<1x1024xf32> to vector<16x1024xf32>
    %6 = arith.addf %3, %5 : vector<16x1024xf32>
    %cst_5 = arith.constant 5.000000e-01 : f32
    %7 = vector.broadcast %cst_5 : f32 to vector<16x1024xf32>
    %8 = arith.mulf %7, %6 : vector<16x1024xf32>
    %cst_6 = arith.constant 0.707106769 : f32
    %9 = vector.broadcast %cst_6 : f32 to vector<16x1024xf32>
    %10 = arith.mulf %6, %9 : vector<16x1024xf32>
    %11 = math.erf %10 : vector<16x1024xf32>
    %cst_7 = arith.constant 1.000000e+00 : f32
    %12 = vector.broadcast %cst_7 : f32 to vector<16x1024xf32>
    %13 = arith.addf %12, %11 : vector<16x1024xf32>
    %14 = arith.mulf %8, %13 : vector<16x1024xf32>
    %15 = arith.truncf %14 : vector<16x1024xf32> to vector<16x1024xbf16>
    %c0_8 = arith.constant 0 : index
    %c0_9 = arith.constant 0 : index
    %16 = vector.load %arg4[%c0_8, %c0_9] : memref<1024x1024xbf16, #tpu.memory_space<vmem>>, vector<1024x1024xbf16>
    %cst_10 = arith.constant dense<0.000000e+00> : vector<16x1024xf32>
    %17 = tpu.matmul %15, %16, %cst_10 {dimension_numbers = #tpu.dot_dimension_numbers<[1], [0], [0], [1], [0, 0, 1, 1], [], []>} : vector<16x1024xbf16>, vector<1024x1024xbf16>, vector<16x1024xf32> -> vector<16x1024xf32>
    %c0_11 = arith.constant 0 : index
    %c0_12 = arith.constant 0 : index
    %18 = vector.load %arg5[%c0_11, %c0_12] : memref<1x1024xf32, #tpu.memory_space<vmem>>, vector<1x1024xf32>
    %19 = vector.broadcast %18 : vector<1x1024xf32> to vector<16x1024xf32>
    %20 = arith.addf %17, %19 : vector<16x1024xf32>
    %cst_13 = arith.constant 5.000000e-01 : f32
    %21 = vector.broadcast %cst_13 : f32 to vector<16x1024xf32>
    %22 = arith.mulf %21, %20 : vector<16x1024xf32>
    %cst_14 = arith.constant 0.707106769 : f32
    %23 = vector.broadcast %cst_14 : f32 to vector<16x1024xf32>
    %24 = arith.mulf %20, %23 : vector<16x1024xf32>
    %25 = math.erf %24 : vector<16x1024xf32>
    %cst_15 = arith.constant 1.000000e+00 : f32
    %26 = vector.broadcast %cst_15 : f32 to vector<16x1024xf32>
    %27 = arith.addf %26, %25 : vector<16x1024xf32>
    %28 = arith.mulf %22, %27 : vector<16x1024xf32>
    %c0_16 = arith.constant 0 : index
    %c0_17 = arith.constant 0 : index
    %29 = vector.load %arg6[%c0_16, %c0_17] : memref<1x1024xbf16, #tpu.memory_space<vmem>>, vector<1x1024xbf16>
    %30 = arith.extf %29 : vector<1x1024xbf16> to vector<1x1024xf32>
    %31 = vector.broadcast %30 : vector<1x1024xf32> to vector<16x1024xf32>
    %32 = arith.mulf %28, %31 : vector<16x1024xf32>
    %cst_18 = arith.constant dense<0.000000e+00> : vector<16xf32>
    %33 = vector.multi_reduction <add>, %32, %cst_18 [1] : vector<16x1024xf32> to vector<16xf32>
    %34 = vector.shape_cast %33 : vector<16xf32> to vector<16x1xf32>
    %c0_19 = arith.constant 0 : index
    %c0_20 = arith.constant 0 : index
    %35 = vector.load %arg7[%c0_19, %c0_20] : memref<1x128xf32, #tpu.memory_space<vmem>>, vector<1x128xf32>
    %36 = vector.broadcast %34 : vector<16x1xf32> to vector<16x128xf32>
    %37 = vector.broadcast %35 : vector<1x128xf32> to vector<16x128xf32>
    %38 = arith.addf %36, %37 : vector<16x128xf32>
    %c0_21 = arith.constant 0 : index
    %c0_22 = arith.constant 0 : index
    %39 = vector.load %arg8[%c0_21, %c0_22] : memref<16x128xf32, #tpu.memory_space<vmem>>, vector<16x128xf32>
    tpu.vector_store %arg8[%c0_21, %c0_22], %38 {strides = array<i32>} : memref<16x128xf32, #tpu.memory_space<vmem>>, vector<16x128xf32>,
    return
  }
  func.func @transform_0(%arg0: i32) -> (i32, i32) {
    %c0_i32 = arith.constant 0 : i32
    %c0_i32_0 = arith.constant 0 : i32
    return %arg0, %c0_i32 : i32, i32
  }
  func.func @transform_1(%arg0: i32) -> (i32, i32) {
    %c0_i32 = arith.constant 0 : i32
    %c0_i32_0 = arith.constant 0 : i32
    %c0_i32_1 = arith.constant 0 : i32
    return %c0_i32, %c0_i32_0 : i32, i32
  }
  func.func @transform_2(%arg0: i32) -> (i32, i32) {
    %c0_i32 = arith.constant 0 : i32
    %c0_i32_0 = arith.constant 0 : i32
    %c0_i32_1 = arith.constant 0 : i32
    return %c0_i32, %c0_i32_0 : i32, i32
  }
  func.func @transform_3(%arg0: i32) -> (i32, i32) {
    %c0_i32 = arith.constant 0 : i32
    %c0_i32_0 = arith.constant 0 : i32
    %c0_i32_1 = arith.constant 0 : i32
    return %c0_i32, %c0_i32_0 : i32, i32
  }
  func.func @transform_4(%arg0: i32) -> (i32, i32) {
    %c0_i32 = arith.constant 0 : i32
    %c0_i32_0 = arith.constant 0 : i32
    %c0_i32_1 = arith.constant 0 : i32
    return %c0_i32, %c0_i32_0 : i32, i32
  }
  func.func @transform_5(%arg0: i32) -> (i32, i32) {
    %c0_i32 = arith.constant 0 : i32
    %c0_i32_0 = arith.constant 0 : i32
    %c0_i32_1 = arith.constant 0 : i32
    return %c0_i32, %c0_i32_0 : i32, i32
  }
  func.func @transform_6(%arg0: i32) -> (i32, i32) {
    %c0_i32 = arith.constant 0 : i32
    %c0_i32_0 = arith.constant 0 : i32
    %c0_i32_1 = arith.constant 0 : i32
    return %c0_i32, %c0_i32_0 : i32, i32
  }
  func.func @transform_7(%arg0: i32) -> (i32, i32) {
    %c0_i32 = arith.constant 0 : i32
    %c0_i32_0 = arith.constant 0 : i32
    return %arg0, %c0_i32 : i32, i32
  }
}

</mosaic_0001>

<llo_original>
// kernel: e_func_forward.1
$region0: #{e_func_forward.1}
  #allocation0 [shape = 'u32[]', space=smem, size = 0x4, offset = 0x4, fixed_abs, tag = 'smem constant byte address 0x4 - core index']
  #allocation1 [shape = 'u32[144,128]{1,0:T(1,128)}', space=vmem, size = 0x12000, scoped, tag = 'internal scratch']
  %s0 = inlined_call_operand.vmem [shape: f32[48,128], index: 0, kind: input, shape index: {}]
  %s1 = inlined_call_operand.hbm [shape: bf16[128,1024], index: 1, kind: input, shape index: {}]
  %s2 = inlined_call_operand.hbm [shape: f32[1,1024], index: 2, kind: input, shape index: {}]
  %s3 = inlined_call_operand.hbm [shape: bf16[1024,1024], index: 3, kind: input, shape index: {}]
  %s4 = inlined_call_operand.hbm [shape: f32[1,1024], index: 4, kind: input, shape index: {}]
  %s5 = inlined_call_operand.hbm [shape: bf16[1,1024], index: 5, kind: input, shape index: {}]
  %s6 = inlined_call_operand.hbm [shape: f32[1,128], index: 6, kind: input, shape index: {}]
  %s7 = inlined_call_operand.vmem [shape: f32[48,128], index: 7, kind: output, shape index: {}]
  %s8 = sld [smem:[#allocation0]]
  $region85: #{e_func_forward.1} parent=0
    _
  %s10 = ssub.s32 1, %s8
  %s11 = scalar_select 0, %s10, %s8
  $region1: #{e_func_forward.1} parent=0
    #allocation2 [shape = 'u8[262144]{0}', space=vmem, size = 0x40000, scoped, tag = 'input window, operand 1, single buffered']
    #allocation3 [shape = 's32[2]{0}', space=sflag, size = 0x8, scoped, tag = 'scoped memory for e_func_forward.1']
    #allocation4 [shape = 'u8[4096]{0}', space=vmem, size = 0x1000, scoped, tag = 'input window, operand 2, single buffered']
    #allocation5 [shape = 's32[1]{0}', space=sflag, size = 0x4, scoped, tag = 'scoped memory for e_func_forward.1']
    #allocation6 [shape = 'u8[2097152]{0}', space=vmem, size = 0x200000, scoped, tag = 'input window, operand 3, single buffered']
    #allocation7 [shape = 'u8[4096]{0}', space=vmem, size = 0x1000, scoped, tag = 'input window, operand 4, single buffered']
    #allocation8 [shape = 's32[1]{0}', space=sflag, size = 0x4, scoped, tag = 'scoped memory for e_func_forward.1']
    #allocation9 [shape = 'u8[4096]{0}', space=vmem, size = 0x1000, scoped, tag = 'input window, operand 5, single buffered']
    #allocation10 [shape = 'u8[512]{0}', space=vmem, size = 0x400, scoped, tag = 'input window, operand 6, single buffered']
    #allocation11 [shape = 's32[1]{0}', space=sflag, size = 0x4, scoped, tag = 'scoped memory for e_func_forward.1']
    %12 = vsyncpa [#allocation3], 0
    %13 = vsyncpa [#allocation5], 0
    %14 = vsyncpa [#allocation8], 0
    %15 = vsyncpa [#allocation11], 0
    loop: start=0, step=1, limit=5
    $region2: #{e_func_forward.1} parent=1 // loop_pre_header
      _
    $region3: #{e_func_forward.1} parent=1 // loop_header
      %s17 = sphi 0, %s21
      %p18 = scmp.ge.s32.totalorder %s17, 5
      %s27 = sphi 0, %s29
      %s30 = sphi 0, %s27
      %s31 = sphi 0, %s30
      %s47 = sphi 0, %s31
      %s51 = sphi 0, %s51
      %s53 = sphi 0, %s51
      %s54 = sphi 0, %s53
      %s68 = sphi 0, %s54
      %s72 = sphi 0, %s72
      %s74 = sphi 0, %s72
      %s75 = sphi 0, %s74
      %s89 = sphi 0, %s75
      %s93 = sphi 0, %s93
      %s95 = sphi 0, %s93
      %s96 = sphi 0, %s95
      %s110 = sphi 0, %s96
      %s114 = sphi 0, %s114
      %s116 = sphi 0, %s114
      %s117 = sphi 0, %s116
      %s131 = sphi 0, %s117
      %s135 = sphi 0, %s135
      %s137 = sphi 0, %s135
      %s138 = sphi 0, %s137
      %s152 = sphi 0, %s138
      %s156 = sphi 0, %s156
      %s158 = sphi 0, %s156
      %s159 = sphi 0, %s158
      %s173 = sphi 0, %s159
      %s179 = sphi 0, %s181
      %s182 = sphi 0, %s179
      %s183 = sphi 0, %s182
      %s199 = sphi 0, %s183
    $region4: #{e_func_forward.1} parent=1 // loop_header_branch
      %20 = sbr.rel (%p18) target = $region8
    $region5: #{e_func_forward.1} parent=1 // loop_body
      %s22 = ssub.s32 %s17, 1
      %s23 = ssub.s32 %s17, 2
      %s24 = sadd.s32 %s17, 1
      %s25 = ssub.s32 %s17, %s24
      %p26 = scmp.eq.s32.totalorder %s25, 0
      %s28 = sadd.s32 %s27, 1
      %s29 = scalar_select %p26, %s27, %s28
      %p32 = pneg %p26
      %p33 = scmp.eq.s32.totalorder %s17, 2
      %p34 = por %p32, %p33
      %p35 = scmp.ne.s32.totalorder %s27, %s30
      %p36 = scmp.eq.s32.totalorder %s17, 0
      %p37 = por %p35, %p36
      %p38 = scmp.ne.s32.totalorder %s27, %s30
      %p39 = scmp.eq.s32.totalorder %s22, 2
      %p40 = por %p38, %p39
      %p41 = scmp.ne.s32.totalorder %s30, %s31
      %p42 = scmp.eq.s32.totalorder %s22, 0
      %p43 = por %p41, %p42
      %p44 = scmp.ne.s32.totalorder %s30, %s31
      %p45 = scmp.eq.s32.totalorder %s23, 2
      %p46 = por %p44, %p45
      %p48 = scmp.ne.s32.totalorder %s31, %s47
      %p49 = scmp.eq.s32.totalorder %s23, 0
      %p50 = por %p48, %p49
      %s52 = sadd.s32 %s51, 1
      %p55 = scmp.eq.s32.totalorder %s17, 2
      %p56 = scmp.ne.s32.totalorder %s51, %s53
      %p57 = scmp.eq.s32.totalorder %s17, 0
      %p58 = por %p56, %p57
      %p59 = scmp.ne.s32.totalorder %s51, %s53
      %p60 = scmp.eq.s32.totalorder %s22, 2
      %p61 = por %p59, %p60
      %p62 = scmp.ne.s32.totalorder %s53, %s54
      %p63 = scmp.eq.s32.totalorder %s22, 0
      %p64 = por %p62, %p63
      %p65 = scmp.ne.s32.totalorder %s53, %s54
      %p66 = scmp.eq.s32.totalorder %s23, 2
      %p67 = por %p65, %p66
      %p69 = scmp.ne.s32.totalorder %s54, %s68
      %p70 = scmp.eq.s32.totalorder %s23, 0
      %p71 = por %p69, %p70
      %s73 = sadd.s32 %s72, 1
      %p76 = scmp.eq.s32.totalorder %s17, 2
      %p77 = scmp.ne.s32.totalorder %s72, %s74
      %p78 = scmp.eq.s32.totalorder %s17, 0
      %p79 = por %p77, %p78
      %p80 = scmp.ne.s32.totalorder %s72, %s74
      %p81 = scmp.eq.s32.totalorder %s22, 2
      %p82 = por %p80, %p81
      %p83 = scmp.ne.s32.totalorder %s74, %s75
      %p84 = scmp.eq.s32.totalorder %s22, 0
      %p85 = por %p83, %p84
      %p86 = scmp.ne.s32.totalorder %s74, %s75
      %p87 = scmp.eq.s32.totalorder %s23, 2
      %p88 = por %p86, %p87
      %p90 = scmp.ne.s32.totalorder %s75, %s89
      %p91 = scmp.eq.s32.totalorder %s23, 0
      %p92 = por %p90, %p91
      %s94 = sadd.s32 %s93, 1
      %p97 = scmp.eq.s32.totalorder %s17, 2
      %p98 = scmp.ne.s32.totalorder %s93, %s95
      %p99 = scmp.eq.s32.totalorder %s17, 0
      %p100 = por %p98, %p99
      %p101 = scmp.ne.s32.totalorder %s93, %s95
      %p102 = scmp.eq.s32.totalorder %s22, 2
      %p103 = por %p101, %p102
      %p104 = scmp.ne.s32.totalorder %s95, %s96
      %p105 = scmp.eq.s32.totalorder %s22, 0
      %p106 = por %p104, %p105
      %p107 = scmp.ne.s32.totalorder %s95, %s96
      %p108 = scmp.eq.s32.totalorder %s23, 2
      %p109 = por %p107, %p108
      %p111 = scmp.ne.s32.totalorder %s96, %s110
      %p112 = scmp.eq.s32.totalorder %s23, 0
      %p113 = por %p111, %p112
      %s115 = sadd.s32 %s114, 1
      %p118 = scmp.eq.s32.totalorder %s17, 2
      %p119 = scmp.ne.s32.totalorder %s114, %s116
      %p120 = scmp.eq.s32.totalorder %s17, 0
      %p121 = por %p119, %p120
      %p122 = scmp.ne.s32.totalorder %s114, %s116
      %p123 = scmp.eq.s32.totalorder %s22, 2
      %p124 = por %p122, %p123
      %p125 = scmp.ne.s32.totalorder %s116, %s117
      %p126 = scmp.eq.s32.totalorder %s22, 0
      %p127 = por %p125, %p126
      %p128 = scmp.ne.s32.totalorder %s116, %s117
      %p129 = scmp.eq.s32.totalorder %s23, 2
      %p130 = por %p128, %p129
      %p132 = scmp.ne.s32.totalorder %s117, %s131
      %p133 = scmp.eq.s32.totalorder %s23, 0
      %p134 = por %p132, %p133
      %s136 = sadd.s32 %s135, 1
      %p139 = scmp.eq.s32.totalorder %s17, 2
      %p140 = scmp.ne.s32.totalorder %s135, %s137
      %p141 = scmp.eq.s32.totalorder %s17, 0
      %p142 = por %p140, %p141
      %p143 = scmp.ne.s32.totalorder %s135, %s137
      %p144 = scmp.eq.s32.totalorder %s22, 2
      %p145 = por %p143, %p144
      %p146 = scmp.ne.s32.totalorder %s137, %s138
      %p147 = scmp.eq.s32.totalorder %s22, 0
      %p148 = por %p146, %p147
      %p149 = scmp.ne.s32.totalorder %s137, %s138
      %p150 = scmp.eq.s32.totalorder %s23, 2
      %p151 = por %p149, %p150
      %p153 = scmp.ne.s32.totalorder %s138, %s152
      %p154 = scmp.eq.s32.totalorder %s23, 0
      %p155 = por %p153, %p154
      %s157 = sadd.s32 %s156, 1
      %p160 = scmp.eq.s32.totalorder %s17, 2
      %p161 = scmp.ne.s32.totalorder %s156, %s158
      %p162 = scmp.eq.s32.totalorder %s17, 0
      %p163 = por %p161, %p162
      %p164 = scmp.ne.s32.totalorder %s156, %s158
      %p165 = scmp.eq.s32.totalorder %s22, 2
      %p166 = por %p164, %p165
      %p167 = scmp.ne.s32.totalorder %s158, %s159
      %p168 = scmp.eq.s32.totalorder %s22, 0
      %p169 = por %p167, %p168
      %p170 = scmp.ne.s32.totalorder %s158, %s159
      %p171 = scmp.eq.s32.totalorder %s23, 2
      %p172 = por %p170, %p171
      %p174 = scmp.ne.s32.totalorder %s159, %s173
      %p175 = scmp.eq.s32.totalorder %s23, 0
      %p176 = por %p174, %p175
      %s177 = ssub.s32 %s17, %s24
      %p178 = scmp.eq.s32.totalorder %s177, 0
      %s180 = sadd.s32 %s179, 1
      %s181 = scalar_select %p178, %s179, %s180
      %p184 = pneg %p178
      %p185 = scmp.eq.s32.totalorder %s17, 2
      %p186 = por %p184, %p185
      %p187 = scmp.ne.s32.totalorder %s179, %s182
      %p188 = scmp.eq.s32.totalorder %s17, 0
      %p189 = por %p187, %p188
      %p190 = scmp.ne.s32.totalorder %s179, %s182
      %p191 = scmp.eq.s32.totalorder %s22, 2
      %p192 = por %p190, %p191
      %p193 = scmp.ne.s32.totalorder %s182, %s183
      %p194 = scmp.eq.s32.totalorder %s22, 0
      %p195 = por %p193, %p194
      %p196 = scmp.ne.s32.totalorder %s182, %s183
      %p197 = scmp.eq.s32.totalorder %s23, 2
      %p198 = por %p196, %p197
      %p200 = scmp.ne.s32.totalorder %s183, %s199
      %p201 = scmp.eq.s32.totalorder %s23, 0
      %p202 = por %p200, %p201
      %p203 = scmp.le.s32.totalorder 1, %s17
      %p204 = scmp.lt.s32.totalorder %s17, 4
      %p205 = pnand %p203, %p204
      %p206 = pneg %p205
      // Predicated region
      $region9: #{e_func_forward.1} parent=5 // pred_check
        _
      $region10: #{e_func_forward.1} parent=5 // pred_check_branch
        %208 = sbr.rel (%p205) target = $region12
      $region11: #{e_func_forward.1} parent=5 // pred_region
        %s209 = ssub.s32 %s17, 1
        // Predicated region
        $region13: #{e_func_forward.1} parent=11 // pred_check
          %p210 = pneg %p64
        $region14: #{e_func_forward.1} parent=11 // pred_check_branch
          %212 = sbr.rel (%p210) target = $region16
        $region15: #{e_func_forward.1} parent=11 // pred_region
          %s214 = ssub.s32 8192, 8192
          %215 = vsyncadd [#allocation3], %s214
          %s216 = sshll.u32 [#allocation2], 4
          %s217 = int_to_ptr.vmem [resolvable:$true] %s216
          %222 = dma.hbm_to_vmem [thread:$0]  %s1, 8192, %s217, [#allocation3], 512, 512, 32
        $region16: #{e_func_forward.1} parent=11 // pred_fallthru
          _
        // Predicated region
        $region17: #{e_func_forward.1} parent=11 // pred_check
          %p223 = pneg %p85
        $region18: #{e_func_forward.1} parent=11 // pred_check_branch
          %225 = sbr.rel (%p223) target = $region20
        $region19: #{e_func_forward.1} parent=11 // pred_region
          %s227 = ssub.s32 128, 128
          %228 = vsyncadd [#allocation5], %s227
          %s230 = sshll.u32 [#allocation4], 4
          %s231 = int_to_ptr.vmem [resolvable:$true] %s230
          %233 = dma.hbm_to_vmem [thread:$0]  %s2, 128, %s231, [#allocation5]
        $region20: #{e_func_forward.1} parent=11 // pred_fallthru
          _
        // Predicated region
        $region21: #{e_func_forward.1} parent=11 // pred_check
          %p234 = pneg %p106
        $region22: #{e_func_forward.1} parent=11 // pred_check_branch
          %236 = sbr.rel (%p234) target = $region24
        $region23: #{e_func_forward.1} parent=11 // pred_region
          %s238 = ssub.s32 65536, 65536
          %239 = vsyncadd [#allocation5], %s238
          %s240 = sshll.u32 [#allocation6], 4
          %s241 = int_to_ptr.vmem [resolvable:$true] %s240
          %246 = dma.hbm_to_vmem [thread:$0]  %s3, 65536, %s241, [#allocation5], 512, 512, 32
        $region24: #{e_func_forward.1} parent=11 // pred_fallthru
          _
        // Predicated region
        $region25: #{e_func_forward.1} parent=11 // pred_check
          %p247 = pneg %p127
        $region26: #{e_func_forward.1} parent=11 // pred_check_branch
          %249 = sbr.rel (%p247) target = $region28
        $region27: #{e_func_forward.1} parent=11 // pred_region
          %s251 = ssub.s32 128, 128
          %252 = vsyncadd [#allocation8], %s251
          %s254 = sshll.u32 [#allocation7], 4
          %s255 = int_to_ptr.vmem [resolvable:$true] %s254
          %257 = dma.hbm_to_vmem [thread:$0]  %s4, 128, %s255, [#allocation8]
        $region28: #{e_func_forward.1} parent=11 // pred_fallthru
          _
        // Predicated region
        $region29: #{e_func_forward.1} parent=11 // pred_check
          %p258 = pneg %p148
        $region30: #{e_func_forward.1} parent=11 // pred_check_branch
          %260 = sbr.rel (%p258) target = $region32
        $region31: #{e_func_forward.1} parent=11 // pred_region
          %s262 = ssub.s32 128, 128
          %263 = vsyncadd [#allocation8], %s262
          %s265 = sshll.u32 [#allocation9], 4
          %s266 = int_to_ptr.vmem [resolvable:$true] %s265
          %268 = dma.hbm_to_vmem [thread:$0]  %s5, 128, %s266, [#allocation8]
        $region32: #{e_func_forward.1} parent=11 // pred_fallthru
          _
        // Predicated region
        $region33: #{e_func_forward.1} parent=11 // pred_check
          %p269 = pneg %p169
        $region34: #{e_func_forward.1} parent=11 // pred_check_branch
          %271 = sbr.rel (%p269) target = $region36
        $region35: #{e_func_forward.1} parent=11 // pred_region
          %s273 = ssub.s32 16, 16
          %274 = vsyncadd [#allocation11], %s273
          %s276 = sshll.u32 [#allocation10], 4
          %s277 = int_to_ptr.vmem [resolvable:$true] %s276
          %279 = dma.hbm_to_vmem [thread:$0]  %s6, 16, %s277, [#allocation11]
        $region36: #{e_func_forward.1} parent=11 // pred_fallthru
          _
      $region12: #{e_func_forward.1} parent=5 // pred_fallthru
        _
      %p280 = scmp.lt.s32.totalorder %s17, 3
      // Predicated region
      $region37: #{e_func_forward.1} parent=5 // pred_check
        %p281 = pneg %p280
      $region38: #{e_func_forward.1} parent=5 // pred_check_branch
        %283 = sbr.rel (%p281) target = $region40
      $region39: #{e_func_forward.1} parent=5 // pred_region
        // Predicated region
        $region41: #{e_func_forward.1} parent=39 // pred_check
          %p284 = pneg %p37
        $region42: #{e_func_forward.1} parent=39 // pred_check_branch
          %286 = sbr.rel (%p284) target = $region44
        $region43: #{e_func_forward.1} parent=39 // pred_region
          %s287 = smul.u32 2, %s17
          %p288 = scmp.lt.s32.totalorder %s287, 5
          %s289 = scalar_select %p288, %s287, 5
          %s290 = smul.addr %s289, 8
          %s291 = scalar_lea.vmem %s0, %s290
          %s292 = smul.u32 2, %s17
        $region44: #{e_func_forward.1} parent=39 // pred_fallthru
          _
      $region40: #{e_func_forward.1} parent=5 // pred_fallthru
        _
      %p293 = scmp.le.s32.totalorder 1, %s17
      %p294 = scmp.lt.s32.totalorder %s17, 4
      %p295 = pnand %p293, %p294
      %p296 = pneg %p295
      // Predicated region
      $region45: #{e_func_forward.1} parent=5 // pred_check
        _
      $region46: #{e_func_forward.1} parent=5 // pred_check_branch
        %298 = sbr.rel (%p295) target = $region48
      $region47: #{e_func_forward.1} parent=5 // pred_region
        %s299 = ssub.s32 %s17, 1
        // Predicated region
        $region49: #{e_func_forward.1} parent=47 // pred_check
          %p300 = pneg %p64
        $region50: #{e_func_forward.1} parent=47 // pred_check_branch
          %302 = sbr.rel (%p300) target = $region52
        $region51: #{e_func_forward.1} parent=47 // pred_region
          %303 = dma.done [#allocation3], 8192
        $region52: #{e_func_forward.1} parent=47 // pred_fallthru
          _
        // Predicated region
        $region53: #{e_func_forward.1} parent=47 // pred_check
          %p304 = pneg %p85
        $region54: #{e_func_forward.1} parent=47 // pred_check_branch
          %306 = sbr.rel (%p304) target = $region56
        $region55: #{e_func_forward.1} parent=47 // pred_region
          %307 = dma.done [#allocation5], 128
        $region56: #{e_func_forward.1} parent=47 // pred_fallthru
          _
        // Predicated region
        $region57: #{e_func_forward.1} parent=47 // pred_check
          %p308 = pneg %p106
        $region58: #{e_func_forward.1} parent=47 // pred_check_branch
          %310 = sbr.rel (%p308) target = $region60
        $region59: #{e_func_forward.1} parent=47 // pred_region
          %311 = dma.done [#allocation5], 65536
        $region60: #{e_func_forward.1} parent=47 // pred_fallthru
          _
        // Predicated region
        $region61: #{e_func_forward.1} parent=47 // pred_check
          %p312 = pneg %p127
        $region62: #{e_func_forward.1} parent=47 // pred_check_branch
          %314 = sbr.rel (%p312) target = $region64
        $region63: #{e_func_forward.1} parent=47 // pred_region
          %315 = dma.done [#allocation8], 128
        $region64: #{e_func_forward.1} parent=47 // pred_fallthru
          _
        // Predicated region
        $region65: #{e_func_forward.1} parent=47 // pred_check
          %p316 = pneg %p148
        $region66: #{e_func_forward.1} parent=47 // pred_check_branch
          %318 = sbr.rel (%p316) target = $region68
        $region67: #{e_func_forward.1} parent=47 // pred_region
          %319 = dma.done [#allocation8], 128
        $region68: #{e_func_forward.1} parent=47 // pred_fallthru
          _
        // Predicated region
        $region69: #{e_func_forward.1} parent=47 // pred_check
          %p320 = pneg %p169
        $region70: #{e_func_forward.1} parent=47 // pred_check_branch
          %322 = sbr.rel (%p320) target = $region72
        $region71: #{e_func_forward.1} parent=47 // pred_region
          %323 = dma.done [#allocation11], 16
        $region72: #{e_func_forward.1} parent=47 // pred_fallthru
          _
        %s324 = smul.u32 2, %s22
        %p325 = scmp.lt.s32.totalorder %s324, 5
        %s326 = scalar_select %p325, %s324, 5
        %s327 = smul.addr %s326, 8
        %s328 = scalar_lea.vmem %s0, %s327
        %p329 = pneg %p43
        %p330 = pneg %p40
        %p331 = pneg %p64
        %p332 = pneg %p61
        %p333 = pneg %p85
        %p334 = pneg %p82
        %p335 = pneg %p106
        %p336 = pneg %p103
        %p337 = pneg %p127
        %p338 = pneg %p124
        %p339 = pneg %p148
        %p340 = pneg %p145
        %p341 = pneg %p169
        %p342 = pneg %p166
        %p343 = pneg %p195
        %p344 = pneg %p192
        %s345 = smul.u32 2, %s22
        %p346 = scmp.lt.s32.totalorder %s345, 5
        %s347 = scalar_select %p346, %s345, 5
        %s348 = smul.addr %s347, 8
        %s349 = scalar_lea.vmem %s7, %s348
        %s350 = smul.u32 2, %s22
        %p351 = scmp.lt.s32.totalorder %s350, 5
        %s352 = scalar_select %p351, %s350, 5
        %s353 = smul.addr %s352, 8
        %s354 = scalar_lea.vmem %s0, %s353
        %s355 = smul.u32 2, %s22
        %s356 = smul.u32 2, %s22
        %p357 = scmp.lt.s32.totalorder %s356, 5
        %s358 = scalar_select %p357, %s356, 5
        %s359 = smul.addr %s358, 8
        %s360 = scalar_lea.vmem %s7, %s359
        %s361 = smul.u32 2, %s22
        %v363 = vld [vmem:[%s354] sm:$0xff]
        %v364 = vld [vmem:[%s354 + $0x8] sm:$0xff]
        %v365 = vpack.c.bf16 %v364, %v363
        %v366 = vld [vmem:[#allocation2] sm:$0xff]
        %v367 = vld [vmem:[#allocation2 + $0x8] sm:$0xff]
        %v368 = vld [vmem:[#allocation2 + $0x10] sm:$0xff]
        %v369 = vld [vmem:[#allocation2 + $0x18] sm:$0xff]
        %v370 = vld [vmem:[#allocation2 + $0x20] sm:$0xff]
        %v371 = vld [vmem:[#allocation2 + $0x28] sm:$0xff]
        %v372 = vld [vmem:[#allocation2 + $0x30] sm:$0xff]
        %v373 = vld [vmem:[#allocation2 + $0x38] sm:$0xff]
        %v374 = vld [vmem:[#allocation2 + $0x40] sm:$0xff]
        %v375 = vld [vmem:[#allocation2 + $0x48] sm:$0xff]
        %v376 = vld [vmem:[#allocation2 + $0x50] sm:$0xff]
        %v377 = vld [vmem:[#allocation2 + $0x58] sm:$0xff]
        %v378 = vld [vmem:[#allocation2 + $0x60] sm:$0xff]
        %v379 = vld [vmem:[#allocation2 + $0x68] sm:$0xff]
        %v380 = vld [vmem:[#allocation2 + $0x70] sm:$0xff]
        %v381 = vld [vmem:[#allocation2 + $0x78] sm:$0xff]
        %v382 = vld [vmem:[#allocation2 + $0x80] sm:$0xff]
        %v383 = vld [vmem:[#allocation2 + $0x88] sm:$0xff]
        %v384 = vld [vmem:[#allocation2 + $0x90] sm:$0xff]
        %v385 = vld [vmem:[#allocation2 + $0x98] sm:$0xff]
        %v386 = vld [vmem:[#allocation2 + $0xa0] sm:$0xff]
        %v387 = vld [vmem:[#allocation2 + $0xa8] sm:$0xff]
        %v388 = vld [vmem:[#allocation2 + $0xb0] sm:$0xff]
        %v389 = vld [vmem:[#allocation2 + $0xb8] sm:$0xff]
        %v390 = vld [vmem:[#allocation2 + $0xc0] sm:$0xff]
        %v391 = vld [vmem:[#allocation2 + $0xc8] sm:$0xff]
        %v392 = vld [vmem:[#allocation2 + $0xd0] sm:$0xff]
        %v393 = vld [vmem:[#allocation2 + $0xd8] sm:$0xff]
        %v394 = vld [vmem:[#allocation2 + $0xe0] sm:$0xff]
        %v395 = vld [vmem:[#allocation2 + $0xe8] sm:$0xff]
        %v396 = vld [vmem:[#allocation2 + $0xf0] sm:$0xff]
        %v397 = vld [vmem:[#allocation2 + $0xf8] sm:$0xff]
        %v398 = vld [vmem:[#allocation2 + $0x100] sm:$0xff]
        %v399 = vld [vmem:[#allocation2 + $0x108] sm:$0xff]
        %v400 = vld [vmem:[#allocation2 + $0x110] sm:$0xff]
        %v401 = vld [vmem:[#allocation2 + $0x118] sm:$0xff]
        %v402 = vld [vmem:[#allocation2 + $0x120] sm:$0xff]
        %v403 = vld [vmem:[#allocation2 + $0x128] sm:$0xff]
        %v404 = vld [vmem:[#allocation2 + $0x130] sm:$0xff]
        %v405 = vld [vmem:[#allocation2 + $0x138] sm:$0xff]
        %v406 = vld [vmem:[#allocation2 + $0x140] sm:$0xff]
        %v407 = vld [vmem:[#allocation2 + $0x148] sm:$0xff]
        %v408 = vld [vmem:[#allocation2 + $0x150] sm:$0xff]
        %v409 = vld [vmem:[#allocation2 + $0x158] sm:$0xff]
        %v410 = vld [vmem:[#allocation2 + $0x160] sm:$0xff]
        %v411 = vld [vmem:[#allocation2 + $0x168] sm:$0xff]
        %v412 = vld [vmem:[#allocation2 + $0x170] sm:$0xff]
        %v413 = vld [vmem:[#allocation2 + $0x178] sm:$0xff]
        %v414 = vld [vmem:[#allocation2 + $0x180] sm:$0xff]
        %v415 = vld [vmem:[#allocation2 + $0x188] sm:$0xff]
        %v416 = vld [vmem:[#allocation2 + $0x190] sm:$0xff]
        %v417 = vld [vmem:[#allocation2 + $0x198] sm:$0xff]
        %v418 = vld [vmem:[#allocation2 + $0x1a0] sm:$0xff]
        %v419 = vld [vmem:[#allocation2 + $0x1a8] sm:$0xff]
        %v420 = vld [vmem:[#allocation2 + $0x1b0] sm:$0xff]
        %v421 = vld [vmem:[#allocation2 + $0x1b8] sm:$0xff]
        %v422 = vld [vmem:[#allocation2 + $0x1c0] sm:$0xff]
        %v423 = vld [vmem:[#allocation2 + $0x1c8] sm:$0xff]
        %v424 = vld [vmem:[#allocation2 + $0x1d0] sm:$0xff]
        %v425 = vld [vmem:[#allocation2 + $0x1d8] sm:$0xff]
        %v426 = vld [vmem:[#allocation2 + $0x1e0] sm:$0xff]
        %v427 = vld [vmem:[#allocation2 + $0x1e8] sm:$0xff]
        %v428 = vld [vmem:[#allocation2 + $0x1f0] sm:$0xff]
        %v429 = vld [vmem:[#allocation2 + $0x1f8] sm:$0xff]
        %v430 = vld [vmem:[#allocation4] sm:$0xff]
        %v432 = vlaneseq
        %v433 = vshrl.u32 %v432, 7
        %v434 = vsub.s32 0, %v433
        %v435 = vrot.slane %v430, %v434
        %v436 = vlaneseq
        %v437 = vshrl.u32 %v436, 7
        %v438 = vsub.s32 1, %v437
        %v439 = vrot.slane %v430, %v438
        %v440 = vlaneseq
        %v441 = vshrl.u32 %v440, 7
        %v442 = vsub.s32 2, %v441
        %v443 = vrot.slane %v430, %v442
        %v444 = vlaneseq
        %v445 = vshrl.u32 %v444, 7
        %v446 = vsub.s32 3, %v445
        %v447 = vrot.slane %v430, %v446
        %v448 = vlaneseq
        %v449 = vshrl.u32 %v448, 7
        %v450 = vsub.s32 4, %v449
        %v451 = vrot.slane %v430, %v450
        %v452 = vlaneseq
        %v453 = vshrl.u32 %v452, 7
        %v454 = vsub.s32 5, %v453
        %v455 = vrot.slane %v430, %v454
        %v456 = vlaneseq
        %v457 = vshrl.u32 %v456, 7
        %v458 = vsub.s32 6, %v457
        %v459 = vrot.slane %v430, %v458
        %v460 = vlaneseq
        %v461 = vshrl.u32 %v460, 7
        %v462 = vsub.s32 7, %v461
        %v463 = vrot.slane %v430, %v462
        %v536 = vunpack.c.l.b16 %v366
        %v537 = vunpack.c.h.b16 %v366
        %v538 = vunpack.c.l.b16 %v367
        %v539 = vunpack.c.h.b16 %v367
        %v540 = vunpack.c.l.b16 %v368
        %v541 = vunpack.c.h.b16 %v368
        %v542 = vunpack.c.l.b16 %v369
        %v543 = vunpack.c.h.b16 %v369
        %v544 = vunpack.c.l.b16 %v370
        %v545 = vunpack.c.h.b16 %v370
        %v546 = vunpack.c.l.b16 %v371
        %v547 = vunpack.c.h.b16 %v371
        %v548 = vunpack.c.l.b16 %v372
        %v549 = vunpack.c.h.b16 %v372
        %v550 = vunpack.c.l.b16 %v373
        %v551 = vunpack.c.h.b16 %v373
        %v552 = vunpack.c.l.b16 %v374
        %v553 = vunpack.c.h.b16 %v374
        %v554 = vunpack.c.l.b16 %v375
        %v555 = vunpack.c.h.b16 %v375
        %v556 = vunpack.c.l.b16 %v376
        %v557 = vunpack.c.h.b16 %v376
        %v558 = vunpack.c.l.b16 %v377
        %v559 = vunpack.c.h.b16 %v377
        %v560 = vunpack.c.l.b16 %v378
        %v561 = vunpack.c.h.b16 %v378
        %v562 = vunpack.c.l.b16 %v379
        %v563 = vunpack.c.h.b16 %v379
        %v564 = vunpack.c.l.b16 %v380
        %v565 = vunpack.c.h.b16 %v380
        %v566 = vunpack.c.l.b16 %v381
        %v567 = vunpack.c.h.b16 %v381
        %v568 = vunpack.c.l.b16 %v382
        %v569 = vunpack.c.h.b16 %v382
        %v570 = vunpack.c.l.b16 %v383
        %v571 = vunpack.c.h.b16 %v383
        %v572 = vunpack.c.l.b16 %v384
        %v573 = vunpack.c.h.b16 %v384
        %v574 = vunpack.c.l.b16 %v385
        %v575 = vunpack.c.h.b16 %v385
        %v576 = vunpack.c.l.b16 %v386
        %v577 = vunpack.c.h.b16 %v386
        %v578 = vunpack.c.l.b16 %v387
        %v579 = vunpack.c.h.b16 %v387
        %v580 = vunpack.c.l.b16 %v388
        %v581 = vunpack.c.h.b16 %v388
        %v582 = vunpack.c.l.b16 %v389
        %v583 = vunpack.c.h.b16 %v389
        %v584 = vunpack.c.l.b16 %v390
        %v585 = vunpack.c.h.b16 %v390
        %v586 = vunpack.c.l.b16 %v391
        %v587 = vunpack.c.h.b16 %v391
        %v588 = vunpack.c.l.b16 %v392
        %v589 = vunpack.c.h.b16 %v392
        %v590 = vunpack.c.l.b16 %v393
        %v591 = vunpack.c.h.b16 %v393
        %v592 = vunpack.c.l.b16 %v394
        %v593 = vunpack.c.h.b16 %v394
        %v594 = vunpack.c.l.b16 %v395
        %v595 = vunpack.c.h.b16 %v395
        %v596 = vunpack.c.l.b16 %v396
        %v597 = vunpack.c.h.b16 %v396
        %v598 = vunpack.c.l.b16 %v397
        %v599 = vunpack.c.h.b16 %v397
        %v600 = vunpack.c.l.b16 %v398
        %v601 = vunpack.c.h.b16 %v398
        %v602 = vunpack.c.l.b16 %v399
        %v603 = vunpack.c.h.b16 %v399
        %v604 = vunpack.c.l.b16 %v400
        %v605 = vunpack.c.h.b16 %v400
        %v606 = vunpack.c.l.b16 %v401
        %v607 = vunpack.c.h.b16 %v401
        %v608 = vunpack.c.l.b16 %v402
        %v609 = vunpack.c.h.b16 %v402
        %v610 = vunpack.c.l.b16 %v403
        %v611 = vunpack.c.h.b16 %v403
        %v612 = vunpack.c.l.b16 %v404
        %v613 = vunpack.c.h.b16 %v404
        %v614 = vunpack.c.l.b16 %v405
        %v615 = vunpack.c.h.b16 %v405
        %v616 = vunpack.c.l.b16 %v406
        %v617 = vunpack.c.h.b16 %v406
        %v618 = vunpack.c.l.b16 %v407
        %v619 = vunpack.c.h.b16 %v407
        %v620 = vunpack.c.l.b16 %v408
        %v621 = vunpack.c.h.b16 %v408
        %v622 = vunpack.c.l.b16 %v409
        %v623 = vunpack.c.h.b16 %v409
        %v624 = vunpack.c.l.b16 %v410
        %v625 = vunpack.c.h.b16 %v410
        %v626 = vunpack.c.l.b16 %v411
        %v627 = vunpack.c.h.b16 %v411
        %v628 = vunpack.c.l.b16 %v412
        %v629 = vunpack.c.h.b16 %v412
        %v630 = vunpack.c.l.b16 %v413
        %v631 = vunpack.c.h.b16 %v413
        %v632 = vunpack.c.l.b16 %v414
        %v633 = vunpack.c.h.b16 %v414
        %v634 = vunpack.c.l.b16 %v415
        %v635 = vunpack.c.h.b16 %v415
        %v636 = vunpack.c.l.b16 %v416
        %v637 = vunpack.c.h.b16 %v416
        %v638 = vunpack.c.l.b16 %v417
        %v639 = vunpack.c.h.b16 %v417
        %v640 = vunpack.c.l.b16 %v418
        %v641 = vunpack.c.h.b16 %v418
        %v642 = vunpack.c.l.b16 %v419
        %v643 = vunpack.c.h.b16 %v419
        %v644 = vunpack.c.l.b16 %v420
        %v645 = vunpack.c.h.b16 %v420
        %v646 = vunpack.c.l.b16 %v421
        %v647 = vunpack.c.h.b16 %v421
        %v648 = vunpack.c.l.b16 %v422
        %v649 = vunpack.c.h.b16 %v422
        %v650 = vunpack.c.l.b16 %v423
        %v651 = vunpack.c.h.b16 %v423
        %v652 = vunpack.c.l.b16 %v424
        %v653 = vunpack.c.h.b16 %v424
        %v654 = vunpack.c.l.b16 %v425
        %v655 = vunpack.c.h.b16 %v425
        %v656 = vunpack.c.l.b16 %v426
        %v657 = vunpack.c.h.b16 %v426
        %v658 = vunpack.c.l.b16 %v427
        %v659 = vunpack.c.h.b16 %v427
        %v660 = vunpack.c.l.b16 %v428
        %v661 = vunpack.c.h.b16 %v428
        %v662 = vunpack.c.l.b16 %v429
        %v663 = vunpack.c.h.b16 %v429
        %v664 = vpack.c.b16 %v544, %v536
        %v665 = vpack.c.b16 %v545, %v537
        %v666 = vpack.c.b16 %v546, %v538
        %v667 = vpack.c.b16 %v547, %v539
        %v668 = vpack.c.b16 %v548, %v540
        %v669 = vpack.c.b16 %v549, %v541
        %v670 = vpack.c.b16 %v550, %v542
        %v671 = vpack.c.b16 %v551, %v543
        %v672 = vpack.c.b16 %v560, %v552
        %v673 = vpack.c.b16 %v561, %v553
        %v674 = vpack.c.b16 %v562, %v554
        %v675 = vpack.c.b16 %v563, %v555
        %v676 = vpack.c.b16 %v564, %v556
        %v677 = vpack.c.b16 %v565, %v557
        %v678 = vpack.c.b16 %v566, %v558
        %v679 = vpack.c.b16 %v567, %v559
        %v680 = vpack.c.b16 %v576, %v568
        %v681 = vpack.c.b16 %v577, %v569
        %v682 = vpack.c.b16 %v578, %v570
        %v683 = vpack.c.b16 %v579, %v571
        %v684 = vpack.c.b16 %v580, %v572
        %v685 = vpack.c.b16 %v581, %v573
        %v686 = vpack.c.b16 %v582, %v574
        %v687 = vpack.c.b16 %v583, %v575
        %v688 = vpack.c.b16 %v592, %v584
        %v689 = vpack.c.b16 %v593, %v585
        %v690 = vpack.c.b16 %v594, %v586
        %v691 = vpack.c.b16 %v595, %v587
        %v692 = vpack.c.b16 %v596, %v588
        %v693 = vpack.c.b16 %v597, %v589
        %v694 = vpack.c.b16 %v598, %v590
        %v695 = vpack.c.b16 %v599, %v591
        %v696 = vpack.c.b16 %v608, %v600
        %v697 = vpack.c.b16 %v609, %v601
        %v698 = vpack.c.b16 %v610, %v602
        %v699 = vpack.c.b16 %v611, %v603
        %v700 = vpack.c.b16 %v612, %v604
        %v701 = vpack.c.b16 %v613, %v605
        %v702 = vpack.c.b16 %v614, %v606
        %v703 = vpack.c.b16 %v615, %v607
        %v704 = vpack.c.b16 %v624, %v616
        %v705 = vpack.c.b16 %v625, %v617
        %v706 = vpack.c.b16 %v626, %v618
        %v707 = vpack.c.b16 %v627, %v619
        %v708 = vpack.c.b16 %v628, %v620
        %v709 = vpack.c.b16 %v629, %v621
        %v710 = vpack.c.b16 %v630, %v622
        %v711 = vpack.c.b16 %v631, %v623
        %v712 = vpack.c.b16 %v640, %v632
        %v713 = vpack.c.b16 %v641, %v633
        %v714 = vpack.c.b16 %v642, %v634
        %v715 = vpack.c.b16 %v643, %v635
        %v716 = vpack.c.b16 %v644, %v636
        %v717 = vpack.c.b16 %v645, %v637
        %v718 = vpack.c.b16 %v646, %v638
        %v719 = vpack.c.b16 %v647, %v639
        %v720 = vpack.c.b16 %v656, %v648
        %v721 = vpack.c.b16 %v657, %v649
        %v722 = vpack.c.b16 %v658, %v650
        %v723 = vpack.c.b16 %v659, %v651
        %v724 = vpack.c.b16 %v660, %v652
        %v725 = vpack.c.b16 %v661, %v653
        %v726 = vpack.c.b16 %v662, %v654
        %v727 = vpack.c.b16 %v663, %v655
        %792 = vmatprep.subr.bf16.mxu0 %v665
        %793 = vmatpush1.bf16.msra.mxu0 %v664
        %794 = vmatprep.subr.bf16.mxu0 %v673
        %795 = vmatpush1.bf16.msra.mxu0 %v672
        %796 = vmatprep.subr.bf16.mxu0 %v681
        %797 = vmatpush1.bf16.msra.mxu0 %v680
        %798 = vmatprep.subr.bf16.mxu0 %v689
        %799 = vmatpush1.bf16.msra.mxu0 %v688
        %800 = vmatprep.subr.bf16.mxu0 %v697
        %801 = vmatpush1.bf16.msra.mxu0 %v696
        %802 = vmatprep.subr.bf16.mxu0 %v705
        %803 = vmatpush1.bf16.msra.mxu0 %v704
        %804 = vmatprep.subr.bf16.mxu0 %v713
        %805 = vmatpush1.bf16.msra.mxu0 %v712
        %806 = vmatprep.subr.bf16.mxu0 %v721
        %807 = vmatpush1.bf16.msra.mxu0 %v720
        %808 = vmatprep.subr.bf16.mxu0 0
        %809 = vmatpush1.bf16.msra.mxu0 0
        %810 = vmatprep.subr.bf16.mxu0 0
        %811 = vmatpush1.bf16.msra.mxu0 0
        %812 = vmatprep.subr.bf16.mxu0 0
        %813 = vmatpush1.bf16.msra.mxu0 0
        %814 = vmatprep.subr.bf16.mxu0 0
        %815 = vmatpush1.bf16.msra.mxu0 0
        %816 = vmatprep.subr.bf16.mxu0 0
        %817 = vmatpush1.bf16.msra.mxu0 0
        %818 = vmatprep.subr.bf16.mxu0 0
        %819 = vmatpush1.bf16.msra.mxu0 0
        %820 = vmatprep.subr.bf16.mxu0 0
        %821 = vmatpush1.bf16.msra.mxu0 0
        %822 = vmatprep.subr.bf16.mxu0 0
        %823 = vmatpush1.bf16.msra.mxu0 0
        %824 = vmatprep.mubr.bf16.mxu0 0
        %825 = vmatmul.mubr.bf16.gmra.mrb[0].mxu0 %v365
        %v826 = vpop.f32.mrb[0].mxu0
        %v827 = vadd.f32 %v435, %v826
        %v828 = vpop.f32.mrb[0].mxu0
        %v829 = vadd.f32 %v439, %v828
        %v830 = vpop.f32.mrb[0].mxu0
        %v831 = vadd.f32 %v435, %v830
        %v832 = vpop.f32.mrb[0].mxu0
        %v833 = vadd.f32 %v439, %v832
        %834 = vdwg.mxu0
        %835 = vmatprep.subr.bf16.mxu0 %v667
        %836 = vmatpush1.bf16.msra.mxu0 %v666
        %837 = vmatprep.subr.bf16.mxu0 %v675
        %838 = vmatpush1.bf16.msra.mxu0 %v674
        %839 = vmatprep.subr.bf16.mxu0 %v683
        %840 = vmatpush1.bf16.msra.mxu0 %v682
        %841 = vmatprep.subr.bf16.mxu0 %v691
        %842 = vmatpush1.bf16.msra.mxu0 %v690
        %843 = vmatprep.subr.bf16.mxu0 %v699
        %844 = vmatpush1.bf16.msra.mxu0 %v698
        %845 = vmatprep.subr.bf16.mxu0 %v707
        %846 = vmatpush1.bf16.msra.mxu0 %v706
        %847 = vmatprep.subr.bf16.mxu0 %v715
        %848 = vmatpush1.bf16.msra.mxu0 %v714
        %849 = vmatprep.subr.bf16.mxu0 %v723
        %850 = vmatpush1.bf16.msra.mxu0 %v722
        %851 = vmatprep.subr.bf16.mxu0 0
        %852 = vmatpush1.bf16.msra.mxu0 0
        %853 = vmatprep.subr.bf16.mxu0 0
        %854 = vmatpush1.bf16.msra.mxu0 0
        %855 = vmatprep.subr.bf16.mxu0 0
        %856 = vmatpush1.bf16.msra.mxu0 0
        %857 = vmatprep.subr.bf16.mxu0 0
        %858 = vmatpush1.bf16.msra.mxu0 0
        %859 = vmatprep.subr.bf16.mxu0 0
        %860 = vmatpush1.bf16.msra.mxu0 0
        %861 = vmatprep.subr.bf16.mxu0 0
        %862 = vmatpush1.bf16.msra.mxu0 0
        %863 = vmatprep.subr.bf16.mxu0 0
        %864 = vmatpush1.bf16.msra.mxu0 0
        %865 = vmatprep.subr.bf16.mxu0 0
        %866 = vmatpush1.bf16.msra.mxu0 0
        %867 = vmatprep.mubr.bf16.mxu0 0
        %868 = vmatmul.mubr.bf16.gmra.mrb[0].mxu0 %v365
        %v869 = vpop.f32.mrb[0].mxu0
        %v870 = vadd.f32 %v443, %v869
        %v871 = vpop.f32.mrb[0].mxu0
        %v872 = vadd.f32 %v447, %v871
        %v873 = vpop.f32.mrb[0].mxu0
        %v874 = vadd.f32 %v443, %v873
        %v875 = vpop.f32.mrb[0].mxu0
        %v876 = vadd.f32 %v447, %v875
        %877 = vdwg.mxu0
        %878 = vmatprep.subr.bf16.mxu0 %v669
        %879 = vmatpush1.bf16.msra.mxu0 %v668
        %880 = vmatprep.subr.bf16.mxu0 %v677
        %881 = vmatpush1.bf16.msra.mxu0 %v676
        %882 = vmatprep.subr.bf16.mxu0 %v685
        %883 = vmatpush1.bf16.msra.mxu0 %v684
        %884 = vmatprep.subr.bf16.mxu0 %v693
        %885 = vmatpush1.bf16.msra.mxu0 %v692
        %886 = vmatprep.subr.bf16.mxu0 %v701
        %887 = vmatpush1.bf16.msra.mxu0 %v700
        %888 = vmatprep.subr.bf16.mxu0 %v709
        %889 = vmatpush1.bf16.msra.mxu0 %v708
        %890 = vmatprep.subr.bf16.mxu0 %v717
        %891 = vmatpush1.bf16.msra.mxu0 %v716
        %892 = vmatprep.subr.bf16.mxu0 %v725
        %893 = vmatpush1.bf16.msra.mxu0 %v724
        %894 = vmatprep.subr.bf16.mxu0 0
        %895 = vmatpush1.bf16.msra.mxu0 0
        %896 = vmatprep.subr.bf16.mxu0 0
        %897 = vmatpush1.bf16.msra.mxu0 0
        %898 = vmatprep.subr.bf16.mxu0 0
        %899 = vmatpush1.bf16.msra.mxu0 0
        %900 = vmatprep.subr.bf16.mxu0 0
        %901 = vmatpush1.bf16.msra.mxu0 0
        %902 = vmatprep.subr.bf16.mxu0 0
        %903 = vmatpush1.bf16.msra.mxu0 0
        %904 = vmatprep.subr.bf16.mxu0 0
        %905 = vmatpush1.bf16.msra.mxu0 0
        %906 = vmatprep.subr.bf16.mxu0 0
        %907 = vmatpush1.bf16.msra.mxu0 0
        %908 = vmatprep.subr.bf16.mxu0 0
        %909 = vmatpush1.bf16.msra.mxu0 0
        %910 = vmatprep.mubr.bf16.mxu0 0
        %911 = vmatmul.mubr.bf16.gmra.mrb[0].mxu0 %v365
        %v912 = vpop.f32.mrb[0].mxu0
        %v913 = vadd.f32 %v451, %v912
        %v914 = vpop.f32.mrb[0].mxu0
        %v915 = vadd.f32 %v455, %v914
        %v916 = vpop.f32.mrb[0].mxu0
        %v917 = vadd.f32 %v451, %v916
        %v918 = vpop.f32.mrb[0].mxu0
        %v919 = vadd.f32 %v455, %v918
        %920 = vdwg.mxu0
        %921 = vmatprep.subr.bf16.mxu0 %v671
        %922 = vmatpush1.bf16.msra.mxu0 %v670
        %923 = vmatprep.subr.bf16.mxu0 %v679
        %924 = vmatpush1.bf16.msra.mxu0 %v678
        %925 = vmatprep.subr.bf16.mxu0 %v687
        %926 = vmatpush1.bf16.msra.mxu0 %v686
        %927 = vmatprep.subr.bf16.mxu0 %v695
        %928 = vmatpush1.bf16.msra.mxu0 %v694
        %929 = vmatprep.subr.bf16.mxu0 %v703
        %930 = vmatpush1.bf16.msra.mxu0 %v702
        %931 = vmatprep.subr.bf16.mxu0 %v711
        %932 = vmatpush1.bf16.msra.mxu0 %v710
        %933 = vmatprep.subr.bf16.mxu0 %v719
        %934 = vmatpush1.bf16.msra.mxu0 %v718
        %935 = vmatprep.subr.bf16.mxu0 %v727
        %936 = vmatpush1.bf16.msra.mxu0 %v726
        %937 = vmatprep.subr.bf16.mxu0 0
        %938 = vmatpush1.bf16.msra.mxu0 0
        %939 = vmatprep.subr.bf16.mxu0 0
        %940 = vmatpush1.bf16.msra.mxu0 0
        %941 = vmatprep.subr.bf16.mxu0 0
        %942 = vmatpush1.bf16.msra.mxu0 0
        %943 = vmatprep.subr.bf16.mxu0 0
        %944 = vmatpush1.bf16.msra.mxu0 0
        %945 = vmatprep.subr.bf16.mxu0 0
        %946 = vmatpush1.bf16.msra.mxu0 0
        %947 = vmatprep.subr.bf16.mxu0 0
        %948 = vmatpush1.bf16.msra.mxu0 0
        %949 = vmatprep.subr.bf16.mxu0 0
        %950 = vmatpush1.bf16.msra.mxu0 0
        %951 = vmatprep.subr.bf16.mxu0 0
        %952 = vmatpush1.bf16.msra.mxu0 0
        %953 = vmatprep.mubr.bf16.mxu0 0
        %954 = vmatmul.mubr.bf16.gmra.mrb[0].mxu0 %v365
        %v955 = vpop.f32.mrb[0].mxu0
        %v956 = vadd.f32 %v459, %v955
        %v957 = vpop.f32.mrb[0].mxu0
        %v958 = vadd.f32 %v463, %v957
        %v959 = vpop.f32.mrb[0].mxu0
        %v960 = vadd.f32 %v459, %v959
        %v961 = vpop.f32.mrb[0].mxu0
        %v962 = vadd.f32 %v463, %v961
        %963 = vdwg.mxu0
        %v964 = vmul.f32 %v827, 0.5
        %v965 = vmul.f32 %v829, 0.5
        %v966 = vmul.f32 %v870, 0.5
        %v967 = vmul.f32 %v872, 0.5
        %v968 = vmul.f32 %v913, 0.5
        %v969 = vmul.f32 %v915, 0.5
        %v970 = vmul.f32 %v956, 0.5
        %v971 = vmul.f32 %v958, 0.5
        %v972 = vmul.f32 %v831, 0.5
        %v973 = vmul.f32 %v833, 0.5
        %v974 = vmul.f32 %v874, 0.5
        %v975 = vmul.f32 %v876, 0.5
        %v976 = vmul.f32 %v917, 0.5
        %v977 = vmul.f32 %v919, 0.5
        %v978 = vmul.f32 %v960, 0.5
        %v979 = vmul.f32 %v962, 0.5
        %v980 = vmul.f32 %v827, 0.70710677
        %v981 = vmul.f32 %v829, 0.70710677
        %v982 = vmul.f32 %v870, 0.70710677
        %v983 = vmul.f32 %v872, 0.70710677
        %v984 = vmul.f32 %v913, 0.70710677
        %v985 = vmul.f32 %v915, 0.70710677
        %v986 = vmul.f32 %v956, 0.70710677
        %v987 = vmul.f32 %v958, 0.70710677
        %v988 = vmul.f32 %v831, 0.70710677
        %v989 = vmul.f32 %v833, 0.70710677
        %v990 = vmul.f32 %v874, 0.70710677
        %v991 = vmul.f32 %v876, 0.70710677
        %v992 = vmul.f32 %v917, 0.70710677
        %v993 = vmul.f32 %v919, 0.70710677
        %v994 = vmul.f32 %v960, 0.70710677
        %v995 = vmul.f32 %v962, 0.70710677
        %v996 = verf.f32.pop %v980
        %v997 = verf.f32.pop %v981
        %v998 = verf.f32.pop %v982
        %v999 = verf.f32.pop %v983
        %v1000 = verf.f32.pop %v984
        %v1001 = verf.f32.pop %v985
        %v1002 = verf.f32.pop %v986
        %v1003 = verf.f32.pop %v987
        %v1004 = verf.f32.pop %v988
        %v1005 = verf.f32.pop %v989
        %v1006 = verf.f32.pop %v990
        %v1007 = verf.f32.pop %v991
        %v1008 = verf.f32.pop %v992
        %v1009 = verf.f32.pop %v993
        %v1010 = verf.f32.pop %v994
        %v1011 = verf.f32.pop %v995
        %v1012 = vadd.f32 %v996, 1.0
        %v1013 = vadd.f32 %v997, 1.0
        %v1014 = vadd.f32 %v998, 1.0
        %v1015 = vadd.f32 %v999, 1.0
        %v1016 = vadd.f32 %v1000, 1.0
        %v1017 = vadd.f32 %v1001, 1.0
        %v1018 = vadd.f32 %v1002, 1.0
        %v1019 = vadd.f32 %v1003, 1.0
        %v1020 = vadd.f32 %v1004, 1.0
        %v1021 = vadd.f32 %v1005, 1.0
        %v1022 = vadd.f32 %v1006, 1.0
        %v1023 = vadd.f32 %v1007, 1.0
        %v1024 = vadd.f32 %v1008, 1.0
        %v1025 = vadd.f32 %v1009, 1.0
        %v1026 = vadd.f32 %v1010, 1.0
        %v1027 = vadd.f32 %v1011, 1.0
        %v1028 = vmul.f32 %v964, %v1012
        %v1029 = vmul.f32 %v965, %v1013
        %v1030 = vmul.f32 %v966, %v1014
        %v1031 = vmul.f32 %v967, %v1015
        %v1032 = vmul.f32 %v968, %v1016
        %v1033 = vmul.f32 %v969, %v1017
        %v1034 = vmul.f32 %v970, %v1018
        %v1035 = vmul.f32 %v971, %v1019
        %v1036 = vmul.f32 %v972, %v1020
        %v1037 = vmul.f32 %v973, %v1021
        %v1038 = vmul.f32 %v974, %v1022
        %v1039 = vmul.f32 %v975, %v1023
        %v1040 = vmul.f32 %v976, %v1024
        %v1041 = vmul.f32 %v977, %v1025
        %v1042 = vmul.f32 %v978, %v1026
        %v1043 = vmul.f32 %v979, %v1027
        %v1044 = vpack.c.bf16 %v1036, %v1028
        %v1045 = vpack.c.bf16 %v1037, %v1029
        %v1046 = vpack.c.bf16 %v1038, %v1030
        %v1047 = vpack.c.bf16 %v1039, %v1031
        %v1048 = vpack.c.bf16 %v1040, %v1032
        %v1049 = vpack.c.bf16 %v1041, %v1033
        %v1050 = vpack.c.bf16 %v1042, %v1034
        %v1051 = vpack.c.bf16 %v1043, %v1035
        %v1052 = vld [vmem:[#allocation6] sm:$0xff]
        %v1053 = vld [vmem:[#allocation6 + $0x8] sm:$0xff]
        %v1054 = vld [vmem:[#allocation6 + $0x10] sm:$0xff]
        %v1055 = vld [vmem:[#allocation6 + $0x18] sm:$0xff]
        %v1056 = vld [vmem:[#allocation6 + $0x20] sm:$0xff]
        %v1057 = vld [vmem:[#allocation6 + $0x28] sm:$0xff]
        %v1058 = vld [vmem:[#allocation6 + $0x30] sm:$0xff]
        %v1059 = vld [vmem:[#allocation6 + $0x38] sm:$0xff]
        %v1060 = vld [vmem:[#allocation6 + $0x40] sm:$0xff]
        %v1061 = vld [vmem:[#allocation6 + $0x48] sm:$0xff]
        %v1062 = vld [vmem:[#allocation6 + $0x50] sm:$0xff]
        %v1063 = vld [vmem:[#allocation6 + $0x58] sm:$0xff]
        %v1064 = vld [vmem:[#allocation6 + $0x60] sm:$0xff]
        %v1065 = vld [vmem:[#allocation6 + $0x68] sm:$0xff]
        %v1066 = vld [vmem:[#allocation6 + $0x70] sm:$0xff]
        %v1067 = vld [vmem:[#allocation6 + $0x78] sm:$0xff]
        %v1068 = vld [vmem:[#allocation6 + $0x80] sm:$0xff]
        %v1069 = vld [vmem:[#allocation6 + $0x88] sm:$0xff]
        %v1070 = vld [vmem:[#allocation6 + $0x90] sm:$0xff]
        %v1071 = vld [vmem:[#allocation6 + $0x98] sm:$0xff]
        %v1072 = vld [vmem:[#allocation6 + $0xa0] sm:$0xff]
        %v1073 = vld [vmem:[#allocation6 + $0xa8] sm:$0xff]
        %v1074 = vld [vmem:[#allocation6 + $0xb0] sm:$0xff]
        %v1075 = vld [vmem:[#allocation6 + $0xb8] sm:$0xff]
        %v1076 = vld [vmem:[#allocation6 + $0xc0] sm:$0xff]
        %v1077 = vld [vmem:[#allocation6 + $0xc8] sm:$0xff]
        %v1078 = vld [vmem:[#allocation6 + $0xd0] sm:$0xff]
        %v1079 = vld [vmem:[#allocation6 + $0xd8] sm:$0xff]
        %v1080 = vld [vmem:[#allocation6 + $0xe0] sm:$0xff]
        %v1081 = vld [vmem:[#allocation6 + $0xe8] sm:$0xff]
        %v1082 = vld [vmem:[#allocation6 + $0xf0] sm:$0xff]
        %v1083 = vld [vmem:[#allocation6 + $0xf8] sm:$0xff]
        %v1084 = vld [vmem:[#allocation6 + $0x100] sm:$0xff]
        %v1085 = vld [vmem:[#allocation6 + $0x108] sm:$0xff]
        %v1086 = vld [vmem:[#allocation6 + $0x110] sm:$0xff]
        %v1087 = vld [vmem:[#allocation6 + $0x118] sm:$0xff]
        %v1088 = vld [vmem:[#allocation6 + $0x120] sm:$0xff]
        %v1089 = vld [vmem:[#allocation6 + $0x128] sm:$0xff]
        %v1090 = vld [vmem:[#allocation6 + $0x130] sm:$0xff]
        %v1091 = vld [vmem:[#allocation6 + $0x138] sm:$0xff]
        %v1092 = vld [vmem:[#allocation6 + $0x140] sm:$0xff]
        %v1093 = vld [vmem:[#allocation6 + $0x148] sm:$0xff]
        %v1094 = vld [vmem:[#allocation6 + $0x150] sm:$0xff]
        %v1095 = vld [vmem:[#allocation6 + $0x158] sm:$0xff]
        %v1096 = vld [vmem:[#allocation6 + $0x160] sm:$0xff]
        %v1097 = vld [vmem:[#allocation6 + $0x168] sm:$0xff]
        %v1098 = vld [vmem:[#allocation6 + $0x170] sm:$0xff]
        %v1099 = vld [vmem:[#allocation6 + $0x178] sm:$0xff]
        %v1100 = vld [vmem:[#allocation6 + $0x180] sm:$0xff]
        %v1101 = vld [vmem:[#allocation6 + $0x188] sm:$0xff]
        %v1102 = vld [vmem:[#allocation6 + $0x190] sm:$0xff]
        %v1103 = vld [vmem:[#allocation6 + $0x198] sm:$0xff]
        %v1104 = vld [vmem:[#allocation6 + $0x1a0] sm:$0xff]
        %v1105 = vld [vmem:[#allocation6 + $0x1a8] sm:$0xff]
        %v1106 = vld [vmem:[#allocation6 + $0x1b0] sm:$0xff]
        %v1107 = vld [vmem:[#allocation6 + $0x1b8] sm:$0xff]
        %v1108 = vld [vmem:[#allocation6 + $0x1c0] sm:$0xff]
        %v1109 = vld [vmem:[#allocation6 + $0x1c8] sm:$0xff]
        %v1110 = vld [vmem:[#allocation6 + $0x1d0] sm:$0xff]
        %v1111 = vld [vmem:[#allocation6 + $0x1d8] sm:$0xff]
        %v1112 = vld [vmem:[#allocation6 + $0x1e0] sm:$0xff]
        %v1113 = vld [vmem:[#allocation6 + $0x1e8] sm:$0xff]
        %v1114 = vld [vmem:[#allocation6 + $0x1f0] sm:$0xff]
        %v1115 = vld [vmem:[#allocation6 + $0x1f8] sm:$0xff]
        %v1116 = vld [vmem:[#allocation6 + $0x200] sm:$0xff]
        %v1117 = vld [vmem:[#allocation6 + $0x208] sm:$0xff]
        %v1118 = vld [vmem:[#allocation6 + $0x210] sm:$0xff]
        %v1119 = vld [vmem:[#allocation6 + $0x218] sm:$0xff]
        %v1120 = vld [vmem:[#allocation6 + $0x220] sm:$0xff]
        %v1121 = vld [vmem:[#allocation6 + $0x228] sm:$0xff]
        %v1122 = vld [vmem:[#allocation6 + $0x230] sm:$0xff]
        %v1123 = vld [vmem:[#allocation6 + $0x238] sm:$0xff]
        %v1124 = vld [vmem:[#allocation6 + $0x240] sm:$0xff]
        %v1125 = vld [vmem:[#allocation6 + $0x248] sm:$0xff]
        %v1126 = vld [vmem:[#allocation6 + $0x250] sm:$0xff]
        %v1127 = vld [vmem:[#allocation6 + $0x258] sm:$0xff]
        %v1128 = vld [vmem:[#allocation6 + $0x260] sm:$0xff]
        %v1129 = vld [vmem:[#allocation6 + $0x268] sm:$0xff]
        %v1130 = vld [vmem:[#allocation6 + $0x270] sm:$0xff]
        %v1131 = vld [vmem:[#allocation6 + $0x278] sm:$0xff]
        %v1132 = vld [vmem:[#allocation6 + $0x280] sm:$0xff]
        %v1133 = vld [vmem:[#allocation6 + $0x288] sm:$0xff]
        %v1134 = vld [vmem:[#allocation6 + $0x290] sm:$0xff]
        %v1135 = vld [vmem:[#allocation6 + $0x298] sm:$0xff]
        %v1136 = vld [vmem:[#allocation6 + $0x2a0] sm:$0xff]
        %v1137 = vld [vmem:[#allocation6 + $0x2a8] sm:$0xff]
        %v1138 = vld [vmem:[#allocation6 + $0x2b0] sm:$0xff]
        %v1139 = vld [vmem:[#allocation6 + $0x2b8] sm:$0xff]
        %v1140 = vld [vmem:[#allocation6 + $0x2c0] sm:$0xff]
        %v1141 = vld [vmem:[#allocation6 + $0x2c8] sm:$0xff]
        %v1142 = vld [vmem:[#allocation6 + $0x2d0] sm:$0xff]
        %v1143 = vld [vmem:[#allocation6 + $0x2d8] sm:$0xff]
        %v1144 = vld [vmem:[#allocation6 + $0x2e0] sm:$0xff]
        %v1145 = vld [vmem:[#allocation6 + $0x2e8] sm:$0xff]
        %v1146 = vld [vmem:[#allocation6 + $0x2f0] sm:$0xff]
        %v1147 = vld [vmem:[#allocation6 + $0x2f8] sm:$0xff]
        %v1148 = vld [vmem:[#allocation6 + $0x300] sm:$0xff]
        %v1149 = vld [vmem:[#allocation6 + $0x308] sm:$0xff]
        %v1150 = vld [vmem:[#allocation6 + $0x310] sm:$0xff]
        %v1151 = vld [vmem:[#allocation6 + $0x318] sm:$0xff]
        %v1152 = vld [vmem:[#allocation6 + $0x320] sm:$0xff]
        %v1153 = vld [vmem:[#allocation6 + $0x328] sm:$0xff]
        %v1154 = vld [vmem:[#allocation6 + $0x330] sm:$0xff]
        %v1155 = vld [vmem:[#allocation6 + $0x338] sm:$0xff]
        %v1156 = vld [vmem:[#allocation6 + $0x340] sm:$0xff]
        %v1157 = vld [vmem:[#allocation6 + $0x348] sm:$0xff]
        %v1158 = vld [vmem:[#allocation6 + $0x350] sm:$0xff]
        %v1159 = vld [vmem:[#allocation6 + $0x358] sm:$0xff]
        %v1160 = vld [vmem:[#allocation6 + $0x360] sm:$0xff]
        %v1161 = vld [vmem:[#allocation6 + $0x368] sm:$0xff]
        %v1162 = vld [vmem:[#allocation6 + $0x370] sm:$0xff]
        %v1163 = vld [vmem:[#allocation6 + $0x378] sm:$0xff]
        %v1164 = vld [vmem:[#allocation6 + $0x380] sm:$0xff]
        %v1165 = vld [vmem:[#allocation6 + $0x388] sm:$0xff]
        %v1166 = vld [vmem:[#allocation6 + $0x390] sm:$0xff]
        %v1167 = vld [vmem:[#allocation6 + $0x398] sm:$0xff]
        %v1168 = vld [vmem:[#allocation6 + $0x3a0] sm:$0xff]
        %v1169 = vld [vmem:[#allocation6 + $0x3a8] sm:$0xff]
        %v1170 = vld [vmem:[#allocation6 + $0x3b0] sm:$0xff]
        %v1171 = vld [vmem:[#allocation6 + $0x3b8] sm:$0xff]
        %v1172 = vld [vmem:[#allocation6 + $0x3c0] sm:$0xff]
        %v1173 = vld [vmem:[#allocation6 + $0x3c8] sm:$0xff]
        %v1174 = vld [vmem:[#allocation6 + $0x3d0] sm:$0xff]
        %v1175 = vld [vmem:[#allocation6 + $0x3d8] sm:$0xff]
        %v1176 = vld [vmem:[#allocation6 + $0x3e0] sm:$0xff]
        %v1177 = vld [vmem:[#allocation6 + $0x3e8] sm:$0xff]
        %v1178 = vld [vmem:[#allocation6 + $0x3f0] sm:$0xff]
        %v1179 = vld [vmem:[#allocation6 + $0x3f8] sm:$0xff]
        %v1180 = vld [vmem:[#allocation6 + $0x400] sm:$0xff]
        %v1181 = vld [vmem:[#allocation6 + $0x408] sm:$0xff]
        %v1182 = vld [vmem:[#allocation6 + $0x410] sm:$0xff]
        %v1183 = vld [vmem:[#allocation6 + $0x418] sm:$0xff]
        %v1184 = vld [vmem:[#allocation6 + $0x420] sm:$0xff]
        %v1185 = vld [vmem:[#allocation6 + $0x428] sm:$0xff]
        %v1186 = vld [vmem:[#allocation6 + $0x430] sm:$0xff]
        %v1187 = vld [vmem:[#allocation6 + $0x438] sm:$0xff]
        %v1188 = vld [vmem:[#allocation6 + $0x440] sm:$0xff]
        %v1189 = vld [vmem:[#allocation6 + $0x448] sm:$0xff]
        %v1190 = vld [vmem:[#allocation6 + $0x450] sm:$0xff]
        %v1191 = vld [vmem:[#allocation6 + $0x458] sm:$0xff]
        %v1192 = vld [vmem:[#allocation6 + $0x460] sm:$0xff]
        %v1193 = vld [vmem:[#allocation6 + $0x468] sm:$0xff]
        %v1194 = vld [vmem:[#allocation6 + $0x470] sm:$0xff]
        %v1195 = vld [vmem:[#allocation6 + $0x478] sm:$0xff]
        %v1196 = vld [vmem:[#allocation6 + $0x480] sm:$0xff]
        %v1197 = vld [vmem:[#allocation6 + $0x488] sm:$0xff]
        %v1198 = vld [vmem:[#allocation6 + $0x490] sm:$0xff]
        %v1199 = vld [vmem:[#allocation6 + $0x498] sm:$0xff]
        %v1200 = vld [vmem:[#allocation6 + $0x4a0] sm:$0xff]
        %v1201 = vld [vmem:[#allocation6 + $0x4a8] sm:$0xff]
        %v1202 = vld [vmem:[#allocation6 + $0x4b0] sm:$0xff]
        %v1203 = vld [vmem:[#allocation6 + $0x4b8] sm:$0xff]
        %v1204 = vld [vmem:[#allocation6 + $0x4c0] sm:$0xff]
        %v1205 = vld [vmem:[#allocation6 + $0x4c8] sm:$0xff]
        %v1206 = vld [vmem:[#allocation6 + $0x4d0] sm:$0xff]
        %v1207 = vld [vmem:[#allocation6 + $0x4d8] sm:$0xff]
        %v1208 = vld [vmem:[#allocation6 + $0x4e0] sm:$0xff]
        %v1209 = vld [vmem:[#allocation6 + $0x4e8] sm:$0xff]
        %v1210 = vld [vmem:[#allocation6 + $0x4f0] sm:$0xff]
        %v1211 = vld [vmem:[#allocation6 + $0x4f8] sm:$0xff]
        %v1212 = vld [vmem:[#allocation6 + $0x500] sm:$0xff]
        %v1213 = vld [vmem:[#allocation6 + $0x508] sm:$0xff]
        %v1214 = vld [vmem:[#allocation6 + $0x510] sm:$0xff]
        %v1215 = vld [vmem:[#allocation6 + $0x518] sm:$0xff]
        %v1216 = vld [vmem:[#allocation6 + $0x520] sm:$0xff]
        %v1217 = vld [vmem:[#allocation6 + $0x528] sm:$0xff]
        %v1218 = vld [vmem:[#allocation6 + $0x530] sm:$0xff]
        %v1219 = vld [vmem:[#allocation6 + $0x538] sm:$0xff]
        %v1220 = vld [vmem:[#allocation6 + $0x540] sm:$0xff]
        %v1221 = vld [vmem:[#allocation6 + $0x548] sm:$0xff]
        %v1222 = vld [vmem:[#allocation6 + $0x550] sm:$0xff]
        %v1223 = vld [vmem:[#allocation6 + $0x558] sm:$0xff]
        %v1224 = vld [vmem:[#allocation6 + $0x560] sm:$0xff]
        %v1225 = vld [vmem:[#allocation6 + $0x568] sm:$0xff]
        %v1226 = vld [vmem:[#allocation6 + $0x570] sm:$0xff]
        %v1227 = vld [vmem:[#allocation6 + $0x578] sm:$0xff]
        %v1228 = vld [vmem:[#allocation6 + $0x580] sm:$0xff]
        %v1229 = vld [vmem:[#allocation6 + $0x588] sm:$0xff]
        %v1230 = vld [vmem:[#allocation6 + $0x590] sm:$0xff]
        %v1231 = vld [vmem:[#allocation6 + $0x598] sm:$0xff]
        %v1232 = vld [vmem:[#allocation6 + $0x5a0] sm:$0xff]
        %v1233 = vld [vmem:[#allocation6 + $0x5a8] sm:$0xff]
        %v1234 = vld [vmem:[#allocation6 + $0x5b0] sm:$0xff]
        %v1235 = vld [vmem:[#allocation6 + $0x5b8] sm:$0xff]
        %v1236 = vld [vmem:[#allocation6 + $0x5c0] sm:$0xff]
        %v1237 = vld [vmem:[#allocation6 + $0x5c8] sm:$0xff]
        %v1238 = vld [vmem:[#allocation6 + $0x5d0] sm:$0xff]
        %v1239 = vld [vmem:[#allocation6 + $0x5d8] sm:$0xff]
        %v1240 = vld [vmem:[#allocation6 + $0x5e0] sm:$0xff]
        %v1241 = vld [vmem:[#allocation6 + $0x5e8] sm:$0xff]
        %v1242 = vld [vmem:[#allocation6 + $0x5f0] sm:$0xff]
        %v1243 = vld [vmem:[#allocation6 + $0x5f8] sm:$0xff]
        %v1244 = vld [vmem:[#allocation6 + $0x600] sm:$0xff]
        %v1245 = vld [vmem:[#allocation6 + $0x608] sm:$0xff]
        %v1246 = vld [vmem:[#allocation6 + $0x610] sm:$0xff]
        %v1247 = vld [vmem:[#allocation6 + $0x618] sm:$0xff]
        %v1248 = vld [vmem:[#allocation6 + $0x620] sm:$0xff]
        %v1249 = vld [vmem:[#allocation6 + $0x628] sm:$0xff]
        %v1250 = vld [vmem:[#allocation6 + $0x630] sm:$0xff]
        %v1251 = vld [vmem:[#allocation6 + $0x638] sm:$0xff]
        %v1252 = vld [vmem:[#allocation6 + $0x640] sm:$0xff]
        %v1253 = vld [vmem:[#allocation6 + $0x648] sm:$0xff]
        %v1254 = vld [vmem:[#allocation6 + $0x650] sm:$0xff]
        %v1255 = vld [vmem:[#allocation6 + $0x658] sm:$0xff]
        %v1256 = vld [vmem:[#allocation6 + $0x660] sm:$0xff]
        %v1257 = vld [vmem:[#allocation6 + $0x668] sm:$0xff]
        %v1258 = vld [vmem:[#allocation6 + $0x670] sm:$0xff]
        %v1259 = vld [vmem:[#allocation6 + $0x678] sm:$0xff]
        %v1260 = vld [vmem:[#allocation6 + $0x680] sm:$0xff]
        %v1261 = vld [vmem:[#allocation6 + $0x688] sm:$0xff]
        %v1262 = vld [vmem:[#allocation6 + $0x690] sm:$0xff]
        %v1263 = vld [vmem:[#allocation6 + $0x698] sm:$0xff]
        %v1264 = vld [vmem:[#allocation6 + $0x6a0] sm:$0xff]
        %v1265 = vld [vmem:[#allocation6 + $0x6a8] sm:$0xff]
        %v1266 = vld [vmem:[#allocation6 + $0x6b0] sm:$0xff]
        %v1267 = vld [vmem:[#allocation6 + $0x6b8] sm:$0xff]
        %v1268 = vld [vmem:[#allocation6 + $0x6c0] sm:$0xff]
        %v1269 = vld [vmem:[#allocation6 + $0x6c8] sm:$0xff]
        %v1270 = vld [vmem:[#allocation6 + $0x6d0] sm:$0xff]
        %v1271 = vld [vmem:[#allocation6 + $0x6d8] sm:$0xff]
        %v1272 = vld [vmem:[#allocation6 + $0x6e0] sm:$0xff]
        %v1273 = vld [vmem:[#allocation6 + $0x6e8] sm:$0xff]
        %v1274 = vld [vmem:[#allocation6 + $0x6f0] sm:$0xff]
        %v1275 = vld [vmem:[#allocation6 + $0x6f8] sm:$0xff]
        %v1276 = vld [vmem:[#allocation6 + $0x700] sm:$0xff]
        %v1277 = vld [vmem:[#allocation6 + $0x708] sm:$0xff]
        %v1278 = vld [vmem:[#allocation6 + $0x710] sm:$0xff]
        %v1279 = vld [vmem:[#allocation6 + $0x718] sm:$0xff]
        %v1280 = vld [vmem:[#allocation6 + $0x720] sm:$0xff]
        %v1281 = vld [vmem:[#allocation6 + $0x728] sm:$0xff]
        %v1282 = vld [vmem:[#allocation6 + $0x730] sm:$0xff]
        %v1283 = vld [vmem:[#allocation6 + $0x738] sm:$0xff]
        %v1284 = vld [vmem:[#allocation6 + $0x740] sm:$0xff]
        %v1285 = vld [vmem:[#allocation6 + $0x748] sm:$0xff]
        %v1286 = vld [vmem:[#allocation6 + $0x750] sm:$0xff]
        %v1287 = vld [vmem:[#allocation6 + $0x758] sm:$0xff]
        %v1288 = vld [vmem:[#allocation6 + $0x760] sm:$0xff]
        %v1289 = vld [vmem:[#allocation6 + $0x768] sm:$0xff]
        %v1290 = vld [vmem:[#allocation6 + $0x770] sm:$0xff]
        %v1291 = vld [vmem:[#allocation6 + $0x778] sm:$0xff]
        %v1292 = vld [vmem:[#allocation6 + $0x780] sm:$0xff]
        %v1293 = vld [vmem:[#allocation6 + $0x788] sm:$0xff]
        %v1294 = vld [vmem:[#allocation6 + $0x790] sm:$0xff]
        %v1295 = vld [vmem:[#allocation6 + $0x798] sm:$0xff]
        %v1296 = vld [vmem:[#allocation6 + $0x7a0] sm:$0xff]
        %v1297 = vld [vmem:[#allocation6 + $0x7a8] sm:$0xff]
        %v1298 = vld [vmem:[#allocation6 + $0x7b0] sm:$0xff]
        %v1299 = vld [vmem:[#allocation6 + $0x7b8] sm:$0xff]
        %v1300 = vld [vmem:[#allocation6 + $0x7c0] sm:$0xff]
        %v1301 = vld [vmem:[#allocation6 + $0x7c8] sm:$0xff]
        %v1302 = vld [vmem:[#allocation6 + $0x7d0] sm:$0xff]
        %v1303 = vld [vmem:[#allocation6 + $0x7d8] sm:$0xff]
        %v1304 = vld [vmem:[#allocation6 + $0x7e0] sm:$0xff]
        %v1305 = vld [vmem:[#allocation6 + $0x7e8] sm:$0xff]
        %v1306 = vld [vmem:[#allocation6 + $0x7f0] sm:$0xff]
        %v1307 = vld [vmem:[#allocation6 + $0x7f8] sm:$0xff]
        %v1308 = vld [vmem:[#allocation6 + $0x800] sm:$0xff]
        %v1309 = vld [vmem:[#allocation6 + $0x808] sm:$0xff]
        %v1310 = vld [vmem:[#allocation6 + $0x810] sm:$0xff]
        %v1311 = vld [vmem:[#allocation6 + $0x818] sm:$0xff]
        %v1312 = vld [vmem:[#allocation6 + $0x820] sm:$0xff]
        %v1313 = vld [vmem:[#allocation6 + $0x828] sm:$0xff]
        %v1314 = vld [vmem:[#allocation6 + $0x830] sm:$0xff]
        %v1315 = vld [vmem:[#allocation6 + $0x838] sm:$0xff]
        %v1316 = vld [vmem:[#allocation6 + $0x840] sm:$0xff]
        %v1317 = vld [vmem:[#allocation6 + $0x848] sm:$0xff]
        %v1318 = vld [vmem:[#allocation6 + $0x850] sm:$0xff]
        %v1319 = vld [vmem:[#allocation6 + $0x858] sm:$0xff]
        %v1320 = vld [vmem:[#allocation6 + $0x860] sm:$0xff]
        %v1321 = vld [vmem:[#allocation6 + $0x868] sm:$0xff]
        %v1322 = vld [vmem:[#allocation6 + $0x870] sm:$0xff]
        %v1323 = vld [vmem:[#allocation6 + $0x878] sm:$0xff]
        %v1324 = vld [vmem:[#allocation6 + $0x880] sm:$0xff]
        %v1325 = vld [vmem:[#allocation6 + $0x888] sm:$0xff]
        %v1326 = vld [vmem:[#allocation6 + $0x890] sm:$0xff]
        %v1327 = vld [vmem:[#allocation6 + $0x898] sm:$0xff]
        %v1328 = vld [vmem:[#allocation6 + $0x8a0] sm:$0xff]
        %v1329 = vld [vmem:[#allocation6 + $0x8a8] sm:$0xff]
        %v1330 = vld [vmem:[#allocation6 + $0x8b0] sm:$0xff]
        %v1331 = vld [vmem:[#allocation6 + $0x8b8] sm:$0xff]
        %v1332 = vld [vmem:[#allocation6 + $0x8c0] sm:$0xff]
        %v1333 = vld [vmem:[#allocation6 + $0x8c8] sm:$0xff]
        %v1334 = vld [vmem:[#allocation6 + $0x8d0] sm:$0xff]
        %v1335 = vld [vmem:[#allocation6 + $0x8d8] sm:$0xff]
        %v1336 = vld [vmem:[#allocation6 + $0x8e0] sm:$0xff]
        %v1337 = vld [vmem:[#allocation6 + $0x8e8] sm:$0xff]
        %v1338 = vld [vmem:[#allocation6 + $0x8f0] sm:$0xff]
        %v1339 = vld [vmem:[#allocation6 + $0x8f8] sm:$0xff]
        %v1340 = vld [vmem:[#allocation6 + $0x900] sm:$0xff]
        %v1341 = vld [vmem:[#allocation6 + $0x908] sm:$0xff]
        %v1342 = vld [vmem:[#allocation6 + $0x910] sm:$0xff]
        %v1343 = vld [vmem:[#allocation6 + $0x918] sm:$0xff]
        %v1344 = vld [vmem:[#allocation6 + $0x920] sm:$0xff]
        %v1345 = vld [vmem:[#allocation6 + $0x928] sm:$0xff]
        %v1346 = vld [vmem:[#allocation6 + $0x930] sm:$0xff]
        %v1347 = vld [vmem:[#allocation6 + $0x938] sm:$0xff]
        %v1348 = vld [vmem:[#allocation6 + $0x940] sm:$0xff]
        %v1349 = vld [vmem:[#allocation6 + $0x948] sm:$0xff]
        %v1350 = vld [vmem:[#allocation6 + $0x950] sm:$0xff]
        %v1351 = vld [vmem:[#allocation6 + $0x958] sm:$0xff]
        %v1352 = vld [vmem:[#allocation6 + $0x960] sm:$0xff]
        %v1353 = vld [vmem:[#allocation6 + $0x968] sm:$0xff]
        %v1354 = vld [vmem:[#allocation6 + $0x970] sm:$0xff]
        %v1355 = vld [vmem:[#allocation6 + $0x978] sm:$0xff]
        %v1356 = vld [vmem:[#allocation6 + $0x980] sm:$0xff]
        %v1357 = vld [vmem:[#allocation6 + $0x988] sm:$0xff]
        %v1358 = vld [vmem:[#allocation6 + $0x990] sm:$0xff]
        %v1359 = vld [vmem:[#allocation6 + $0x998] sm:$0xff]
        %v1360 = vld [vmem:[#allocation6 + $0x9a0] sm:$0xff]
        %v1361 = vld [vmem:[#allocation6 + $0x9a8] sm:$0xff]
        %v1362 = vld [vmem:[#allocation6 + $0x9b0] sm:$0xff]
        %v1363 = vld [vmem:[#allocation6 + $0x9b8] sm:$0xff]
        %v1364 = vld [vmem:[#allocation6 + $0x9c0] sm:$0xff]
        %v1365 = vld [vmem:[#allocation6 + $0x9c8] sm:$0xff]
        %v1366 = vld [vmem:[#allocation6 + $0x9d0] sm:$0xff]
        %v1367 = vld [vmem:[#allocation6 + $0x9d8] sm:$0xff]
        %v1368 = vld [vmem:[#allocation6 + $0x9e0] sm:$0xff]
        %v1369 = vld [vmem:[#allocation6 + $0x9e8] sm:$0xff]
        %v1370 = vld [vmem:[#allocation6 + $0x9f0] sm:$0xff]
        %v1371 = vld [vmem:[#allocation6 + $0x9f8] sm:$0xff]
        %v1372 = vld [vmem:[#allocation6 + $0xa00] sm:$0xff]
        %v1373 = vld [vmem:[#allocation6 + $0xa08] sm:$0xff]
        %v1374 = vld [vmem:[#allocation6 + $0xa10] sm:$0xff]
        %v1375 = vld [vmem:[#allocation6 + $0xa18] sm:$0xff]
        %v1376 = vld [vmem:[#allocation6 + $0xa20] sm:$0xff]
        %v1377 = vld [vmem:[#allocation6 + $0xa28] sm:$0xff]
        %v1378 = vld [vmem:[#allocation6 + $0xa30] sm:$0xff]
        %v1379 = vld [vmem:[#allocation6 + $0xa38] sm:$0xff]
        %v1380 = vld [vmem:[#allocation6 + $0xa40] sm:$0xff]
        %v1381 = vld [vmem:[#allocation6 + $0xa48] sm:$0xff]
        %v1382 = vld [vmem:[#allocation6 + $0xa50] sm:$0xff]
        %v1383 = vld [vmem:[#allocation6 + $0xa58] sm:$0xff]
        %v1384 = vld [vmem:[#allocation6 + $0xa60] sm:$0xff]
        %v1385 = vld [vmem:[#allocation6 + $0xa68] sm:$0xff]
        %v1386 = vld [vmem:[#allocation6 + $0xa70] sm:$0xff]
        %v1387 = vld [vmem:[#allocation6 + $0xa78] sm:$0xff]
        %v1388 = vld [vmem:[#allocation6 + $0xa80] sm:$0xff]
        %v1389 = vld [vmem:[#allocation6 + $0xa88] sm:$0xff]
        %v1390 = vld [vmem:[#allocation6 + $0xa90] sm:$0xff]
        %v1391 = vld [vmem:[#allocation6 + $0xa98] sm:$0xff]
        %v1392 = vld [vmem:[#allocation6 + $0xaa0] sm:$0xff]
        %v1393 = vld [vmem:[#allocation6 + $0xaa8] sm:$0xff]
        %v1394 = vld [vmem:[#allocation6 + $0xab0] sm:$0xff]
        %v1395 = vld [vmem:[#allocation6 + $0xab8] sm:$0xff]
        %v1396 = vld [vmem:[#allocation6 + $0xac0] sm:$0xff]
        %v1397 = vld [vmem:[#allocation6 + $0xac8] sm:$0xff]
        %v1398 = vld [vmem:[#allocation6 + $0xad0] sm:$0xff]
        %v1399 = vld [vmem:[#allocation6 + $0xad8] sm:$0xff]
        %v1400 = vld [vmem:[#allocation6 + $0xae0] sm:$0xff]
        %v1401 = vld [vmem:[#allocation6 + $0xae8] sm:$0xff]
        %v1402 = vld [vmem:[#allocation6 + $0xaf0] sm:$0xff]
        %v1403 = vld [vmem:[#allocation6 + $0xaf8] sm:$0xff]
        %v1404 = vld [vmem:[#allocation6 + $0xb00] sm:$0xff]
        %v1405 = vld [vmem:[#allocation6 + $0xb08] sm:$0xff]
        %v1406 = vld [vmem:[#allocation6 + $0xb10] sm:$0xff]
        %v1407 = vld [vmem:[#allocation6 + $0xb18] sm:$0xff]
        %v1408 = vld [vmem:[#allocation6 + $0xb20] sm:$0xff]
        %v1409 = vld [vmem:[#allocation6 + $0xb28] sm:$0xff]
        %v1410 = vld [vmem:[#allocation6 + $0xb30] sm:$0xff]
        %v1411 = vld [vmem:[#allocation6 + $0xb38] sm:$0xff]
        %v1412 = vld [vmem:[#allocation6 + $0xb40] sm:$0xff]
        %v1413 = vld [vmem:[#allocation6 + $0xb48] sm:$0xff]
        %v1414 = vld [vmem:[#allocation6 + $0xb50] sm:$0xff]
        %v1415 = vld [vmem:[#allocation6 + $0xb58] sm:$0xff]
        %v1416 = vld [vmem:[#allocation6 + $0xb60] sm:$0xff]
        %v1417 = vld [vmem:[#allocation6 + $0xb68] sm:$0xff]
        %v1418 = vld [vmem:[#allocation6 + $0xb70] sm:$0xff]
        %v1419 = vld [vmem:[#allocation6 + $0xb78] sm:$0xff]
        %v1420 = vld [vmem:[#allocation6 + $0xb80] sm:$0xff]
        %v1421 = vld [vmem:[#allocation6 + $0xb88] sm:$0xff]
        %v1422 = vld [vmem:[#allocation6 + $0xb90] sm:$0xff]
        %v1423 = vld [vmem:[#allocation6 + $0xb98] sm:$0xff]
        %v1424 = vld [vmem:[#allocation6 + $0xba0] sm:$0xff]
        %v1425 = vld [vmem:[#allocation6 + $0xba8] sm:$0xff]
        %v1426 = vld [vmem:[#allocation6 + $0xbb0] sm:$0xff]
        %v1427 = vld [vmem:[#allocation6 + $0xbb8] sm:$0xff]
        %v1428 = vld [vmem:[#allocation6 + $0xbc0] sm:$0xff]
        %v1429 = vld [vmem:[#allocation6 + $0xbc8] sm:$0xff]
        %v1430 = vld [vmem:[#allocation6 + $0xbd0] sm:$0xff]
        %v1431 = vld [vmem:[#allocation6 + $0xbd8] sm:$0xff]
        %v1432 = vld [vmem:[#allocation6 + $0xbe0] sm:$0xff]
        %v1433 = vld [vmem:[#allocation6 + $0xbe8] sm:$0xff]
        %v1434 = vld [vmem:[#allocation6 + $0xbf0] sm:$0xff]
        %v1435 = vld [vmem:[#allocation6 + $0xbf8] sm:$0xff]
        %v1436 = vld [vmem:[#allocation6 + $0xc00] sm:$0xff]
        %v1437 = vld [vmem:[#allocation6 + $0xc08] sm:$0xff]
        %v1438 = vld [vmem:[#allocation6 + $0xc10] sm:$0xff]
        %v1439 = vld [vmem:[#allocation6 + $0xc18] sm:$0xff]
        %v1440 = vld [vmem:[#allocation6 + $0xc20] sm:$0xff]
        %v1441 = vld [vmem:[#allocation6 + $0xc28] sm:$0xff]
        %v1442 = vld [vmem:[#allocation6 + $0xc30] sm:$0xff]
        %v1443 = vld [vmem:[#allocation6 + $0xc38] sm:$0xff]
        %v1444 = vld [vmem:[#allocation6 + $0xc40] sm:$0xff]
        %v1445 = vld [vmem:[#allocation6 + $0xc48] sm:$0xff]
        %v1446 = vld [vmem:[#allocation6 + $0xc50] sm:$0xff]
        %v1447 = vld [vmem:[#allocation6 + $0xc58] sm:$0xff]
        %v1448 = vld [vmem:[#allocation6 + $0xc60] sm:$0xff]
        %v1449 = vld [vmem:[#allocation6 + $0xc68] sm:$0xff]
        %v1450 = vld [vmem:[#allocation6 + $0xc70] sm:$0xff]
        %v1451 = vld [vmem:[#allocation6 + $0xc78] sm:$0xff]
        %v1452 = vld [vmem:[#allocation6 + $0xc80] sm:$0xff]
        %v1453 = vld [vmem:[#allocation6 + $0xc88] sm:$0xff]
        %v1454 = vld [vmem:[#allocation6 + $0xc90] sm:$0xff]
        %v1455 = vld [vmem:[#allocation6 + $0xc98] sm:$0xff]
        %v1456 = vld [vmem:[#allocation6 + $0xca0] sm:$0xff]
        %v1457 = vld [vmem:[#allocation6 + $0xca8] sm:$0xff]
        %v1458 = vld [vmem:[#allocation6 + $0xcb0] sm:$0xff]
        %v1459 = vld [vmem:[#allocation6 + $0xcb8] sm:$0xff]
        %v1460 = vld [vmem:[#allocation6 + $0xcc0] sm:$0xff]
        %v1461 = vld [vmem:[#allocation6 + $0xcc8] sm:$0xff]
        %v1462 = vld [vmem:[#allocation6 + $0xcd0] sm:$0xff]
        %v1463 = vld [vmem:[#allocation6 + $0xcd8] sm:$0xff]
        %v1464 = vld [vmem:[#allocation6 + $0xce0] sm:$0xff]
        %v1465 = vld [vmem:[#allocation6 + $0xce8] sm:$0xff]
        %v1466 = vld [vmem:[#allocation6 + $0xcf0] sm:$0xff]
        %v1467 = vld [vmem:[#allocation6 + $0xcf8] sm:$0xff]
        %v1468 = vld [vmem:[#allocation6 + $0xd00] sm:$0xff]
        %v1469 = vld [vmem:[#allocation6 + $0xd08] sm:$0xff]
        %v1470 = vld [vmem:[#allocation6 + $0xd10] sm:$0xff]
        %v1471 = vld [vmem:[#allocation6 + $0xd18] sm:$0xff]
        %v1472 = vld [vmem:[#allocation6 + $0xd20] sm:$0xff]
        %v1473 = vld [vmem:[#allocation6 + $0xd28] sm:$0xff]
        %v1474 = vld [vmem:[#allocation6 + $0xd30] sm:$0xff]
        %v1475 = vld [vmem:[#allocation6 + $0xd38] sm:$0xff]
        %v1476 = vld [vmem:[#allocation6 + $0xd40] sm:$0xff]
        %v1477 = vld [vmem:[#allocation6 + $0xd48] sm:$0xff]
        %v1478 = vld [vmem:[#allocation6 + $0xd50] sm:$0xff]
        %v1479 = vld [vmem:[#allocation6 + $0xd58] sm:$0xff]
        %v1480 = vld [vmem:[#allocation6 + $0xd60] sm:$0xff]
        %v1481 = vld [vmem:[#allocation6 + $0xd68] sm:$0xff]
        %v1482 = vld [vmem:[#allocation6 + $0xd70] sm:$0xff]
        %v1483 = vld [vmem:[#allocation6 + $0xd78] sm:$0xff]
        %v1484 = vld [vmem:[#allocation6 + $0xd80] sm:$0xff]
        %v1485 = vld [vmem:[#allocation6 + $0xd88] sm:$0xff]
        %v1486 = vld [vmem:[#allocation6 + $0xd90] sm:$0xff]
        %v1487 = vld [vmem:[#allocation6 + $0xd98] sm:$0xff]
        %v1488 = vld [vmem:[#allocation6 + $0xda0] sm:$0xff]
        %v1489 = vld [vmem:[#allocation6 + $0xda8] sm:$0xff]
        %v1490 = vld [vmem:[#allocation6 + $0xdb0] sm:$0xff]
        %v1491 = vld [vmem:[#allocation6 + $0xdb8] sm:$0xff]
        %v1492 = vld [vmem:[#allocation6 + $0xdc0] sm:$0xff]
        %v1493 = vld [vmem:[#allocation6 + $0xdc8] sm:$0xff]
        %v1494 = vld [vmem:[#allocation6 + $0xdd0] sm:$0xff]
        %v1495 = vld [vmem:[#allocation6 + $0xdd8] sm:$0xff]
        %v1496 = vld [vmem:[#allocation6 + $0xde0] sm:$0xff]
        %v1497 = vld [vmem:[#allocation6 + $0xde8] sm:$0xff]
        %v1498 = vld [vmem:[#allocation6 + $0xdf0] sm:$0xff]
        %v1499 = vld [vmem:[#allocation6 + $0xdf8] sm:$0xff]
        %v1500 = vld [vmem:[#allocation6 + $0xe00] sm:$0xff]
        %v1501 = vld [vmem:[#allocation6 + $0xe08] sm:$0xff]
        %v1502 = vld [vmem:[#allocation6 + $0xe10] sm:$0xff]
        %v1503 = vld [vmem:[#allocation6 + $0xe18] sm:$0xff]
        %v1504 = vld [vmem:[#allocation6 + $0xe20] sm:$0xff]
        %v1505 = vld [vmem:[#allocation6 + $0xe28] sm:$0xff]
        %v1506 = vld [vmem:[#allocation6 + $0xe30] sm:$0xff]
        %v1507 = vld [vmem:[#allocation6 + $0xe38] sm:$0xff]
        %v1508 = vld [vmem:[#allocation6 + $0xe40] sm:$0xff]
        %v1509 = vld [vmem:[#allocation6 + $0xe48] sm:$0xff]
        %v1510 = vld [vmem:[#allocation6 + $0xe50] sm:$0xff]
        %v1511 = vld [vmem:[#allocation6 + $0xe58] sm:$0xff]
        %v1512 = vld [vmem:[#allocation6 + $0xe60] sm:$0xff]
        %v1513 = vld [vmem:[#allocation6 + $0xe68] sm:$0xff]
        %v1514 = vld [vmem:[#allocation6 + $0xe70] sm:$0xff]
        %v1515 = vld [vmem:[#allocation6 + $0xe78] sm:$0xff]
        %v1516 = vld [vmem:[#allocation6 + $0xe80] sm:$0xff]
        %v1517 = vld [vmem:[#allocation6 + $0xe88] sm:$0xff]
        %v1518 = vld [vmem:[#allocation6 + $0xe90] sm:$0xff]
        %v1519 = vld [vmem:[#allocation6 + $0xe98] sm:$0xff]
        %v1520 = vld [vmem:[#allocation6 + $0xea0] sm:$0xff]
        %v1521 = vld [vmem:[#allocation6 + $0xea8] sm:$0xff]
        %v1522 = vld [vmem:[#allocation6 + $0xeb0] sm:$0xff]
        %v1523 = vld [vmem:[#allocation6 + $0xeb8] sm:$0xff]
        %v1524 = vld [vmem:[#allocation6 + $0xec0] sm:$0xff]
        %v1525 = vld [vmem:[#allocation6 + $0xec8] sm:$0xff]
        %v1526 = vld [vmem:[#allocation6 + $0xed0] sm:$0xff]
        %v1527 = vld [vmem:[#allocation6 + $0xed8] sm:$0xff]
        %v1528 = vld [vmem:[#allocation6 + $0xee0] sm:$0xff]
        %v1529 = vld [vmem:[#allocation6 + $0xee8] sm:$0xff]
        %v1530 = vld [vmem:[#allocation6 + $0xef0] sm:$0xff]
        %v1531 = vld [vmem:[#allocation6 + $0xef8] sm:$0xff]
        %v1532 = vld [vmem:[#allocation6 + $0xf00] sm:$0xff]
        %v1533 = vld [vmem:[#allocation6 + $0xf08] sm:$0xff]
        %v1534 = vld [vmem:[#allocation6 + $0xf10] sm:$0xff]
        %v1535 = vld [vmem:[#allocation6 + $0xf18] sm:$0xff]
        %v1536 = vld [vmem:[#allocation6 + $0xf20] sm:$0xff]
        %v1537 = vld [vmem:[#allocation6 + $0xf28] sm:$0xff]
        %v1538 = vld [vmem:[#allocation6 + $0xf30] sm:$0xff]
        %v1539 = vld [vmem:[#allocation6 + $0xf38] sm:$0xff]
        %v1540 = vld [vmem:[#allocation6 + $0xf40] sm:$0xff]
        %v1541 = vld [vmem:[#allocation6 + $0xf48] sm:$0xff]
        %v1542 = vld [vmem:[#allocation6 + $0xf50] sm:$0xff]
        %v1543 = vld [vmem:[#allocation6 + $0xf58] sm:$0xff]
        %v1544 = vld [vmem:[#allocation6 + $0xf60] sm:$0xff]
        %v1545 = vld [vmem:[#allocation6 + $0xf68] sm:$0xff]
        %v1546 = vld [vmem:[#allocation6 + $0xf70] sm:$0xff]
        %v1547 = vld [vmem:[#allocation6 + $0xf78] sm:$0xff]
        %v1548 = vld [vmem:[#allocation6 + $0xf80] sm:$0xff]
        %v1549 = vld [vmem:[#allocation6 + $0xf88] sm:$0xff]
        %v1550 = vld [vmem:[#allocation6 + $0xf90] sm:$0xff]
        %v1551 = vld [vmem:[#allocation6 + $0xf98] sm:$0xff]
        %v1552 = vld [vmem:[#allocation6 + $0xfa0] sm:$0xff]
        %v1553 = vld [vmem:[#allocation6 + $0xfa8] sm:$0xff]
        %v1554 = vld [vmem:[#allocation6 + $0xfb0] sm:$0xff]
        %v1555 = vld [vmem:[#allocation6 + $0xfb8] sm:$0xff]
        %v1556 = vld [vmem:[#allocation6 + $0xfc0] sm:$0xff]
        %v1557 = vld [vmem:[#allocation6 + $0xfc8] sm:$0xff]
        %v1558 = vld [vmem:[#allocation6 + $0xfd0] sm:$0xff]
        %v1559 = vld [vmem:[#allocation6 + $0xfd8] sm:$0xff]
        %v1560 = vld [vmem:[#allocation6 + $0xfe0] sm:$0xff]
        %v1561 = vld [vmem:[#allocation6 + $0xfe8] sm:$0xff]
        %v1562 = vld [vmem:[#allocation6 + $0xff0] sm:$0xff]
        %v1563 = vld [vmem:[#allocation6 + $0xff8] sm:$0xff]
        %v1564 = vld [vmem:[#allocation7] sm:$0xff]
        %v1566 = vlaneseq
        %v1567 = vshrl.u32 %v1566, 7
        %v1568 = vsub.s32 0, %v1567
        %v1569 = vrot.slane %v1564, %v1568
        %v1570 = vlaneseq
        %v1571 = vshrl.u32 %v1570, 7
        %v1572 = vsub.s32 1, %v1571
        %v1573 = vrot.slane %v1564, %v1572
        %v1574 = vlaneseq
        %v1575 = vshrl.u32 %v1574, 7
        %v1576 = vsub.s32 2, %v1575
        %v1577 = vrot.slane %v1564, %v1576
        %v1578 = vlaneseq
        %v1579 = vshrl.u32 %v1578, 7
        %v1580 = vsub.s32 3, %v1579
        %v1581 = vrot.slane %v1564, %v1580
        %v1582 = vlaneseq
        %v1583 = vshrl.u32 %v1582, 7
        %v1584 = vsub.s32 4, %v1583
        %v1585 = vrot.slane %v1564, %v1584
        %v1586 = vlaneseq
        %v1587 = vshrl.u32 %v1586, 7
        %v1588 = vsub.s32 5, %v1587
        %v1589 = vrot.slane %v1564, %v1588
        %v1590 = vlaneseq
        %v1591 = vshrl.u32 %v1590, 7
        %v1592 = vsub.s32 6, %v1591
        %v1593 = vrot.slane %v1564, %v1592
        %v1594 = vlaneseq
        %v1595 = vshrl.u32 %v1594, 7
        %v1596 = vsub.s32 7, %v1595
        %v1597 = vrot.slane %v1564, %v1596
        %v2118 = vunpack.c.l.b16 %v1052
        %v2119 = vunpack.c.h.b16 %v1052
        %v2120 = vunpack.c.l.b16 %v1053
        %v2121 = vunpack.c.h.b16 %v1053
        %v2122 = vunpack.c.l.b16 %v1054
        %v2123 = vunpack.c.h.b16 %v1054
        %v2124 = vunpack.c.l.b16 %v1055
        %v2125 = vunpack.c.h.b16 %v1055
        %v2126 = vunpack.c.l.b16 %v1056
        %v2127 = vunpack.c.h.b16 %v1056
        %v2128 = vunpack.c.l.b16 %v1057
        %v2129 = vunpack.c.h.b16 %v1057
        %v2130 = vunpack.c.l.b16 %v1058
        %v2131 = vunpack.c.h.b16 %v1058
        %v2132 = vunpack.c.l.b16 %v1059
        %v2133 = vunpack.c.h.b16 %v1059
        %v2134 = vunpack.c.l.b16 %v1060
        %v2135 = vunpack.c.h.b16 %v1060
        %v2136 = vunpack.c.l.b16 %v1061
        %v2137 = vunpack.c.h.b16 %v1061
        %v2138 = vunpack.c.l.b16 %v1062
        %v2139 = vunpack.c.h.b16 %v1062
        %v2140 = vunpack.c.l.b16 %v1063
        %v2141 = vunpack.c.h.b16 %v1063
        %v2142 = vunpack.c.l.b16 %v1064
        %v2143 = vunpack.c.h.b16 %v1064
        %v2144 = vunpack.c.l.b16 %v1065
        %v2145 = vunpack.c.h.b16 %v1065
        %v2146 = vunpack.c.l.b16 %v1066
        %v2147 = vunpack.c.h.b16 %v1066
        %v2148 = vunpack.c.l.b16 %v1067
        %v2149 = vunpack.c.h.b16 %v1067
        %v2150 = vunpack.c.l.b16 %v1068
        %v2151 = vunpack.c.h.b16 %v1068
        %v2152 = vunpack.c.l.b16 %v1069
        %v2153 = vunpack.c.h.b16 %v1069
        %v2154 = vunpack.c.l.b16 %v1070
        %v2155 = vunpack.c.h.b16 %v1070
        %v2156 = vunpack.c.l.b16 %v1071
        %v2157 = vunpack.c.h.b16 %v1071
        %v2158 = vunpack.c.l.b16 %v1072
        %v2159 = vunpack.c.h.b16 %v1072
        %v2160 = vunpack.c.l.b16 %v1073
        %v2161 = vunpack.c.h.b16 %v1073
        %v2162 = vunpack.c.l.b16 %v1074
        %v2163 = vunpack.c.h.b16 %v1074
        %v2164 = vunpack.c.l.b16 %v1075
        %v2165 = vunpack.c.h.b16 %v1075
        %v2166 = vunpack.c.l.b16 %v1076
        %v2167 = vunpack.c.h.b16 %v1076
        %v2168 = vunpack.c.l.b16 %v1077
        %v2169 = vunpack.c.h.b16 %v1077
        %v2170 = vunpack.c.l.b16 %v1078
        %v2171 = vunpack.c.h.b16 %v1078
        %v2172 = vunpack.c.l.b16 %v1079
        %v2173 = vunpack.c.h.b16 %v1079
        %v2174 = vunpack.c.l.b16 %v1080
        %v2175 = vunpack.c.h.b16 %v1080
        %v2176 = vunpack.c.l.b16 %v1081
        %v2177 = vunpack.c.h.b16 %v1081
        %v2178 = vunpack.c.l.b16 %v1082
        %v2179 = vunpack.c.h.b16 %v1082
        %v2180 = vunpack.c.l.b16 %v1083
        %v2181 = vunpack.c.h.b16 %v1083
        %v2182 = vunpack.c.l.b16 %v1084
        %v2183 = vunpack.c.h.b16 %v1084
        %v2184 = vunpack.c.l.b16 %v1085
        %v2185 = vunpack.c.h.b16 %v1085
        %v2186 = vunpack.c.l.b16 %v1086
        %v2187 = vunpack.c.h.b16 %v1086
        %v2188 = vunpack.c.l.b16 %v1087
        %v2189 = vunpack.c.h.b16 %v1087
        %v2190 = vunpack.c.l.b16 %v1088
        %v2191 = vunpack.c.h.b16 %v1088
        %v2192 = vunpack.c.l.b16 %v1089
        %v2193 = vunpack.c.h.b16 %v1089
        %v2194 = vunpack.c.l.b16 %v1090
        %v2195 = vunpack.c.h.b16 %v1090
        %v2196 = vunpack.c.l.b16 %v1091
        %v2197 = vunpack.c.h.b16 %v1091
        %v2198 = vunpack.c.l.b16 %v1092
        %v2199 = vunpack.c.h.b16 %v1092
        %v2200 = vunpack.c.l.b16 %v1093
        %v2201 = vunpack.c.h.b16 %v1093
        %v2202 = vunpack.c.l.b16 %v1094
        %v2203 = vunpack.c.h.b16 %v1094
        %v2204 = vunpack.c.l.b16 %v1095
        %v2205 = vunpack.c.h.b16 %v1095
        %v2206 = vunpack.c.l.b16 %v1096
        %v2207 = vunpack.c.h.b16 %v1096
        %v2208 = vunpack.c.l.b16 %v1097
        %v2209 = vunpack.c.h.b16 %v1097
        %v2210 = vunpack.c.l.b16 %v1098
        %v2211 = vunpack.c.h.b16 %v1098
        %v2212 = vunpack.c.l.b16 %v1099
        %v2213 = vunpack.c.h.b16 %v1099
        %v2214 = vunpack.c.l.b16 %v1100
        %v2215 = vunpack.c.h.b16 %v1100
        %v2216 = vunpack.c.l.b16 %v1101
        %v2217 = vunpack.c.h.b16 %v1101
        %v2218 = vunpack.c.l.b16 %v1102
        %v2219 = vunpack.c.h.b16 %v1102
        %v2220 = vunpack.c.l.b16 %v1103
        %v2221 = vunpack.c.h.b16 %v1103
        %v2222 = vunpack.c.l.b16 %v1104
        %v2223 = vunpack.c.h.b16 %v1104
        %v2224 = vunpack.c.l.b16 %v1105
        %v2225 = vunpack.c.h.b16 %v1105
        %v2226 = vunpack.c.l.b16 %v1106
        %v2227 = vunpack.c.h.b16 %v1106
        %v2228 = vunpack.c.l.b16 %v1107
        %v2229 = vunpack.c.h.b16 %v1107
        %v2230 = vunpack.c.l.b16 %v1108
        %v2231 = vunpack.c.h.b16 %v1108
        %v2232 = vunpack.c.l.b16 %v1109
        %v2233 = vunpack.c.h.b16 %v1109
        %v2234 = vunpack.c.l.b16 %v1110
        %v2235 = vunpack.c.h.b16 %v1110
        %v2236 = vunpack.c.l.b16 %v1111
        %v2237 = vunpack.c.h.b16 %v1111
        %v2238 = vunpack.c.l.b16 %v1112
        %v2239 = vunpack.c.h.b16 %v1112
        %v2240 = vunpack.c.l.b16 %v1113
        %v2241 = vunpack.c.h.b16 %v1113
        %v2242 = vunpack.c.l.b16 %v1114
        %v2243 = vunpack.c.h.b16 %v1114
        %v2244 = vunpack.c.l.b16 %v1115
        %v2245 = vunpack.c.h.b16 %v1115
        %v2246 = vunpack.c.l.b16 %v1116
        %v2247 = vunpack.c.h.b16 %v1116
        %v2248 = vunpack.c.l.b16 %v1117
        %v2249 = vunpack.c.h.b16 %v1117
        %v2250 = vunpack.c.l.b16 %v1118
        %v2251 = vunpack.c.h.b16 %v1118
        %v2252 = vunpack.c.l.b16 %v1119
        %v2253 = vunpack.c.h.b16 %v1119
        %v2254 = vunpack.c.l.b16 %v1120
        %v2255 = vunpack.c.h.b16 %v1120
        %v2256 = vunpack.c.l.b16 %v1121
        %v2257 = vunpack.c.h.b16 %v1121
        %v2258 = vunpack.c.l.b16 %v1122
        %v2259 = vunpack.c.h.b16 %v1122
        %v2260 = vunpack.c.l.b16 %v1123
        %v2261 = vunpack.c.h.b16 %v1123
        %v2262 = vunpack.c.l.b16 %v1124
        %v2263 = vunpack.c.h.b16 %v1124
        %v2264 = vunpack.c.l.b16 %v1125
        %v2265 = vunpack.c.h.b16 %v1125
        %v2266 = vunpack.c.l.b16 %v1126
        %v2267 = vunpack.c.h.b16 %v1126
        %v2268 = vunpack.c.l.b16 %v1127
        %v2269 = vunpack.c.h.b16 %v1127
        %v2270 = vunpack.c.l.b16 %v1128
        %v2271 = vunpack.c.h.b16 %v1128
        %v2272 = vunpack.c.l.b16 %v1129
        %v2273 = vunpack.c.h.b16 %v1129
        %v2274 = vunpack.c.l.b16 %v1130
        %v2275 = vunpack.c.h.b16 %v1130
        %v2276 = vunpack.c.l.b16 %v1131
        %v2277 = vunpack.c.h.b16 %v1131
        %v2278 = vunpack.c.l.b16 %v1132
        %v2279 = vunpack.c.h.b16 %v1132
        %v2280 = vunpack.c.l.b16 %v1133
        %v2281 = vunpack.c.h.b16 %v1133
        %v2282 = vunpack.c.l.b16 %v1134
        %v2283 = vunpack.c.h.b16 %v1134
        %v2284 = vunpack.c.l.b16 %v1135
        %v2285 = vunpack.c.h.b16 %v1135
        %v2286 = vunpack.c.l.b16 %v1136
        %v2287 = vunpack.c.h.b16 %v1136
        %v2288 = vunpack.c.l.b16 %v1137
        %v2289 = vunpack.c.h.b16 %v1137
        %v2290 = vunpack.c.l.b16 %v1138
        %v2291 = vunpack.c.h.b16 %v1138
        %v2292 = vunpack.c.l.b16 %v1139
        %v2293 = vunpack.c.h.b16 %v1139
        %v2294 = vunpack.c.l.b16 %v1140
        %v2295 = vunpack.c.h.b16 %v1140
        %v2296 = vunpack.c.l.b16 %v1141
        %v2297 = vunpack.c.h.b16 %v1141
        %v2298 = vunpack.c.l.b16 %v1142
        %v2299 = vunpack.c.h.b16 %v1142
        %v2300 = vunpack.c.l.b16 %v1143
        %v2301 = vunpack.c.h.b16 %v1143
        %v2302 = vunpack.c.l.b16 %v1144
        %v2303 = vunpack.c.h.b16 %v1144
        %v2304 = vunpack.c.l.b16 %v1145
        %v2305 = vunpack.c.h.b16 %v1145
        %v2306 = vunpack.c.l.b16 %v1146
        %v2307 = vunpack.c.h.b16 %v1146
        %v2308 = vunpack.c.l.b16 %v1147
        %v2309 = vunpack.c.h.b16 %v1147
        %v2310 = vunpack.c.l.b16 %v1148
        %v2311 = vunpack.c.h.b16 %v1148
        %v2312 = vunpack.c.l.b16 %v1149
        %v2313 = vunpack.c.h.b16 %v1149
        %v2314 = vunpack.c.l.b16 %v1150
        %v2315 = vunpack.c.h.b16 %v1150
        %v2316 = vunpack.c.l.b16 %v1151
        %v2317 = vunpack.c.h.b16 %v1151
        %v2318 = vunpack.c.l.b16 %v1152
        %v2319 = vunpack.c.h.b16 %v1152
        %v2320 = vunpack.c.l.b16 %v1153
        %v2321 = vunpack.c.h.b16 %v1153
        %v2322 = vunpack.c.l.b16 %v1154
        %v2323 = vunpack.c.h.b16 %v1154
        %v2324 = vunpack.c.l.b16 %v1155
        %v2325 = vunpack.c.h.b16 %v1155
        %v2326 = vunpack.c.l.b16 %v1156
        %v2327 = vunpack.c.h.b16 %v1156
        %v2328 = vunpack.c.l.b16 %v1157
        %v2329 = vunpack.c.h.b16 %v1157
        %v2330 = vunpack.c.l.b16 %v1158
        %v2331 = vunpack.c.h.b16 %v1158
        %v2332 = vunpack.c.l.b16 %v1159
        %v2333 = vunpack.c.h.b16 %v1159
        %v2334 = vunpack.c.l.b16 %v1160
        %v2335 = vunpack.c.h.b16 %v1160
        %v2336 = vunpack.c.l.b16 %v1161
        %v2337 = vunpack.c.h.b16 %v1161
        %v2338 = vunpack.c.l.b16 %v1162
        %v2339 = vunpack.c.h.b16 %v1162
        %v2340 = vunpack.c.l.b16 %v1163
        %v2341 = vunpack.c.h.b16 %v1163
        %v2342 = vunpack.c.l.b16 %v1164
        %v2343 = vunpack.c.h.b16 %v1164
        %v2344 = vunpack.c.l.b16 %v1165
        %v2345 = vunpack.c.h.b16 %v1165
        %v2346 = vunpack.c.l.b16 %v1166
        %v2347 = vunpack.c.h.b16 %v1166
        %v2348 = vunpack.c.l.b16 %v1167
        %v2349 = vunpack.c.h.b16 %v1167
        %v2350 = vunpack.c.l.b16 %v1168
        %v2351 = vunpack.c.h.b16 %v1168
        %v2352 = vunpack.c.l.b16 %v1169
        %v2353 = vunpack.c.h.b16 %v1169
        %v2354 = vunpack.c.l.b16 %v1170
        %v2355 = vunpack.c.h.b16 %v1170
        %v2356 = vunpack.c.l.b16 %v1171
        %v2357 = vunpack.c.h.b16 %v1171
        %v2358 = vunpack.c.l.b16 %v1172
        %v2359 = vunpack.c.h.b16 %v1172
        %v2360 = vunpack.c.l.b16 %v1173
        %v2361 = vunpack.c.h.b16 %v1173
        %v2362 = vunpack.c.l.b16 %v1174
        %v2363 = vunpack.c.h.b16 %v1174
        %v2364 = vunpack.c.l.b16 %v1175
        %v2365 = vunpack.c.h.b16 %v1175
        %v2366 = vunpack.c.l.b16 %v1176
        %v2367 = vunpack.c.h.b16 %v1176
        %v2368 = vunpack.c.l.b16 %v1177
        %v2369 = vunpack.c.h.b16 %v1177
        %v2370 = vunpack.c.l.b16 %v1178
        %v2371 = vunpack.c.h.b16 %v1178
        %v2372 = vunpack.c.l.b16 %v1179
        %v2373 = vunpack.c.h.b16 %v1179
        %v2374 = vunpack.c.l.b16 %v1180
        %v2375 = vunpack.c.h.b16 %v1180
        %v2376 = vunpack.c.l.b16 %v1181
        %v2377 = vunpack.c.h.b16 %v1181
        %v2378 = vunpack.c.l.b16 %v1182
        %v2379 = vunpack.c.h.b16 %v1182
        %v2380 = vunpack.c.l.b16 %v1183
        %v2381 = vunpack.c.h.b16 %v1183
        %v2382 = vunpack.c.l.b16 %v1184
        %v2383 = vunpack.c.h.b16 %v1184
        %v2384 = vunpack.c.l.b16 %v1185
        %v2385 = vunpack.c.h.b16 %v1185
        %v2386 = vunpack.c.l.b16 %v1186
        %v2387 = vunpack.c.h.b16 %v1186
        %v2388 = vunpack.c.l.b16 %v1187
        %v2389 = vunpack.c.h.b16 %v1187
        %v2390 = vunpack.c.l.b16 %v1188
        %v2391 = vunpack.c.h.b16 %v1188
        %v2392 = vunpack.c.l.b16 %v1189
        %v2393 = vunpack.c.h.b16 %v1189
        %v2394 = vunpack.c.l.b16 %v1190
        %v2395 = vunpack.c.h.b16 %v1190
        %v2396 = vunpack.c.l.b16 %v1191
        %v2397 = vunpack.c.h.b16 %v1191
        %v2398 = vunpack.c.l.b16 %v1192
        %v2399 = vunpack.c.h.b16 %v1192
        %v2400 = vunpack.c.l.b16 %v1193
        %v2401 = vunpack.c.h.b16 %v1193
        %v2402 = vunpack.c.l.b16 %v1194
        %v2403 = vunpack.c.h.b16 %v1194
        %v2404 = vunpack.c.l.b16 %v1195
        %v2405 = vunpack.c.h.b16 %v1195
        %v2406 = vunpack.c.l.b16 %v1196
        %v2407 = vunpack.c.h.b16 %v1196
        %v2408 = vunpack.c.l.b16 %v1197
        %v2409 = vunpack.c.h.b16 %v1197
        %v2410 = vunpack.c.l.b16 %v1198
        %v2411 = vunpack.c.h.b16 %v1198
        %v2412 = vunpack.c.l.b16 %v1199
        %v2413 = vunpack.c.h.b16 %v1199
        %v2414 = vunpack.c.l.b16 %v1200
        %v2415 = vunpack.c.h.b16 %v1200
        %v2416 = vunpack.c.l.b16 %v1201
        %v2417 = vunpack.c.h.b16 %v1201
        %v2418 = vunpack.c.l.b16 %v1202
        %v2419 = vunpack.c.h.b16 %v1202
        %v2420 = vunpack.c.l.b16 %v1203
        %v2421 = vunpack.c.h.b16 %v1203
        %v2422 = vunpack.c.l.b16 %v1204
        %v2423 = vunpack.c.h.b16 %v1204
        %v2424 = vunpack.c.l.b16 %v1205
        %v2425 = vunpack.c.h.b16 %v1205
        %v2426 = vunpack.c.l.b16 %v1206
        %v2427 = vunpack.c.h.b16 %v1206
        %v2428 = vunpack.c.l.b16 %v1207
        %v2429 = vunpack.c.h.b16 %v1207
        %v2430 = vunpack.c.l.b16 %v1208
        %v2431 = vunpack.c.h.b16 %v1208
        %v2432 = vunpack.c.l.b16 %v1209
        %v2433 = vunpack.c.h.b16 %v1209
        %v2434 = vunpack.c.l.b16 %v1210
        %v2435 = vunpack.c.h.b16 %v1210
        %v2436 = vunpack.c.l.b16 %v1211
        %v2437 = vunpack.c.h.b16 %v1211
        %v2438 = vunpack.c.l.b16 %v1212
        %v2439 = vunpack.c.h.b16 %v1212
        %v2440 = vunpack.c.l.b16 %v1213
        %v2441 = vunpack.c.h.b16 %v1213
        %v2442 = vunpack.c.l.b16 %v1214
        %v2443 = vunpack.c.h.b16 %v1214
        %v2444 = vunpack.c.l.b16 %v1215
        %v2445 = vunpack.c.h.b16 %v1215
        %v2446 = vunpack.c.l.b16 %v1216
        %v2447 = vunpack.c.h.b16 %v1216
        %v2448 = vunpack.c.l.b16 %v1217
        %v2449 = vunpack.c.h.b16 %v1217
        %v2450 = vunpack.c.l.b16 %v1218
        %v2451 = vunpack.c.h.b16 %v1218
        %v2452 = vunpack.c.l.b16 %v1219
        %v2453 = vunpack.c.h.b16 %v1219
        %v2454 = vunpack.c.l.b16 %v1220
        %v2455 = vunpack.c.h.b16 %v1220
        %v2456 = vunpack.c.l.b16 %v1221
        %v2457 = vunpack.c.h.b16 %v1221
        %v2458 = vunpack.c.l.b16 %v1222
        %v2459 = vunpack.c.h.b16 %v1222
        %v2460 = vunpack.c.l.b16 %v1223
        %v2461 = vunpack.c.h.b16 %v1223
        %v2462 = vunpack.c.l.b16 %v1224
        %v2463 = vunpack.c.h.b16 %v1224
        %v2464 = vunpack.c.l.b16 %v1225
        %v2465 = vunpack.c.h.b16 %v1225
        %v2466 = vunpack.c.l.b16 %v1226
        %v2467 = vunpack.c.h.b16 %v1226
        %v2468 = vunpack.c.l.b16 %v1227
        %v2469 = vunpack.c.h.b16 %v1227
        %v2470 = vunpack.c.l.b16 %v1228
        %v2471 = vunpack.c.h.b16 %v1228
        %v2472 = vunpack.c.l.b16 %v1229
        %v2473 = vunpack.c.h.b16 %v1229
        %v2474 = vunpack.c.l.b16 %v1230
        %v2475 = vunpack.c.h.b16 %v1230
        %v2476 = vunpack.c.l.b16 %v1231
        %v2477 = vunpack.c.h.b16 %v1231
        %v2478 = vunpack.c.l.b16 %v1232
        %v2479 = vunpack.c.h.b16 %v1232
        %v2480 = vunpack.c.l.b16 %v1233
        %v2481 = vunpack.c.h.b16 %v1233
        %v2482 = vunpack.c.l.b16 %v1234
        %v2483 = vunpack.c.h.b16 %v1234
        %v2484 = vunpack.c.l.b16 %v1235
        %v2485 = vunpack.c.h.b16 %v1235
        %v2486 = vunpack.c.l.b16 %v1236
        %v2487 = vunpack.c.h.b16 %v1236
        %v2488 = vunpack.c.l.b16 %v1237
        %v2489 = vunpack.c.h.b16 %v1237
        %v2490 = vunpack.c.l.b16 %v1238
        %v2491 = vunpack.c.h.b16 %v1238
        %v2492 = vunpack.c.l.b16 %v1239
        %v2493 = vunpack.c.h.b16 %v1239
        %v2494 = vunpack.c.l.b16 %v1240
        %v2495 = vunpack.c.h.b16 %v1240
        %v2496 = vunpack.c.l.b16 %v1241
        %v2497 = vunpack.c.h.b16 %v1241
        %v2498 = vunpack.c.l.b16 %v1242
        %v2499 = vunpack.c.h.b16 %v1242
        %v2500 = vunpack.c.l.b16 %v1243
        %v2501 = vunpack.c.h.b16 %v1243
        %v2502 = vunpack.c.l.b16 %v1244
        %v2503 = vunpack.c.h.b16 %v1244
        %v2504 = vunpack.c.l.b16 %v1245
        %v2505 = vunpack.c.h.b16 %v1245
        %v2506 = vunpack.c.l.b16 %v1246
        %v2507 = vunpack.c.h.b16 %v1246
        %v2508 = vunpack.c.l.b16 %v1247
        %v2509 = vunpack.c.h.b16 %v1247
        %v2510 = vunpack.c.l.b16 %v1248
        %v2511 = vunpack.c.h.b16 %v1248
        %v2512 = vunpack.c.l.b16 %v1249
        %v2513 = vunpack.c.h.b16 %v1249
        %v2514 = vunpack.c.l.b16 %v1250
        %v2515 = vunpack.c.h.b16 %v1250
        %v2516 = vunpack.c.l.b16 %v1251
        %v2517 = vunpack.c.h.b16 %v1251
        %v2518 = vunpack.c.l.b16 %v1252
        %v2519 = vunpack.c.h.b16 %v1252
        %v2520 = vunpack.c.l.b16 %v1253
        %v2521 = vunpack.c.h.b16 %v1253
        %v2522 = vunpack.c.l.b16 %v1254
        %v2523 = vunpack.c.h.b16 %v1254
        %v2524 = vunpack.c.l.b16 %v1255
        %v2525 = vunpack.c.h.b16 %v1255
        %v2526 = vunpack.c.l.b16 %v1256
        %v2527 = vunpack.c.h.b16 %v1256
        %v2528 = vunpack.c.l.b16 %v1257
        %v2529 = vunpack.c.h.b16 %v1257
        %v2530 = vunpack.c.l.b16 %v1258
        %v2531 = vunpack.c.h.b16 %v1258
        %v2532 = vunpack.c.l.b16 %v1259
        %v2533 = vunpack.c.h.b16 %v1259
        %v2534 = vunpack.c.l.b16 %v1260
        %v2535 = vunpack.c.h.b16 %v1260
        %v2536 = vunpack.c.l.b16 %v1261
        %v2537 = vunpack.c.h.b16 %v1261
        %v2538 = vunpack.c.l.b16 %v1262
        %v2539 = vunpack.c.h.b16 %v1262
        %v2540 = vunpack.c.l.b16 %v1263
        %v2541 = vunpack.c.h.b16 %v1263
        %v2542 = vunpack.c.l.b16 %v1264
        %v2543 = vunpack.c.h.b16 %v1264
        %v2544 = vunpack.c.l.b16 %v1265
        %v2545 = vunpack.c.h.b16 %v1265
        %v2546 = vunpack.c.l.b16 %v1266
        %v2547 = vunpack.c.h.b16 %v1266
        %v2548 = vunpack.c.l.b16 %v1267
        %v2549 = vunpack.c.h.b16 %v1267
        %v2550 = vunpack.c.l.b16 %v1268
        %v2551 = vunpack.c.h.b16 %v1268
        %v2552 = vunpack.c.l.b16 %v1269
        %v2553 = vunpack.c.h.b16 %v1269
        %v2554 = vunpack.c.l.b16 %v1270
        %v2555 = vunpack.c.h.b16 %v1270
        %v2556 = vunpack.c.l.b16 %v1271
        %v2557 = vunpack.c.h.b16 %v1271
        %v2558 = vunpack.c.l.b16 %v1272
        %v2559 = vunpack.c.h.b16 %v1272
        %v2560 = vunpack.c.l.b16 %v1273
        %v2561 = vunpack.c.h.b16 %v1273
        %v2562 = vunpack.c.l.b16 %v1274
        %v2563 = vunpack.c.h.b16 %v1274
        %v2564 = vunpack.c.l.b16 %v1275
        %v2565 = vunpack.c.h.b16 %v1275
        %v2566 = vunpack.c.l.b16 %v1276
        %v2567 = vunpack.c.h.b16 %v1276
        %v2568 = vunpack.c.l.b16 %v1277
        %v2569 = vunpack.c.h.b16 %v1277
        %v2570 = vunpack.c.l.b16 %v1278
        %v2571 = vunpack.c.h.b16 %v1278
        %v2572 = vunpack.c.l.b16 %v1279
        %v2573 = vunpack.c.h.b16 %v1279
        %v2574 = vunpack.c.l.b16 %v1280
        %v2575 = vunpack.c.h.b16 %v1280
        %v2576 = vunpack.c.l.b16 %v1281
        %v2577 = vunpack.c.h.b16 %v1281
        %v2578 = vunpack.c.l.b16 %v1282
        %v2579 = vunpack.c.h.b16 %v1282
        %v2580 = vunpack.c.l.b16 %v1283
        %v2581 = vunpack.c.h.b16 %v1283
        %v2582 = vunpack.c.l.b16 %v1284
        %v2583 = vunpack.c.h.b16 %v1284
        %v2584 = vunpack.c.l.b16 %v1285
        %v2585 = vunpack.c.h.b16 %v1285
        %v2586 = vunpack.c.l.b16 %v1286
        %v2587 = vunpack.c.h.b16 %v1286
        %v2588 = vunpack.c.l.b16 %v1287
        %v2589 = vunpack.c.h.b16 %v1287
        %v2590 = vunpack.c.l.b16 %v1288
        %v2591 = vunpack.c.h.b16 %v1288
        %v2592 = vunpack.c.l.b16 %v1289
        %v2593 = vunpack.c.h.b16 %v1289
        %v2594 = vunpack.c.l.b16 %v1290
        %v2595 = vunpack.c.h.b16 %v1290
        %v2596 = vunpack.c.l.b16 %v1291
        %v2597 = vunpack.c.h.b16 %v1291
        %v2598 = vunpack.c.l.b16 %v1292
        %v2599 = vunpack.c.h.b16 %v1292
        %v2600 = vunpack.c.l.b16 %v1293
        %v2601 = vunpack.c.h.b16 %v1293
        %v2602 = vunpack.c.l.b16 %v1294
        %v2603 = vunpack.c.h.b16 %v1294
        %v2604 = vunpack.c.l.b16 %v1295
        %v2605 = vunpack.c.h.b16 %v1295
        %v2606 = vunpack.c.l.b16 %v1296
        %v2607 = vunpack.c.h.b16 %v1296
        %v2608 = vunpack.c.l.b16 %v1297
        %v2609 = vunpack.c.h.b16 %v1297
        %v2610 = vunpack.c.l.b16 %v1298
        %v2611 = vunpack.c.h.b16 %v1298
        %v2612 = vunpack.c.l.b16 %v1299
        %v2613 = vunpack.c.h.b16 %v1299
        %v2614 = vunpack.c.l.b16 %v1300
        %v2615 = vunpack.c.h.b16 %v1300
        %v2616 = vunpack.c.l.b16 %v1301
        %v2617 = vunpack.c.h.b16 %v1301
        %v2618 = vunpack.c.l.b16 %v1302
        %v2619 = vunpack.c.h.b16 %v1302
        %v2620 = vunpack.c.l.b16 %v1303
        %v2621 = vunpack.c.h.b16 %v1303
        %v2622 = vunpack.c.l.b16 %v1304
        %v2623 = vunpack.c.h.b16 %v1304
        %v2624 = vunpack.c.l.b16 %v1305
        %v2625 = vunpack.c.h.b16 %v1305
        %v2626 = vunpack.c.l.b16 %v1306
        %v2627 = vunpack.c.h.b16 %v1306
        %v2628 = vunpack.c.l.b16 %v1307
        %v2629 = vunpack.c.h.b16 %v1307
        %v2630 = vunpack.c.l.b16 %v1308
        %v2631 = vunpack.c.h.b16 %v1308
        %v2632 = vunpack.c.l.b16 %v1309
        %v2633 = vunpack.c.h.b16 %v1309
        %v2634 = vunpack.c.l.b16 %v1310
        %v2635 = vunpack.c.h.b16 %v1310
        %v2636 = vunpack.c.l.b16 %v1311
        %v2637 = vunpack.c.h.b16 %v1311
        %v2638 = vunpack.c.l.b16 %v1312
        %v2639 = vunpack.c.h.b16 %v1312
        %v2640 = vunpack.c.l.b16 %v1313
        %v2641 = vunpack.c.h.b16 %v1313
        %v2642 = vunpack.c.l.b16 %v1314
        %v2643 = vunpack.c.h.b16 %v1314
        %v2644 = vunpack.c.l.b16 %v1315
        %v2645 = vunpack.c.h.b16 %v1315
        %v2646 = vunpack.c.l.b16 %v1316
        %v2647 = vunpack.c.h.b16 %v1316
        %v2648 = vunpack.c.l.b16 %v1317
        %v2649 = vunpack.c.h.b16 %v1317
        %v2650 = vunpack.c.l.b16 %v1318
        %v2651 = vunpack.c.h.b16 %v1318
        %v2652 = vunpack.c.l.b16 %v1319
        %v2653 = vunpack.c.h.b16 %v1319
        %v2654 = vunpack.c.l.b16 %v1320
        %v2655 = vunpack.c.h.b16 %v1320
        %v2656 = vunpack.c.l.b16 %v1321
        %v2657 = vunpack.c.h.b16 %v1321
        %v2658 = vunpack.c.l.b16 %v1322
        %v2659 = vunpack.c.h.b16 %v1322
        %v2660 = vunpack.c.l.b16 %v1323
        %v2661 = vunpack.c.h.b16 %v1323
        %v2662 = vunpack.c.l.b16 %v1324
        %v2663 = vunpack.c.h.b16 %v1324
        %v2664 = vunpack.c.l.b16 %v1325
        %v2665 = vunpack.c.h.b16 %v1325
        %v2666 = vunpack.c.l.b16 %v1326
        %v2667 = vunpack.c.h.b16 %v1326
        %v2668 = vunpack.c.l.b16 %v1327
        %v2669 = vunpack.c.h.b16 %v1327
        %v2670 = vunpack.c.l.b16 %v1328
        %v2671 = vunpack.c.h.b16 %v1328
        %v2672 = vunpack.c.l.b16 %v1329
        %v2673 = vunpack.c.h.b16 %v1329
        %v2674 = vunpack.c.l.b16 %v1330
        %v2675 = vunpack.c.h.b16 %v1330
        %v2676 = vunpack.c.l.b16 %v1331
        %v2677 = vunpack.c.h.b16 %v1331
        %v2678 = vunpack.c.l.b16 %v1332
        %v2679 = vunpack.c.h.b16 %v1332
        %v2680 = vunpack.c.l.b16 %v1333
        %v2681 = vunpack.c.h.b16 %v1333
        %v2682 = vunpack.c.l.b16 %v1334
        %v2683 = vunpack.c.h.b16 %v1334
        %v2684 = vunpack.c.l.b16 %v1335
        %v2685 = vunpack.c.h.b16 %v1335
        %v2686 = vunpack.c.l.b16 %v1336
        %v2687 = vunpack.c.h.b16 %v1336
        %v2688 = vunpack.c.l.b16 %v1337
        %v2689 = vunpack.c.h.b16 %v1337
        %v2690 = vunpack.c.l.b16 %v1338
        %v2691 = vunpack.c.h.b16 %v1338
        %v2692 = vunpack.c.l.b16 %v1339
        %v2693 = vunpack.c.h.b16 %v1339
        %v2694 = vunpack.c.l.b16 %v1340
        %v2695 = vunpack.c.h.b16 %v1340
        %v2696 = vunpack.c.l.b16 %v1341
        %v2697 = vunpack.c.h.b16 %v1341
        %v2698 = vunpack.c.l.b16 %v1342
        %v2699 = vunpack.c.h.b16 %v1342
        %v2700 = vunpack.c.l.b16 %v1343
        %v2701 = vunpack.c.h.b16 %v1343
        %v2702 = vunpack.c.l.b16 %v1344
        %v2703 = vunpack.c.h.b16 %v1344
        %v2704 = vunpack.c.l.b16 %v1345
        %v2705 = vunpack.c.h.b16 %v1345
        %v2706 = vunpack.c.l.b16 %v1346
        %v2707 = vunpack.c.h.b16 %v1346
        %v2708 = vunpack.c.l.b16 %v1347
        %v2709 = vunpack.c.h.b16 %v1347
        %v2710 = vunpack.c.l.b16 %v1348
        %v2711 = vunpack.c.h.b16 %v1348
        %v2712 = vunpack.c.l.b16 %v1349
        %v2713 = vunpack.c.h.b16 %v1349
        %v2714 = vunpack.c.l.b16 %v1350
        %v2715 = vunpack.c.h.b16 %v1350
        %v2716 = vunpack.c.l.b16 %v1351
        %v2717 = vunpack.c.h.b16 %v1351
        %v2718 = vunpack.c.l.b16 %v1352
        %v2719 = vunpack.c.h.b16 %v1352
        %v2720 = vunpack.c.l.b16 %v1353
        %v2721 = vunpack.c.h.b16 %v1353
        %v2722 = vunpack.c.l.b16 %v1354
        %v2723 = vunpack.c.h.b16 %v1354
        %v2724 = vunpack.c.l.b16 %v1355
        %v2725 = vunpack.c.h.b16 %v1355
        %v2726 = vunpack.c.l.b16 %v1356
        %v2727 = vunpack.c.h.b16 %v1356
        %v2728 = vunpack.c.l.b16 %v1357
        %v2729 = vunpack.c.h.b16 %v1357
        %v2730 = vunpack.c.l.b16 %v1358
        %v2731 = vunpack.c.h.b16 %v1358
        %v2732 = vunpack.c.l.b16 %v1359
        %v2733 = vunpack.c.h.b16 %v1359
        %v2734 = vunpack.c.l.b16 %v1360
        %v2735 = vunpack.c.h.b16 %v1360
        %v2736 = vunpack.c.l.b16 %v1361
        %v2737 = vunpack.c.h.b16 %v1361
        %v2738 = vunpack.c.l.b16 %v1362
        %v2739 = vunpack.c.h.b16 %v1362
        %v2740 = vunpack.c.l.b16 %v1363
        %v2741 = vunpack.c.h.b16 %v1363
        %v2742 = vunpack.c.l.b16 %v1364
        %v2743 = vunpack.c.h.b16 %v1364
        %v2744 = vunpack.c.l.b16 %v1365
        %v2745 = vunpack.c.h.b16 %v1365
        %v2746 = vunpack.c.l.b16 %v1366
        %v2747 = vunpack.c.h.b16 %v1366
        %v2748 = vunpack.c.l.b16 %v1367
        %v2749 = vunpack.c.h.b16 %v1367
        %v2750 = vunpack.c.l.b16 %v1368
        %v2751 = vunpack.c.h.b16 %v1368
        %v2752 = vunpack.c.l.b16 %v1369
        %v2753 = vunpack.c.h.b16 %v1369
        %v2754 = vunpack.c.l.b16 %v1370
        %v2755 = vunpack.c.h.b16 %v1370
        %v2756 = vunpack.c.l.b16 %v1371
        %v2757 = vunpack.c.h.b16 %v1371
        %v2758 = vunpack.c.l.b16 %v1372
        %v2759 = vunpack.c.h.b16 %v1372
        %v2760 = vunpack.c.l.b16 %v1373
        %v2761 = vunpack.c.h.b16 %v1373
        %v2762 = vunpack.c.l.b16 %v1374
        %v2763 = vunpack.c.h.b16 %v1374
        %v2764 = vunpack.c.l.b16 %v1375
        %v2765 = vunpack.c.h.b16 %v1375
        %v2766 = vunpack.c.l.b16 %v1376
        %v2767 = vunpack.c.h.b16 %v1376
        %v2768 = vunpack.c.l.b16 %v1377
        %v2769 = vunpack.c.h.b16 %v1377
        %v2770 = vunpack.c.l.b16 %v1378
        %v2771 = vunpack.c.h.b16 %v1378
        %v2772 = vunpack.c.l.b16 %v1379
        %v2773 = vunpack.c.h.b16 %v1379
        %v2774 = vunpack.c.l.b16 %v1380
        %v2775 = vunpack.c.h.b16 %v1380
        %v2776 = vunpack.c.l.b16 %v1381
        %v2777 = vunpack.c.h.b16 %v1381
        %v2778 = vunpack.c.l.b16 %v1382
        %v2779 = vunpack.c.h.b16 %v1382
        %v2780 = vunpack.c.l.b16 %v1383
        %v2781 = vunpack.c.h.b16 %v1383
        %v2782 = vunpack.c.l.b16 %v1384
        %v2783 = vunpack.c.h.b16 %v1384
        %v2784 = vunpack.c.l.b16 %v1385
        %v2785 = vunpack.c.h.b16 %v1385
        %v2786 = vunpack.c.l.b16 %v1386
        %v2787 = vunpack.c.h.b16 %v1386
        %v2788 = vunpack.c.l.b16 %v1387
        %v2789 = vunpack.c.h.b16 %v1387
        %v2790 = vunpack.c.l.b16 %v1388
        %v2791 = vunpack.c.h.b16 %v1388
        %v2792 = vunpack.c.l.b16 %v1389
        %v2793 = vunpack.c.h.b16 %v1389
        %v2794 = vunpack.c.l.b16 %v1390
        %v2795 = vunpack.c.h.b16 %v1390
        %v2796 = vunpack.c.l.b16 %v1391
        %v2797 = vunpack.c.h.b16 %v1391
        %v2798 = vunpack.c.l.b16 %v1392
        %v2799 = vunpack.c.h.b16 %v1392
        %v2800 = vunpack.c.l.b16 %v1393
        %v2801 = vunpack.c.h.b16 %v1393
        %v2802 = vunpack.c.l.b16 %v1394
        %v2803 = vunpack.c.h.b16 %v1394
        %v2804 = vunpack.c.l.b16 %v1395
        %v2805 = vunpack.c.h.b16 %v1395
        %v2806 = vunpack.c.l.b16 %v1396
        %v2807 = vunpack.c.h.b16 %v1396
        %v2808 = vunpack.c.l.b16 %v1397
        %v2809 = vunpack.c.h.b16 %v1397
        %v2810 = vunpack.c.l.b16 %v1398
        %v2811 = vunpack.c.h.b16 %v1398
        %v2812 = vunpack.c.l.b16 %v1399
        %v2813 = vunpack.c.h.b16 %v1399
        %v2814 = vunpack.c.l.b16 %v1400
        %v2815 = vunpack.c.h.b16 %v1400
        %v2816 = vunpack.c.l.b16 %v1401
        %v2817 = vunpack.c.h.b16 %v1401
        %v2818 = vunpack.c.l.b16 %v1402
        %v2819 = vunpack.c.h.b16 %v1402
        %v2820 = vunpack.c.l.b16 %v1403
        %v2821 = vunpack.c.h.b16 %v1403
        %v2822 = vunpack.c.l.b16 %v1404
        %v2823 = vunpack.c.h.b16 %v1404
        %v2824 = vunpack.c.l.b16 %v1405
        %v2825 = vunpack.c.h.b16 %v1405
        %v2826 = vunpack.c.l.b16 %v1406
        %v2827 = vunpack.c.h.b16 %v1406
        %v2828 = vunpack.c.l.b16 %v1407
        %v2829 = vunpack.c.h.b16 %v1407
        %v2830 = vunpack.c.l.b16 %v1408
        %v2831 = vunpack.c.h.b16 %v1408
        %v2832 = vunpack.c.l.b16 %v1409
        %v2833 = vunpack.c.h.b16 %v1409
        %v2834 = vunpack.c.l.b16 %v1410
        %v2835 = vunpack.c.h.b16 %v1410
        %v2836 = vunpack.c.l.b16 %v1411
        %v2837 = vunpack.c.h.b16 %v1411
        %v2838 = vunpack.c.l.b16 %v1412
        %v2839 = vunpack.c.h.b16 %v1412
        %v2840 = vunpack.c.l.b16 %v1413
        %v2841 = vunpack.c.h.b16 %v1413
        %v2842 = vunpack.c.l.b16 %v1414
        %v2843 = vunpack.c.h.b16 %v1414
        %v2844 = vunpack.c.l.b16 %v1415
        %v2845 = vunpack.c.h.b16 %v1415
        %v2846 = vunpack.c.l.b16 %v1416
        %v2847 = vunpack.c.h.b16 %v1416
        %v2848 = vunpack.c.l.b16 %v1417
        %v2849 = vunpack.c.h.b16 %v1417
        %v2850 = vunpack.c.l.b16 %v1418
        %v2851 = vunpack.c.h.b16 %v1418
        %v2852 = vunpack.c.l.b16 %v1419
        %v2853 = vunpack.c.h.b16 %v1419
        %v2854 = vunpack.c.l.b16 %v1420
        %v2855 = vunpack.c.h.b16 %v1420
        %v2856 = vunpack.c.l.b16 %v1421
        %v2857 = vunpack.c.h.b16 %v1421
        %v2858 = vunpack.c.l.b16 %v1422
        %v2859 = vunpack.c.h.b16 %v1422
        %v2860 = vunpack.c.l.b16 %v1423
        %v2861 = vunpack.c.h.b16 %v1423
        %v2862 = vunpack.c.l.b16 %v1424
        %v2863 = vunpack.c.h.b16 %v1424
        %v2864 = vunpack.c.l.b16 %v1425
        %v2865 = vunpack.c.h.b16 %v1425
        %v2866 = vunpack.c.l.b16 %v1426
        %v2867 = vunpack.c.h.b16 %v1426
        %v2868 = vunpack.c.l.b16 %v1427
        %v2869 = vunpack.c.h.b16 %v1427
        %v2870 = vunpack.c.l.b16 %v1428
        %v2871 = vunpack.c.h.b16 %v1428
        %v2872 = vunpack.c.l.b16 %v1429
        %v2873 = vunpack.c.h.b16 %v1429
        %v2874 = vunpack.c.l.b16 %v1430
        %v2875 = vunpack.c.h.b16 %v1430
        %v2876 = vunpack.c.l.b16 %v1431
        %v2877 = vunpack.c.h.b16 %v1431
        %v2878 = vunpack.c.l.b16 %v1432
        %v2879 = vunpack.c.h.b16 %v1432
        %v2880 = vunpack.c.l.b16 %v1433
        %v2881 = vunpack.c.h.b16 %v1433
        %v2882 = vunpack.c.l.b16 %v1434
        %v2883 = vunpack.c.h.b16 %v1434
        %v2884 = vunpack.c.l.b16 %v1435
        %v2885 = vunpack.c.h.b16 %v1435
        %v2886 = vunpack.c.l.b16 %v1436
        %v2887 = vunpack.c.h.b16 %v1436
        %v2888 = vunpack.c.l.b16 %v1437
        %v2889 = vunpack.c.h.b16 %v1437
        %v2890 = vunpack.c.l.b16 %v1438
        %v2891 = vunpack.c.h.b16 %v1438
        %v2892 = vunpack.c.l.b16 %v1439
        %v2893 = vunpack.c.h.b16 %v1439
        %v2894 = vunpack.c.l.b16 %v1440
        %v2895 = vunpack.c.h.b16 %v1440
        %v2896 = vunpack.c.l.b16 %v1441
        %v2897 = vunpack.c.h.b16 %v1441
        %v2898 = vunpack.c.l.b16 %v1442
        %v2899 = vunpack.c.h.b16 %v1442
        %v2900 = vunpack.c.l.b16 %v1443
        %v2901 = vunpack.c.h.b16 %v1443
        %v2902 = vunpack.c.l.b16 %v1444
        %v2903 = vunpack.c.h.b16 %v1444
        %v2904 = vunpack.c.l.b16 %v1445
        %v2905 = vunpack.c.h.b16 %v1445
        %v2906 = vunpack.c.l.b16 %v1446
        %v2907 = vunpack.c.h.b16 %v1446
        %v2908 = vunpack.c.l.b16 %v1447
        %v2909 = vunpack.c.h.b16 %v1447
        %v2910 = vunpack.c.l.b16 %v1448
        %v2911 = vunpack.c.h.b16 %v1448
        %v2912 = vunpack.c.l.b16 %v1449
        %v2913 = vunpack.c.h.b16 %v1449
        %v2914 = vunpack.c.l.b16 %v1450
        %v2915 = vunpack.c.h.b16 %v1450
        %v2916 = vunpack.c.l.b16 %v1451
        %v2917 = vunpack.c.h.b16 %v1451
        %v2918 = vunpack.c.l.b16 %v1452
        %v2919 = vunpack.c.h.b16 %v1452
        %v2920 = vunpack.c.l.b16 %v1453
        %v2921 = vunpack.c.h.b16 %v1453
        %v2922 = vunpack.c.l.b16 %v1454
        %v2923 = vunpack.c.h.b16 %v1454
        %v2924 = vunpack.c.l.b16 %v1455
        %v2925 = vunpack.c.h.b16 %v1455
        %v2926 = vunpack.c.l.b16 %v1456
        %v2927 = vunpack.c.h.b16 %v1456
        %v2928 = vunpack.c.l.b16 %v1457
        %v2929 = vunpack.c.h.b16 %v1457
        %v2930 = vunpack.c.l.b16 %v1458
        %v2931 = vunpack.c.h.b16 %v1458
        %v2932 = vunpack.c.l.b16 %v1459
        %v2933 = vunpack.c.h.b16 %v1459
        %v2934 = vunpack.c.l.b16 %v1460
        %v2935 = vunpack.c.h.b16 %v1460
        %v2936 = vunpack.c.l.b16 %v1461
        %v2937 = vunpack.c.h.b16 %v1461
        %v2938 = vunpack.c.l.b16 %v1462
        %v2939 = vunpack.c.h.b16 %v1462
        %v2940 = vunpack.c.l.b16 %v1463
        %v2941 = vunpack.c.h.b16 %v1463
        %v2942 = vunpack.c.l.b16 %v1464
        %v2943 = vunpack.c.h.b16 %v1464
        %v2944 = vunpack.c.l.b16 %v1465
        %v2945 = vunpack.c.h.b16 %v1465
        %v2946 = vunpack.c.l.b16 %v1466
        %v2947 = vunpack.c.h.b16 %v1466
        %v2948 = vunpack.c.l.b16 %v1467
        %v2949 = vunpack.c.h.b16 %v1467
        %v2950 = vunpack.c.l.b16 %v1468
        %v2951 = vunpack.c.h.b16 %v1468
        %v2952 = vunpack.c.l.b16 %v1469
        %v2953 = vunpack.c.h.b16 %v1469
        %v2954 = vunpack.c.l.b16 %v1470
        %v2955 = vunpack.c.h.b16 %v1470
        %v2956 = vunpack.c.l.b16 %v1471
        %v2957 = vunpack.c.h.b16 %v1471
        %v2958 = vunpack.c.l.b16 %v1472
        %v2959 = vunpack.c.h.b16 %v1472
        %v2960 = vunpack.c.l.b16 %v1473
        %v2961 = vunpack.c.h.b16 %v1473
        %v2962 = vunpack.c.l.b16 %v1474
        %v2963 = vunpack.c.h.b16 %v1474
        %v2964 = vunpack.c.l.b16 %v1475
        %v2965 = vunpack.c.h.b16 %v1475
        %v2966 = vunpack.c.l.b16 %v1476
        %v2967 = vunpack.c.h.b16 %v1476
        %v2968 = vunpack.c.l.b16 %v1477
        %v2969 = vunpack.c.h.b16 %v1477
        %v2970 = vunpack.c.l.b16 %v1478
        %v2971 = vunpack.c.h.b16 %v1478
        %v2972 = vunpack.c.l.b16 %v1479
        %v2973 = vunpack.c.h.b16 %v1479
        %v2974 = vunpack.c.l.b16 %v1480
        %v2975 = vunpack.c.h.b16 %v1480
        %v2976 = vunpack.c.l.b16 %v1481
        %v2977 = vunpack.c.h.b16 %v1481
        %v2978 = vunpack.c.l.b16 %v1482
        %v2979 = vunpack.c.h.b16 %v1482
        %v2980 = vunpack.c.l.b16 %v1483
        %v2981 = vunpack.c.h.b16 %v1483
        %v2982 = vunpack.c.l.b16 %v1484
        %v2983 = vunpack.c.h.b16 %v1484
        %v2984 = vunpack.c.l.b16 %v1485
        %v2985 = vunpack.c.h.b16 %v1485
        %v2986 = vunpack.c.l.b16 %v1486
        %v2987 = vunpack.c.h.b16 %v1486
        %v2988 = vunpack.c.l.b16 %v1487
        %v2989 = vunpack.c.h.b16 %v1487
        %v2990 = vunpack.c.l.b16 %v1488
        %v2991 = vunpack.c.h.b16 %v1488
        %v2992 = vunpack.c.l.b16 %v1489
        %v2993 = vunpack.c.h.b16 %v1489
        %v2994 = vunpack.c.l.b16 %v1490
        %v2995 = vunpack.c.h.b16 %v1490
        %v2996 = vunpack.c.l.b16 %v1491
        %v2997 = vunpack.c.h.b16 %v1491
        %v2998 = vunpack.c.l.b16 %v1492
        %v2999 = vunpack.c.h.b16 %v1492
        %v3000 = vunpack.c.l.b16 %v1493
        %v3001 = vunpack.c.h.b16 %v1493
        %v3002 = vunpack.c.l.b16 %v1494
        %v3003 = vunpack.c.h.b16 %v1494
        %v3004 = vunpack.c.l.b16 %v1495
        %v3005 = vunpack.c.h.b16 %v1495
        %v3006 = vunpack.c.l.b16 %v1496
        %v3007 = vunpack.c.h.b16 %v1496
        %v3008 = vunpack.c.l.b16 %v1497
        %v3009 = vunpack.c.h.b16 %v1497
        %v3010 = vunpack.c.l.b16 %v1498
        %v3011 = vunpack.c.h.b16 %v1498
        %v3012 = vunpack.c.l.b16 %v1499
        %v3013 = vunpack.c.h.b16 %v1499
        %v3014 = vunpack.c.l.b16 %v1500
        %v3015 = vunpack.c.h.b16 %v1500
        %v3016 = vunpack.c.l.b16 %v1501
        %v3017 = vunpack.c.h.b16 %v1501
        %v3018 = vunpack.c.l.b16 %v1502
        %v3019 = vunpack.c.h.b16 %v1502
        %v3020 = vunpack.c.l.b16 %v1503
        %v3021 = vunpack.c.h.b16 %v1503
        %v3022 = vunpack.c.l.b16 %v1504
        %v3023 = vunpack.c.h.b16 %v1504
        %v3024 = vunpack.c.l.b16 %v1505
        %v3025 = vunpack.c.h.b16 %v1505
        %v3026 = vunpack.c.l.b16 %v1506
        %v3027 = vunpack.c.h.b16 %v1506
        %v3028 = vunpack.c.l.b16 %v1507
        %v3029 = vunpack.c.h.b16 %v1507
        %v3030 = vunpack.c.l.b16 %v1508
        %v3031 = vunpack.c.h.b16 %v1508
        %v3032 = vunpack.c.l.b16 %v1509
        %v3033 = vunpack.c.h.b16 %v1509
        %v3034 = vunpack.c.l.b16 %v1510
        %v3035 = vunpack.c.h.b16 %v1510
        %v3036 = vunpack.c.l.b16 %v1511
        %v3037 = vunpack.c.h.b16 %v1511
        %v3038 = vunpack.c.l.b16 %v1512
        %v3039 = vunpack.c.h.b16 %v1512
        %v3040 = vunpack.c.l.b16 %v1513
        %v3041 = vunpack.c.h.b16 %v1513
        %v3042 = vunpack.c.l.b16 %v1514
        %v3043 = vunpack.c.h.b16 %v1514
        %v3044 = vunpack.c.l.b16 %v1515
        %v3045 = vunpack.c.h.b16 %v1515
        %v3046 = vunpack.c.l.b16 %v1516
        %v3047 = vunpack.c.h.b16 %v1516
        %v3048 = vunpack.c.l.b16 %v1517
        %v3049 = vunpack.c.h.b16 %v1517
        %v3050 = vunpack.c.l.b16 %v1518
        %v3051 = vunpack.c.h.b16 %v1518
        %v3052 = vunpack.c.l.b16 %v1519
        %v3053 = vunpack.c.h.b16 %v1519
        %v3054 = vunpack.c.l.b16 %v1520
        %v3055 = vunpack.c.h.b16 %v1520
        %v3056 = vunpack.c.l.b16 %v1521
        %v3057 = vunpack.c.h.b16 %v1521
        %v3058 = vunpack.c.l.b16 %v1522
        %v3059 = vunpack.c.h.b16 %v1522
        %v3060 = vunpack.c.l.b16 %v1523
        %v3061 = vunpack.c.h.b16 %v1523
        %v3062 = vunpack.c.l.b16 %v1524
        %v3063 = vunpack.c.h.b16 %v1524
        %v3064 = vunpack.c.l.b16 %v1525
        %v3065 = vunpack.c.h.b16 %v1525
        %v3066 = vunpack.c.l.b16 %v1526
        %v3067 = vunpack.c.h.b16 %v1526
        %v3068 = vunpack.c.l.b16 %v1527
        %v3069 = vunpack.c.h.b16 %v1527
        %v3070 = vunpack.c.l.b16 %v1528
        %v3071 = vunpack.c.h.b16 %v1528
        %v3072 = vunpack.c.l.b16 %v1529
        %v3073 = vunpack.c.h.b16 %v1529
        %v3074 = vunpack.c.l.b16 %v1530
        %v3075 = vunpack.c.h.b16 %v1530
        %v3076 = vunpack.c.l.b16 %v1531
        %v3077 = vunpack.c.h.b16 %v1531
        %v3078 = vunpack.c.l.b16 %v1532
        %v3079 = vunpack.c.h.b16 %v1532
        %v3080 = vunpack.c.l.b16 %v1533
        %v3081 = vunpack.c.h.b16 %v1533
        %v3082 = vunpack.c.l.b16 %v1534
        %v3083 = vunpack.c.h.b16 %v1534
        %v3084 = vunpack.c.l.b16 %v1535
        %v3085 = vunpack.c.h.b16 %v1535
        %v3086 = vunpack.c.l.b16 %v1536
        %v3087 = vunpack.c.h.b16 %v1536
        %v3088 = vunpack.c.l.b16 %v1537
        %v3089 = vunpack.c.h.b16 %v1537
        %v3090 = vunpack.c.l.b16 %v1538
        %v3091 = vunpack.c.h.b16 %v1538
        %v3092 = vunpack.c.l.b16 %v1539
        %v3093 = vunpack.c.h.b16 %v1539
        %v3094 = vunpack.c.l.b16 %v1540
        %v3095 = vunpack.c.h.b16 %v1540
        %v3096 = vunpack.c.l.b16 %v1541
        %v3097 = vunpack.c.h.b16 %v1541
        %v3098 = vunpack.c.l.b16 %v1542
        %v3099 = vunpack.c.h.b16 %v1542
        %v3100 = vunpack.c.l.b16 %v1543
        %v3101 = vunpack.c.h.b16 %v1543
        %v3102 = vunpack.c.l.b16 %v1544
        %v3103 = vunpack.c.h.b16 %v1544
        %v3104 = vunpack.c.l.b16 %v1545
        %v3105 = vunpack.c.h.b16 %v1545
        %v3106 = vunpack.c.l.b16 %v1546
        %v3107 = vunpack.c.h.b16 %v1546
        %v3108 = vunpack.c.l.b16 %v1547
        %v3109 = vunpack.c.h.b16 %v1547
        %v3110 = vunpack.c.l.b16 %v1548
        %v3111 = vunpack.c.h.b16 %v1548
        %v3112 = vunpack.c.l.b16 %v1549
        %v3113 = vunpack.c.h.b16 %v1549
        %v3114 = vunpack.c.l.b16 %v1550
        %v3115 = vunpack.c.h.b16 %v1550
        %v3116 = vunpack.c.l.b16 %v1551
        %v3117 = vunpack.c.h.b16 %v1551
        %v3118 = vunpack.c.l.b16 %v1552
        %v3119 = vunpack.c.h.b16 %v1552
        %v3120 = vunpack.c.l.b16 %v1553
        %v3121 = vunpack.c.h.b16 %v1553
        %v3122 = vunpack.c.l.b16 %v1554
        %v3123 = vunpack.c.h.b16 %v1554
        %v3124 = vunpack.c.l.b16 %v1555
        %v3125 = vunpack.c.h.b16 %v1555
        %v3126 = vunpack.c.l.b16 %v1556
        %v3127 = vunpack.c.h.b16 %v1556
        %v3128 = vunpack.c.l.b16 %v1557
        %v3129 = vunpack.c.h.b16 %v1557
        %v3130 = vunpack.c.l.b16 %v1558
        %v3131 = vunpack.c.h.b16 %v1558
        %v3132 = vunpack.c.l.b16 %v1559
        %v3133 = vunpack.c.h.b16 %v1559
        %v3134 = vunpack.c.l.b16 %v1560
        %v3135 = vunpack.c.h.b16 %v1560
        %v3136 = vunpack.c.l.b16 %v1561
        %v3137 = vunpack.c.h.b16 %v1561
        %v3138 = vunpack.c.l.b16 %v1562
        %v3139 = vunpack.c.h.b16 %v1562
        %v3140 = vunpack.c.l.b16 %v1563
        %v3141 = vunpack.c.h.b16 %v1563
        %v3142 = vpack.c.b16 %v2126, %v2118
        %v3143 = vpack.c.b16 %v2127, %v2119
        %v3144 = vpack.c.b16 %v2128, %v2120
        %v3145 = vpack.c.b16 %v2129, %v2121
        %v3146 = vpack.c.b16 %v2130, %v2122
        %v3147 = vpack.c.b16 %v2131, %v2123
        %v3148 = vpack.c.b16 %v2132, %v2124
        %v3149 = vpack.c.b16 %v2133, %v2125
        %v3150 = vpack.c.b16 %v2142, %v2134
        %v3151 = vpack.c.b16 %v2143, %v2135
        %v3152 = vpack.c.b16 %v2144, %v2136
        %v3153 = vpack.c.b16 %v2145, %v2137
        %v3154 = vpack.c.b16 %v2146, %v2138
        %v3155 = vpack.c.b16 %v2147, %v2139
        %v3156 = vpack.c.b16 %v2148, %v2140
        %v3157 = vpack.c.b16 %v2149, %v2141
        %v3158 = vpack.c.b16 %v2158, %v2150
        %v3159 = vpack.c.b16 %v2159, %v2151
        %v3160 = vpack.c.b16 %v2160, %v2152
        %v3161 = vpack.c.b16 %v2161, %v2153
        %v3162 = vpack.c.b16 %v2162, %v2154
        %v3163 = vpack.c.b16 %v2163, %v2155
        %v3164 = vpack.c.b16 %v2164, %v2156
        %v3165 = vpack.c.b16 %v2165, %v2157
        %v3166 = vpack.c.b16 %v2174, %v2166
        %v3167 = vpack.c.b16 %v2175, %v2167
        %v3168 = vpack.c.b16 %v2176, %v2168
        %v3169 = vpack.c.b16 %v2177, %v2169
        %v3170 = vpack.c.b16 %v2178, %v2170
        %v3171 = vpack.c.b16 %v2179, %v2171
        %v3172 = vpack.c.b16 %v2180, %v2172
        %v3173 = vpack.c.b16 %v2181, %v2173
        %v3174 = vpack.c.b16 %v2190, %v2182
        %v3175 = vpack.c.b16 %v2191, %v2183
        %v3176 = vpack.c.b16 %v2192, %v2184
        %v3177 = vpack.c.b16 %v2193, %v2185
        %v3178 = vpack.c.b16 %v2194, %v2186
        %v3179 = vpack.c.b16 %v2195, %v2187
        %v3180 = vpack.c.b16 %v2196, %v2188
        %v3181 = vpack.c.b16 %v2197, %v2189
        %v3182 = vpack.c.b16 %v2206, %v2198
        %v3183 = vpack.c.b16 %v2207, %v2199
        %v3184 = vpack.c.b16 %v2208, %v2200
        %v3185 = vpack.c.b16 %v2209, %v2201
        %v3186 = vpack.c.b16 %v2210, %v2202
        %v3187 = vpack.c.b16 %v2211, %v2203
        %v3188 = vpack.c.b16 %v2212, %v2204
        %v3189 = vpack.c.b16 %v2213, %v2205
        %v3190 = vpack.c.b16 %v2222, %v2214
        %v3191 = vpack.c.b16 %v2223, %v2215
        %v3192 = vpack.c.b16 %v2224, %v2216
        %v3193 = vpack.c.b16 %v2225, %v2217
        %v3194 = vpack.c.b16 %v2226, %v2218
        %v3195 = vpack.c.b16 %v2227, %v2219
        %v3196 = vpack.c.b16 %v2228, %v2220
        %v3197 = vpack.c.b16 %v2229, %v2221
        %v3198 = vpack.c.b16 %v2238, %v2230
        %v3199 = vpack.c.b16 %v2239, %v2231
        %v3200 = vpack.c.b16 %v2240, %v2232
        %v3201 = vpack.c.b16 %v2241, %v2233
        %v3202 = vpack.c.b16 %v2242, %v2234
        %v3203 = vpack.c.b16 %v2243, %v2235
        %v3204 = vpack.c.b16 %v2244, %v2236
        %v3205 = vpack.c.b16 %v2245, %v2237
        %v3206 = vpack.c.b16 %v2254, %v2246
        %v3207 = vpack.c.b16 %v2255, %v2247
        %v3208 = vpack.c.b16 %v2256, %v2248
        %v3209 = vpack.c.b16 %v2257, %v2249
        %v3210 = vpack.c.b16 %v2258, %v2250
        %v3211 = vpack.c.b16 %v2259, %v2251
        %v3212 = vpack.c.b16 %v2260, %v2252
        %v3213 = vpack.c.b16 %v2261, %v2253
        %v3214 = vpack.c.b16 %v2270, %v2262
        %v3215 = vpack.c.b16 %v2271, %v2263
        %v3216 = vpack.c.b16 %v2272, %v2264
        %v3217 = vpack.c.b16 %v2273, %v2265
        %v3218 = vpack.c.b16 %v2274, %v2266
        %v3219 = vpack.c.b16 %v2275, %v2267
        %v3220 = vpack.c.b16 %v2276, %v2268
        %v3221 = vpack.c.b16 %v2277, %v2269
        %v3222 = vpack.c.b16 %v2286, %v2278
        %v3223 = vpack.c.b16 %v2287, %v2279
        %v3224 = vpack.c.b16 %v2288, %v2280
        %v3225 = vpack.c.b16 %v2289, %v2281
        %v3226 = vpack.c.b16 %v2290, %v2282
        %v3227 = vpack.c.b16 %v2291, %v2283
        %v3228 = vpack.c.b16 %v2292, %v2284
        %v3229 = vpack.c.b16 %v2293, %v2285
        %v3230 = vpack.c.b16 %v2302, %v2294
        %v3231 = vpack.c.b16 %v2303, %v2295
        %v3232 = vpack.c.b16 %v2304, %v2296
        %v3233 = vpack.c.b16 %v2305, %v2297
        %v3234 = vpack.c.b16 %v2306, %v2298
        %v3235 = vpack.c.b16 %v2307, %v2299
        %v3236 = vpack.c.b16 %v2308, %v2300
        %v3237 = vpack.c.b16 %v2309, %v2301
        %v3238 = vpack.c.b16 %v2318, %v2310
        %v3239 = vpack.c.b16 %v2319, %v2311
        %v3240 = vpack.c.b16 %v2320, %v2312
        %v3241 = vpack.c.b16 %v2321, %v2313
        %v3242 = vpack.c.b16 %v2322, %v2314
        %v3243 = vpack.c.b16 %v2323, %v2315
        %v3244 = vpack.c.b16 %v2324, %v2316
        %v3245 = vpack.c.b16 %v2325, %v2317
        %v3246 = vpack.c.b16 %v2334, %v2326
        %v3247 = vpack.c.b16 %v2335, %v2327
        %v3248 = vpack.c.b16 %v2336, %v2328
        %v3249 = vpack.c.b16 %v2337, %v2329
        %v3250 = vpack.c.b16 %v2338, %v2330
        %v3251 = vpack.c.b16 %v2339, %v2331
        %v3252 = vpack.c.b16 %v2340, %v2332
        %v3253 = vpack.c.b16 %v2341, %v2333
        %v3254 = vpack.c.b16 %v2350, %v2342
        %v3255 = vpack.c.b16 %v2351, %v2343
        %v3256 = vpack.c.b16 %v2352, %v2344
        %v3257 = vpack.c.b16 %v2353, %v2345
        %v3258 = vpack.c.b16 %v2354, %v2346
        %v3259 = vpack.c.b16 %v2355, %v2347
        %v3260 = vpack.c.b16 %v2356, %v2348
        %v3261 = vpack.c.b16 %v2357, %v2349
        %v3262 = vpack.c.b16 %v2366, %v2358
        %v3263 = vpack.c.b16 %v2367, %v2359
        %v3264 = vpack.c.b16 %v2368, %v2360
        %v3265 = vpack.c.b16 %v2369, %v2361
        %v3266 = vpack.c.b16 %v2370, %v2362
        %v3267 = vpack.c.b16 %v2371, %v2363
        %v3268 = vpack.c.b16 %v2372, %v2364
        %v3269 = vpack.c.b16 %v2373, %v2365
        %v3270 = vpack.c.b16 %v2382, %v2374
        %v3271 = vpack.c.b16 %v2383, %v2375
        %v3272 = vpack.c.b16 %v2384, %v2376
        %v3273 = vpack.c.b16 %v2385, %v2377
        %v3274 = vpack.c.b16 %v2386, %v2378
        %v3275 = vpack.c.b16 %v2387, %v2379
        %v3276 = vpack.c.b16 %v2388, %v2380
        %v3277 = vpack.c.b16 %v2389, %v2381
        %v3278 = vpack.c.b16 %v2398, %v2390
        %v3279 = vpack.c.b16 %v2399, %v2391
        %v3280 = vpack.c.b16 %v2400, %v2392
        %v3281 = vpack.c.b16 %v2401, %v2393
        %v3282 = vpack.c.b16 %v2402, %v2394
        %v3283 = vpack.c.b16 %v2403, %v2395
        %v3284 = vpack.c.b16 %v2404, %v2396
        %v3285 = vpack.c.b16 %v2405, %v2397
        %v3286 = vpack.c.b16 %v2414, %v2406
        %v3287 = vpack.c.b16 %v2415, %v2407
        %v3288 = vpack.c.b16 %v2416, %v2408
        %v3289 = vpack.c.b16 %v2417, %v2409
        %v3290 = vpack.c.b16 %v2418, %v2410
        %v3291 = vpack.c.b16 %v2419, %v2411
        %v3292 = vpack.c.b16 %v2420, %v2412
        %v3293 = vpack.c.b16 %v2421, %v2413
        %v3294 = vpack.c.b16 %v2430, %v2422
        %v3295 = vpack.c.b16 %v2431, %v2423
        %v3296 = vpack.c.b16 %v2432, %v2424
        %v3297 = vpack.c.b16 %v2433, %v2425
        %v3298 = vpack.c.b16 %v2434, %v2426
        %v3299 = vpack.c.b16 %v2435, %v2427
        %v3300 = vpack.c.b16 %v2436, %v2428
        %v3301 = vpack.c.b16 %v2437, %v2429
        %v3302 = vpack.c.b16 %v2446, %v2438
        %v3303 = vpack.c.b16 %v2447, %v2439
        %v3304 = vpack.c.b16 %v2448, %v2440
        %v3305 = vpack.c.b16 %v2449, %v2441
        %v3306 = vpack.c.b16 %v2450, %v2442
        %v3307 = vpack.c.b16 %v2451, %v2443
        %v3308 = vpack.c.b16 %v2452, %v2444
        %v3309 = vpack.c.b16 %v2453, %v2445
        %v3310 = vpack.c.b16 %v2462, %v2454
        %v3311 = vpack.c.b16 %v2463, %v2455
        %v3312 = vpack.c.b16 %v2464, %v2456
        %v3313 = vpack.c.b16 %v2465, %v2457
        %v3314 = vpack.c.b16 %v2466, %v2458
        %v3315 = vpack.c.b16 %v2467, %v2459
        %v3316 = vpack.c.b16 %v2468, %v2460
        %v3317 = vpack.c.b16 %v2469, %v2461
        %v3318 = vpack.c.b16 %v2478, %v2470
        %v3319 = vpack.c.b16 %v2479, %v2471
        %v3320 = vpack.c.b16 %v2480, %v2472
        %v3321 = vpack.c.b16 %v2481, %v2473
        %v3322 = vpack.c.b16 %v2482, %v2474
        %v3323 = vpack.c.b16 %v2483, %v2475
        %v3324 = vpack.c.b16 %v2484, %v2476
        %v3325 = vpack.c.b16 %v2485, %v2477
        %v3326 = vpack.c.b16 %v2494, %v2486
        %v3327 = vpack.c.b16 %v2495, %v2487
        %v3328 = vpack.c.b16 %v2496, %v2488
        %v3329 = vpack.c.b16 %v2497, %v2489
        %v3330 = vpack.c.b16 %v2498, %v2490
        %v3331 = vpack.c.b16 %v2499, %v2491
        %v3332 = vpack.c.b16 %v2500, %v2492
        %v3333 = vpack.c.b16 %v2501, %v2493
        %v3334 = vpack.c.b16 %v2510, %v2502
        %v3335 = vpack.c.b16 %v2511, %v2503
        %v3336 = vpack.c.b16 %v2512, %v2504
        %v3337 = vpack.c.b16 %v2513, %v2505
        %v3338 = vpack.c.b16 %v2514, %v2506
        %v3339 = vpack.c.b16 %v2515, %v2507
        %v3340 = vpack.c.b16 %v2516, %v2508
        %v3341 = vpack.c.b16 %v2517, %v2509
        %v3342 = vpack.c.b16 %v2526, %v2518
        %v3343 = vpack.c.b16 %v2527, %v2519
        %v3344 = vpack.c.b16 %v2528, %v2520
        %v3345 = vpack.c.b16 %v2529, %v2521
        %v3346 = vpack.c.b16 %v2530, %v2522
        %v3347 = vpack.c.b16 %v2531, %v2523
        %v3348 = vpack.c.b16 %v2532, %v2524
        %v3349 = vpack.c.b16 %v2533, %v2525
        %v3350 = vpack.c.b16 %v2542, %v2534
        %v3351 = vpack.c.b16 %v2543, %v2535
        %v3352 = vpack.c.b16 %v2544, %v2536
        %v3353 = vpack.c.b16 %v2545, %v2537
        %v3354 = vpack.c.b16 %v2546, %v2538
        %v3355 = vpack.c.b16 %v2547, %v2539
        %v3356 = vpack.c.b16 %v2548, %v2540
        %v3357 = vpack.c.b16 %v2549, %v2541
        %v3358 = vpack.c.b16 %v2558, %v2550
        %v3359 = vpack.c.b16 %v2559, %v2551
        %v3360 = vpack.c.b16 %v2560, %v2552
        %v3361 = vpack.c.b16 %v2561, %v2553
        %v3362 = vpack.c.b16 %v2562, %v2554
        %v3363 = vpack.c.b16 %v2563, %v2555
        %v3364 = vpack.c.b16 %v2564, %v2556
        %v3365 = vpack.c.b16 %v2565, %v2557
        %v3366 = vpack.c.b16 %v2574, %v2566
        %v3367 = vpack.c.b16 %v2575, %v2567
        %v3368 = vpack.c.b16 %v2576, %v2568
        %v3369 = vpack.c.b16 %v2577, %v2569
        %v3370 = vpack.c.b16 %v2578, %v2570
        %v3371 = vpack.c.b16 %v2579, %v2571
        %v3372 = vpack.c.b16 %v2580, %v2572
        %v3373 = vpack.c.b16 %v2581, %v2573
        %v3374 = vpack.c.b16 %v2590, %v2582
        %v3375 = vpack.c.b16 %v2591, %v2583
        %v3376 = vpack.c.b16 %v2592, %v2584
        %v3377 = vpack.c.b16 %v2593, %v2585
        %v3378 = vpack.c.b16 %v2594, %v2586
        %v3379 = vpack.c.b16 %v2595, %v2587
        %v3380 = vpack.c.b16 %v2596, %v2588
        %v3381 = vpack.c.b16 %v2597, %v2589
        %v3382 = vpack.c.b16 %v2606, %v2598
        %v3383 = vpack.c.b16 %v2607, %v2599
        %v3384 = vpack.c.b16 %v2608, %v2600
        %v3385 = vpack.c.b16 %v2609, %v2601
        %v3386 = vpack.c.b16 %v2610, %v2602
        %v3387 = vpack.c.b16 %v2611, %v2603
        %v3388 = vpack.c.b16 %v2612, %v2604
        %v3389 = vpack.c.b16 %v2613, %v2605
        %v3390 = vpack.c.b16 %v2622, %v2614
        %v3391 = vpack.c.b16 %v2623, %v2615
        %v3392 = vpack.c.b16 %v2624, %v2616
        %v3393 = vpack.c.b16 %v2625, %v2617
        %v3394 = vpack.c.b16 %v2626, %v2618
        %v3395 = vpack.c.b16 %v2627, %v2619
        %v3396 = vpack.c.b16 %v2628, %v2620
        %v3397 = vpack.c.b16 %v2629, %v2621
        %v3398 = vpack.c.b16 %v2638, %v2630
        %v3399 = vpack.c.b16 %v2639, %v2631
        %v3400 = vpack.c.b16 %v2640, %v2632
        %v3401 = vpack.c.b16 %v2641, %v2633
        %v3402 = vpack.c.b16 %v2642, %v2634
        %v3403 = vpack.c.b16 %v2643, %v2635
        %v3404 = vpack.c.b16 %v2644, %v2636
        %v3405 = vpack.c.b16 %v2645, %v2637
        %v3406 = vpack.c.b16 %v2654, %v2646
        %v3407 = vpack.c.b16 %v2655, %v2647
        %v3408 = vpack.c.b16 %v2656, %v2648
        %v3409 = vpack.c.b16 %v2657, %v2649
        %v3410 = vpack.c.b16 %v2658, %v2650
        %v3411 = vpack.c.b16 %v2659, %v2651
        %v3412 = vpack.c.b16 %v2660, %v2652
        %v3413 = vpack.c.b16 %v2661, %v2653
        %v3414 = vpack.c.b16 %v2670, %v2662
        %v3415 = vpack.c.b16 %v2671, %v2663
        %v3416 = vpack.c.b16 %v2672, %v2664
        %v3417 = vpack.c.b16 %v2673, %v2665
        %v3418 = vpack.c.b16 %v2674, %v2666
        %v3419 = vpack.c.b16 %v2675, %v2667
        %v3420 = vpack.c.b16 %v2676, %v2668
        %v3421 = vpack.c.b16 %v2677, %v2669
        %v3422 = vpack.c.b16 %v2686, %v2678
        %v3423 = vpack.c.b16 %v2687, %v2679
        %v3424 = vpack.c.b16 %v2688, %v2680
        %v3425 = vpack.c.b16 %v2689, %v2681
        %v3426 = vpack.c.b16 %v2690, %v2682
        %v3427 = vpack.c.b16 %v2691, %v2683
        %v3428 = vpack.c.b16 %v2692, %v2684
        %v3429 = vpack.c.b16 %v2693, %v2685
        %v3430 = vpack.c.b16 %v2702, %v2694
        %v3431 = vpack.c.b16 %v2703, %v2695
        %v3432 = vpack.c.b16 %v2704, %v2696
        %v3433 = vpack.c.b16 %v2705, %v2697
        %v3434 = vpack.c.b16 %v2706, %v2698
        %v3435 = vpack.c.b16 %v2707, %v2699
        %v3436 = vpack.c.b16 %v2708, %v2700
        %v3437 = vpack.c.b16 %v2709, %v2701
        %v3438 = vpack.c.b16 %v2718, %v2710
        %v3439 = vpack.c.b16 %v2719, %v2711
        %v3440 = vpack.c.b16 %v2720, %v2712
        %v3441 = vpack.c.b16 %v2721, %v2713
        %v3442 = vpack.c.b16 %v2722, %v2714
        %v3443 = vpack.c.b16 %v2723, %v2715
        %v3444 = vpack.c.b16 %v2724, %v2716
        %v3445 = vpack.c.b16 %v2725, %v2717
        %v3446 = vpack.c.b16 %v2734, %v2726
        %v3447 = vpack.c.b16 %v2735, %v2727
        %v3448 = vpack.c.b16 %v2736, %v2728
        %v3449 = vpack.c.b16 %v2737, %v2729
        %v3450 = vpack.c.b16 %v2738, %v2730
        %v3451 = vpack.c.b16 %v2739, %v2731
        %v3452 = vpack.c.b16 %v2740, %v2732
        %v3453 = vpack.c.b16 %v2741, %v2733
        %v3454 = vpack.c.b16 %v2750, %v2742
        %v3455 = vpack.c.b16 %v2751, %v2743
        %v3456 = vpack.c.b16 %v2752, %v2744
        %v3457 = vpack.c.b16 %v2753, %v2745
        %v3458 = vpack.c.b16 %v2754, %v2746
        %v3459 = vpack.c.b16 %v2755, %v2747
        %v3460 = vpack.c.b16 %v2756, %v2748
        %v3461 = vpack.c.b16 %v2757, %v2749
        %v3462 = vpack.c.b16 %v2766, %v2758
        %v3463 = vpack.c.b16 %v2767, %v2759
        %v3464 = vpack.c.b16 %v2768, %v2760
        %v3465 = vpack.c.b16 %v2769, %v2761
        %v3466 = vpack.c.b16 %v2770, %v2762
        %v3467 = vpack.c.b16 %v2771, %v2763
        %v3468 = vpack.c.b16 %v2772, %v2764
        %v3469 = vpack.c.b16 %v2773, %v2765
        %v3470 = vpack.c.b16 %v2782, %v2774
        %v3471 = vpack.c.b16 %v2783, %v2775
        %v3472 = vpack.c.b16 %v2784, %v2776
        %v3473 = vpack.c.b16 %v2785, %v2777
        %v3474 = vpack.c.b16 %v2786, %v2778
        %v3475 = vpack.c.b16 %v2787, %v2779
        %v3476 = vpack.c.b16 %v2788, %v2780
        %v3477 = vpack.c.b16 %v2789, %v2781
        %v3478 = vpack.c.b16 %v2798, %v2790
        %v3479 = vpack.c.b16 %v2799, %v2791
        %v3480 = vpack.c.b16 %v2800, %v2792
        %v3481 = vpack.c.b16 %v2801, %v2793
        %v3482 = vpack.c.b16 %v2802, %v2794
        %v3483 = vpack.c.b16 %v2803, %v2795
        %v3484 = vpack.c.b16 %v2804, %v2796
        %v3485 = vpack.c.b16 %v2805, %v2797
        %v3486 = vpack.c.b16 %v2814, %v2806
        %v3487 = vpack.c.b16 %v2815, %v2807
        %v3488 = vpack.c.b16 %v2816, %v2808
        %v3489 = vpack.c.b16 %v2817, %v2809
        %v3490 = vpack.c.b16 %v2818, %v2810
        %v3491 = vpack.c.b16 %v2819, %v2811
        %v3492 = vpack.c.b16 %v2820, %v2812
        %v3493 = vpack.c.b16 %v2821, %v2813
        %v3494 = vpack.c.b16 %v2830, %v2822
        %v3495 = vpack.c.b16 %v2831, %v2823
        %v3496 = vpack.c.b16 %v2832, %v2824
        %v3497 = vpack.c.b16 %v2833, %v2825
        %v3498 = vpack.c.b16 %v2834, %v2826
        %v3499 = vpack.c.b16 %v2835, %v2827
        %v3500 = vpack.c.b16 %v2836, %v2828
        %v3501 = vpack.c.b16 %v2837, %v2829
        %v3502 = vpack.c.b16 %v2846, %v2838
        %v3503 = vpack.c.b16 %v2847, %v2839
        %v3504 = vpack.c.b16 %v2848, %v2840
        %v3505 = vpack.c.b16 %v2849, %v2841
        %v3506 = vpack.c.b16 %v2850, %v2842
        %v3507 = vpack.c.b16 %v2851, %v2843
        %v3508 = vpack.c.b16 %v2852, %v2844
        %v3509 = vpack.c.b16 %v2853, %v2845
        %v3510 = vpack.c.b16 %v2862, %v2854
        %v3511 = vpack.c.b16 %v2863, %v2855
        %v3512 = vpack.c.b16 %v2864, %v2856
        %v3513 = vpack.c.b16 %v2865, %v2857
        %v3514 = vpack.c.b16 %v2866, %v2858
        %v3515 = vpack.c.b16 %v2867, %v2859
        %v3516 = vpack.c.b16 %v2868, %v2860
        %v3517 = vpack.c.b16 %v2869, %v2861
        %v3518 = vpack.c.b16 %v2878, %v2870
        %v3519 = vpack.c.b16 %v2879, %v2871
        %v3520 = vpack.c.b16 %v2880, %v2872
        %v3521 = vpack.c.b16 %v2881, %v2873
        %v3522 = vpack.c.b16 %v2882, %v2874
        %v3523 = vpack.c.b16 %v2883, %v2875
        %v3524 = vpack.c.b16 %v2884, %v2876
        %v3525 = vpack.c.b16 %v2885, %v2877
        %v3526 = vpack.c.b16 %v2894, %v2886
        %v3527 = vpack.c.b16 %v2895, %v2887
        %v3528 = vpack.c.b16 %v2896, %v2888
        %v3529 = vpack.c.b16 %v2897, %v2889
        %v3530 = vpack.c.b16 %v2898, %v2890
        %v3531 = vpack.c.b16 %v2899, %v2891
        %v3532 = vpack.c.b16 %v2900, %v2892
        %v3533 = vpack.c.b16 %v2901, %v2893
        %v3534 = vpack.c.b16 %v2910, %v2902
        %v3535 = vpack.c.b16 %v2911, %v2903
        %v3536 = vpack.c.b16 %v2912, %v2904
        %v3537 = vpack.c.b16 %v2913, %v2905
        %v3538 = vpack.c.b16 %v2914, %v2906
        %v3539 = vpack.c.b16 %v2915, %v2907
        %v3540 = vpack.c.b16 %v2916, %v2908
        %v3541 = vpack.c.b16 %v2917, %v2909
        %v3542 = vpack.c.b16 %v2926, %v2918
        %v3543 = vpack.c.b16 %v2927, %v2919
        %v3544 = vpack.c.b16 %v2928, %v2920
        %v3545 = vpack.c.b16 %v2929, %v2921
        %v3546 = vpack.c.b16 %v2930, %v2922
        %v3547 = vpack.c.b16 %v2931, %v2923
        %v3548 = vpack.c.b16 %v2932, %v2924
        %v3549 = vpack.c.b16 %v2933, %v2925
        %v3550 = vpack.c.b16 %v2942, %v2934
        %v3551 = vpack.c.b16 %v2943, %v2935
        %v3552 = vpack.c.b16 %v2944, %v2936
        %v3553 = vpack.c.b16 %v2945, %v2937
        %v3554 = vpack.c.b16 %v2946, %v2938
        %v3555 = vpack.c.b16 %v2947, %v2939
        %v3556 = vpack.c.b16 %v2948, %v2940
        %v3557 = vpack.c.b16 %v2949, %v2941
        %v3558 = vpack.c.b16 %v2958, %v2950
        %v3559 = vpack.c.b16 %v2959, %v2951
        %v3560 = vpack.c.b16 %v2960, %v2952
        %v3561 = vpack.c.b16 %v2961, %v2953
        %v3562 = vpack.c.b16 %v2962, %v2954
        %v3563 = vpack.c.b16 %v2963, %v2955
        %v3564 = vpack.c.b16 %v2964, %v2956
        %v3565 = vpack.c.b16 %v2965, %v2957
        %v3566 = vpack.c.b16 %v2974, %v2966
        %v3567 = vpack.c.b16 %v2975, %v2967
        %v3568 = vpack.c.b16 %v2976, %v2968
        %v3569 = vpack.c.b16 %v2977, %v2969
        %v3570 = vpack.c.b16 %v2978, %v2970
        %v3571 = vpack.c.b16 %v2979, %v2971
        %v3572 = vpack.c.b16 %v2980, %v2972
        %v3573 = vpack.c.b16 %v2981, %v2973
        %v3574 = vpack.c.b16 %v2990, %v2982
        %v3575 = vpack.c.b16 %v2991, %v2983
        %v3576 = vpack.c.b16 %v2992, %v2984
        %v3577 = vpack.c.b16 %v2993, %v2985
        %v3578 = vpack.c.b16 %v2994, %v2986
        %v3579 = vpack.c.b16 %v2995, %v2987
        %v3580 = vpack.c.b16 %v2996, %v2988
        %v3581 = vpack.c.b16 %v2997, %v2989
        %v3582 = vpack.c.b16 %v3006, %v2998
        %v3583 = vpack.c.b16 %v3007, %v2999
        %v3584 = vpack.c.b16 %v3008, %v3000
        %v3585 = vpack.c.b16 %v3009, %v3001
        %v3586 = vpack.c.b16 %v3010, %v3002
        %v3587 = vpack.c.b16 %v3011, %v3003
        %v3588 = vpack.c.b16 %v3012, %v3004
        %v3589 = vpack.c.b16 %v3013, %v3005
        %v3590 = vpack.c.b16 %v3022, %v3014
        %v3591 = vpack.c.b16 %v3023, %v3015
        %v3592 = vpack.c.b16 %v3024, %v3016
        %v3593 = vpack.c.b16 %v3025, %v3017
        %v3594 = vpack.c.b16 %v3026, %v3018
        %v3595 = vpack.c.b16 %v3027, %v3019
        %v3596 = vpack.c.b16 %v3028, %v3020
        %v3597 = vpack.c.b16 %v3029, %v3021
        %v3598 = vpack.c.b16 %v3038, %v3030
        %v3599 = vpack.c.b16 %v3039, %v3031
        %v3600 = vpack.c.b16 %v3040, %v3032
        %v3601 = vpack.c.b16 %v3041, %v3033
        %v3602 = vpack.c.b16 %v3042, %v3034
        %v3603 = vpack.c.b16 %v3043, %v3035
        %v3604 = vpack.c.b16 %v3044, %v3036
        %v3605 = vpack.c.b16 %v3045, %v3037
        %v3606 = vpack.c.b16 %v3054, %v3046
        %v3607 = vpack.c.b16 %v3055, %v3047
        %v3608 = vpack.c.b16 %v3056, %v3048
        %v3609 = vpack.c.b16 %v3057, %v3049
        %v3610 = vpack.c.b16 %v3058, %v3050
        %v3611 = vpack.c.b16 %v3059, %v3051
        %v3612 = vpack.c.b16 %v3060, %v3052
        %v3613 = vpack.c.b16 %v3061, %v3053
        %v3614 = vpack.c.b16 %v3070, %v3062
        %v3615 = vpack.c.b16 %v3071, %v3063
        %v3616 = vpack.c.b16 %v3072, %v3064
        %v3617 = vpack.c.b16 %v3073, %v3065
        %v3618 = vpack.c.b16 %v3074, %v3066
        %v3619 = vpack.c.b16 %v3075, %v3067
        %v3620 = vpack.c.b16 %v3076, %v3068
        %v3621 = vpack.c.b16 %v3077, %v3069
        %v3622 = vpack.c.b16 %v3086, %v3078
        %v3623 = vpack.c.b16 %v3087, %v3079
        %v3624 = vpack.c.b16 %v3088, %v3080
        %v3625 = vpack.c.b16 %v3089, %v3081
        %v3626 = vpack.c.b16 %v3090, %v3082
        %v3627 = vpack.c.b16 %v3091, %v3083
        %v3628 = vpack.c.b16 %v3092, %v3084
        %v3629 = vpack.c.b16 %v3093, %v3085
        %v3630 = vpack.c.b16 %v3102, %v3094
        %v3631 = vpack.c.b16 %v3103, %v3095
        %v3632 = vpack.c.b16 %v3104, %v3096
        %v3633 = vpack.c.b16 %v3105, %v3097
        %v3634 = vpack.c.b16 %v3106, %v3098
        %v3635 = vpack.c.b16 %v3107, %v3099
        %v3636 = vpack.c.b16 %v3108, %v3100
        %v3637 = vpack.c.b16 %v3109, %v3101
        %v3638 = vpack.c.b16 %v3118, %v3110
        %v3639 = vpack.c.b16 %v3119, %v3111
        %v3640 = vpack.c.b16 %v3120, %v3112
        %v3641 = vpack.c.b16 %v3121, %v3113
        %v3642 = vpack.c.b16 %v3122, %v3114
        %v3643 = vpack.c.b16 %v3123, %v3115
        %v3644 = vpack.c.b16 %v3124, %v3116
        %v3645 = vpack.c.b16 %v3125, %v3117
        %v3646 = vpack.c.b16 %v3134, %v3126
        %v3647 = vpack.c.b16 %v3135, %v3127
        %v3648 = vpack.c.b16 %v3136, %v3128
        %v3649 = vpack.c.b16 %v3137, %v3129
        %v3650 = vpack.c.b16 %v3138, %v3130
        %v3651 = vpack.c.b16 %v3139, %v3131
        %v3652 = vpack.c.b16 %v3140, %v3132
        %v3653 = vpack.c.b16 %v3141, %v3133
        %4166 = vmatprep.subr.bf16.mxu0 %v3143
        %4167 = vmatpush1.bf16.msra.mxu0 %v3142
        %4168 = vmatprep.subr.bf16.mxu0 %v3151
        %4169 = vmatpush1.bf16.msra.mxu0 %v3150
        %4170 = vmatprep.subr.bf16.mxu0 %v3159
        %4171 = vmatpush1.bf16.msra.mxu0 %v3158
        %4172 = vmatprep.subr.bf16.mxu0 %v3167
        %4173 = vmatpush1.bf16.msra.mxu0 %v3166
        %4174 = vmatprep.subr.bf16.mxu0 %v3175
        %4175 = vmatpush1.bf16.msra.mxu0 %v3174
        %4176 = vmatprep.subr.bf16.mxu0 %v3183
        %4177 = vmatpush1.bf16.msra.mxu0 %v3182
        %4178 = vmatprep.subr.bf16.mxu0 %v3191
        %4179 = vmatpush1.bf16.msra.mxu0 %v3190
        %4180 = vmatprep.subr.bf16.mxu0 %v3199
        %4181 = vmatpush1.bf16.msra.mxu0 %v3198
        %4182 = vmatprep.subr.bf16.mxu0 %v3207
        %4183 = vmatpush1.bf16.msra.mxu0 %v3206
        %4184 = vmatprep.subr.bf16.mxu0 %v3215
        %4185 = vmatpush1.bf16.msra.mxu0 %v3214
        %4186 = vmatprep.subr.bf16.mxu0 %v3223
        %4187 = vmatpush1.bf16.msra.mxu0 %v3222
        %4188 = vmatprep.subr.bf16.mxu0 %v3231
        %4189 = vmatpush1.bf16.msra.mxu0 %v3230
        %4190 = vmatprep.subr.bf16.mxu0 %v3239
        %4191 = vmatpush1.bf16.msra.mxu0 %v3238
        %4192 = vmatprep.subr.bf16.mxu0 %v3247
        %4193 = vmatpush1.bf16.msra.mxu0 %v3246
        %4194 = vmatprep.subr.bf16.mxu0 %v3255
        %4195 = vmatpush1.bf16.msra.mxu0 %v3254
        %4196 = vmatprep.subr.bf16.mxu0 %v3263
        %4197 = vmatpush1.bf16.msra.mxu0 %v3262
        %4198 = vmatprep.mubr.bf16.mxu0 %v1045
        %4199 = vmatmul.mubr.bf16.gmra.mrb[0].mxu0 %v1044
        %v4200 = vpop.f32.mrb[0].mxu0
        %v4201 = vadd.f32 %v1569, %v4200
        %v4202 = vpop.f32.mrb[0].mxu0
        %v4203 = vadd.f32 %v1573, %v4202
        %v4204 = vpop.f32.mrb[0].mxu0
        %v4205 = vadd.f32 %v1569, %v4204
        %v4206 = vpop.f32.mrb[0].mxu0
        %v4207 = vadd.f32 %v1573, %v4206
        %4208 = vdwg.mxu0
        %4209 = vmatprep.subr.bf16.mxu0 %v3271
        %4210 = vmatpush1.bf16.msra.mxu0 %v3270
        %4211 = vmatprep.subr.bf16.mxu0 %v3279
        %4212 = vmatpush1.bf16.msra.mxu0 %v3278
        %4213 = vmatprep.subr.bf16.mxu0 %v3287
        %4214 = vmatpush1.bf16.msra.mxu0 %v3286
        %4215 = vmatprep.subr.bf16.mxu0 %v3295
        %4216 = vmatpush1.bf16.msra.mxu0 %v3294
        %4217 = vmatprep.subr.bf16.mxu0 %v3303
        %4218 = vmatpush1.bf16.msra.mxu0 %v3302
        %4219 = vmatprep.subr.bf16.mxu0 %v3311
        %4220 = vmatpush1.bf16.msra.mxu0 %v3310
        %4221 = vmatprep.subr.bf16.mxu0 %v3319
        %4222 = vmatpush1.bf16.msra.mxu0 %v3318
        %4223 = vmatprep.subr.bf16.mxu0 %v3327
        %4224 = vmatpush1.bf16.msra.mxu0 %v3326
        %4225 = vmatprep.subr.bf16.mxu0 %v3335
        %4226 = vmatpush1.bf16.msra.mxu0 %v3334
        %4227 = vmatprep.subr.bf16.mxu0 %v3343
        %4228 = vmatpush1.bf16.msra.mxu0 %v3342
        %4229 = vmatprep.subr.bf16.mxu0 %v3351
        %4230 = vmatpush1.bf16.msra.mxu0 %v3350
        %4231 = vmatprep.subr.bf16.mxu0 %v3359
        %4232 = vmatpush1.bf16.msra.mxu0 %v3358
        %4233 = vmatprep.subr.bf16.mxu0 %v3367
        %4234 = vmatpush1.bf16.msra.mxu0 %v3366
        %4235 = vmatprep.subr.bf16.mxu0 %v3375
        %4236 = vmatpush1.bf16.msra.mxu0 %v3374
        %4237 = vmatprep.subr.bf16.mxu0 %v3383
        %4238 = vmatpush1.bf16.msra.mxu0 %v3382
        %4239 = vmatprep.subr.bf16.mxu0 %v3391
        %4240 = vmatpush1.bf16.msra.mxu0 %v3390
        %4241 = vmatprep.mubr.bf16.mxu0 %v1047
        %4242 = vmatmul.mubr.bf16.gmra.mrb[0].mxu0 %v1046
        %v4243 = vpop.f32.mrb[0].mxu0
        %v4244 = vadd.f32 %v4201, %v4243
        %v4245 = vpop.f32.mrb[0].mxu0
        %v4246 = vadd.f32 %v4203, %v4245
        %v4247 = vpop.f32.mrb[0].mxu0
        %v4248 = vadd.f32 %v4205, %v4247
        %v4249 = vpop.f32.mrb[0].mxu0
        %v4250 = vadd.f32 %v4207, %v4249
        %4251 = vdwg.mxu0
        %4252 = vmatprep.subr.bf16.mxu0 %v3399
        %4253 = vmatpush1.bf16.msra.mxu0 %v3398
        %4254 = vmatprep.subr.bf16.mxu0 %v3407
        %4255 = vmatpush1.bf16.msra.mxu0 %v3406
        %4256 = vmatprep.subr.bf16.mxu0 %v3415
        %4257 = vmatpush1.bf16.msra.mxu0 %v3414
        %4258 = vmatprep.subr.bf16.mxu0 %v3423
        %4259 = vmatpush1.bf16.msra.mxu0 %v3422
        %4260 = vmatprep.subr.bf16.mxu0 %v3431
        %4261 = vmatpush1.bf16.msra.mxu0 %v3430
        %4262 = vmatprep.subr.bf16.mxu0 %v3439
        %4263 = vmatpush1.bf16.msra.mxu0 %v3438
        %4264 = vmatprep.subr.bf16.mxu0 %v3447
        %4265 = vmatpush1.bf16.msra.mxu0 %v3446
        %4266 = vmatprep.subr.bf16.mxu0 %v3455
        %4267 = vmatpush1.bf16.msra.mxu0 %v3454
        %4268 = vmatprep.subr.bf16.mxu0 %v3463
        %4269 = vmatpush1.bf16.msra.mxu0 %v3462
        %4270 = vmatprep.subr.bf16.mxu0 %v3471
        %4271 = vmatpush1.bf16.msra.mxu0 %v3470
        %4272 = vmatprep.subr.bf16.mxu0 %v3479
        %4273 = vmatpush1.bf16.msra.mxu0 %v3478
        %4274 = vmatprep.subr.bf16.mxu0 %v3487
        %4275 = vmatpush1.bf16.msra.mxu0 %v3486
        %4276 = vmatprep.subr.bf16.mxu0 %v3495
        %4277 = vmatpush1.bf16.msra.mxu0 %v3494
        %4278 = vmatprep.subr.bf16.mxu0 %v3503
        %4279 = vmatpush1.bf16.msra.mxu0 %v3502
        %4280 = vmatprep.subr.bf16.mxu0 %v3511
        %4281 = vmatpush1.bf16.msra.mxu0 %v3510
        %4282 = vmatprep.subr.bf16.mxu0 %v3519
        %4283 = vmatpush1.bf16.msra.mxu0 %v3518
        %4284 = vmatprep.mubr.bf16.mxu0 %v1049
        %4285 = vmatmul.mubr.bf16.gmra.mrb[0].mxu0 %v1048
        %v4286 = vpop.f32.mrb[0].mxu0
        %v4287 = vadd.f32 %v4244, %v4286
        %v4288 = vpop.f32.mrb[0].mxu0
        %v4289 = vadd.f32 %v4246, %v4288
        %v4290 = vpop.f32.mrb[0].mxu0
        %v4291 = vadd.f32 %v4248, %v4290
        %v4292 = vpop.f32.mrb[0].mxu0
        %v4293 = vadd.f32 %v4250, %v4292
        %4294 = vdwg.mxu0
        %4295 = vmatprep.subr.bf16.mxu0 %v3527
        %4296 = vmatpush1.bf16.msra.mxu0 %v3526
        %4297 = vmatprep.subr.bf16.mxu0 %v3535
        %4298 = vmatpush1.bf16.msra.mxu0 %v3534
        %4299 = vmatprep.subr.bf16.mxu0 %v3543
        %4300 = vmatpush1.bf16.msra.mxu0 %v3542
        %4301 = vmatprep.subr.bf16.mxu0 %v3551
        %4302 = vmatpush1.bf16.msra.mxu0 %v3550
        %4303 = vmatprep.subr.bf16.mxu0 %v3559
        %4304 = vmatpush1.bf16.msra.mxu0 %v3558
        %4305 = vmatprep.subr.bf16.mxu0 %v3567
        %4306 = vmatpush1.bf16.msra.mxu0 %v3566
        %4307 = vmatprep.subr.bf16.mxu0 %v3575
        %4308 = vmatpush1.bf16.msra.mxu0 %v3574
        %4309 = vmatprep.subr.bf16.mxu0 %v3583
        %4310 = vmatpush1.bf16.msra.mxu0 %v3582
        %4311 = vmatprep.subr.bf16.mxu0 %v3591
        %4312 = vmatpush1.bf16.msra.mxu0 %v3590
        %4313 = vmatprep.subr.bf16.mxu0 %v3599
        %4314 = vmatpush1.bf16.msra.mxu0 %v3598
        %4315 = vmatprep.subr.bf16.mxu0 %v3607
        %4316 = vmatpush1.bf16.msra.mxu0 %v3606
        %4317 = vmatprep.subr.bf16.mxu0 %v3615
        %4318 = vmatpush1.bf16.msra.mxu0 %v3614
        %4319 = vmatprep.subr.bf16.mxu0 %v3623
        %4320 = vmatpush1.bf16.msra.mxu0 %v3622
        %4321 = vmatprep.subr.bf16.mxu0 %v3631
        %4322 = vmatpush1.bf16.msra.mxu0 %v3630
        %4323 = vmatprep.subr.bf16.mxu0 %v3639
        %4324 = vmatpush1.bf16.msra.mxu0 %v3638
        %4325 = vmatprep.subr.bf16.mxu0 %v3647
        %4326 = vmatpush1.bf16.msra.mxu0 %v3646
        %4327 = vmatprep.mubr.bf16.mxu0 %v1051
        %4328 = vmatmul.mubr.bf16.gmra.mrb[0].mxu0 %v1050
        %v4329 = vpop.f32.mrb[0].mxu0
        %v4330 = vadd.f32 %v4287, %v4329
        %v4331 = vpop.f32.mrb[0].mxu0
        %v4332 = vadd.f32 %v4289, %v4331
        %v4333 = vpop.f32.mrb[0].mxu0
        %v4334 = vadd.f32 %v4291, %v4333
        %v4335 = vpop.f32.mrb[0].mxu0
        %v4336 = vadd.f32 %v4293, %v4335
        %4337 = vdwg.mxu0
        %4338 = vmatprep.subr.bf16.mxu0 %v3145
        %4339 = vmatpush1.bf16.msra.mxu0 %v3144
        %4340 = vmatprep.subr.bf16.mxu0 %v3153
        %4341 = vmatpush1.bf16.msra.mxu0 %v3152
        %4342 = vmatprep.subr.bf16.mxu0 %v3161
        %4343 = vmatpush1.bf16.msra.mxu0 %v3160
        %4344 = vmatprep.subr.bf16.mxu0 %v3169
        %4345 = vmatpush1.bf16.msra.mxu0 %v3168
        %4346 = vmatprep.subr.bf16.mxu0 %v3177
        %4347 = vmatpush1.bf16.msra.mxu0 %v3176
        %4348 = vmatprep.subr.bf16.mxu0 %v3185
        %4349 = vmatpush1.bf16.msra.mxu0 %v3184
        %4350 = vmatprep.subr.bf16.mxu0 %v3193
        %4351 = vmatpush1.bf16.msra.mxu0 %v3192
        %4352 = vmatprep.subr.bf16.mxu0 %v3201
        %4353 = vmatpush1.bf16.msra.mxu0 %v3200
        %4354 = vmatprep.subr.bf16.mxu0 %v3209
        %4355 = vmatpush1.bf16.msra.mxu0 %v3208
        %4356 = vmatprep.subr.bf16.mxu0 %v3217
        %4357 = vmatpush1.bf16.msra.mxu0 %v3216
        %4358 = vmatprep.subr.bf16.mxu0 %v3225
        %4359 = vmatpush1.bf16.msra.mxu0 %v3224
        %4360 = vmatprep.subr.bf16.mxu0 %v3233
        %4361 = vmatpush1.bf16.msra.mxu0 %v3232
        %4362 = vmatprep.subr.bf16.mxu0 %v3241
        %4363 = vmatpush1.bf16.msra.mxu0 %v3240
        %4364 = vmatprep.subr.bf16.mxu0 %v3249
        %4365 = vmatpush1.bf16.msra.mxu0 %v3248
        %4366 = vmatprep.subr.bf16.mxu0 %v3257
        %4367 = vmatpush1.bf16.msra.mxu0 %v3256
        %4368 = vmatprep.subr.bf16.mxu0 %v3265
        %4369 = vmatpush1.bf16.msra.mxu0 %v3264
        %4370 = vmatprep.mubr.bf16.mxu0 %v1045
        %4371 = vmatmul.mubr.bf16.gmra.mrb[0].mxu0 %v1044
        %v4372 = vpop.f32.mrb[0].mxu0
        %v4373 = vadd.f32 %v1577, %v4372
        %v4374 = vpop.f32.mrb[0].mxu0
        %v4375 = vadd.f32 %v1581, %v4374
        %v4376 = vpop.f32.mrb[0].mxu0
        %v4377 = vadd.f32 %v1577, %v4376
        %v4378 = vpop.f32.mrb[0].mxu0
        %v4379 = vadd.f32 %v1581, %v4378
        %4380 = vdwg.mxu0
        %4381 = vmatprep.subr.bf16.mxu0 %v3273
        %4382 = vmatpush1.bf16.msra.mxu0 %v3272
        %4383 = vmatprep.subr.bf16.mxu0 %v3281
        %4384 = vmatpush1.bf16.msra.mxu0 %v3280
        %4385 = vmatprep.subr.bf16.mxu0 %v3289
        %4386 = vmatpush1.bf16.msra.mxu0 %v3288
        %4387 = vmatprep.subr.bf16.mxu0 %v3297
        %4388 = vmatpush1.bf16.msra.mxu0 %v3296
        %4389 = vmatprep.subr.bf16.mxu0 %v3305
        %4390 = vmatpush1.bf16.msra.mxu0 %v3304
        %4391 = vmatprep.subr.bf16.mxu0 %v3313
        %4392 = vmatpush1.bf16.msra.mxu0 %v3312
        %4393 = vmatprep.subr.bf16.mxu0 %v3321
        %4394 = vmatpush1.bf16.msra.mxu0 %v3320
        %4395 = vmatprep.subr.bf16.mxu0 %v3329
        %4396 = vmatpush1.bf16.msra.mxu0 %v3328
        %4397 = vmatprep.subr.bf16.mxu0 %v3337
        %4398 = vmatpush1.bf16.msra.mxu0 %v3336
        %4399 = vmatprep.subr.bf16.mxu0 %v3345
        %4400 = vmatpush1.bf16.msra.mxu0 %v3344
        %4401 = vmatprep.subr.bf16.mxu0 %v3353
        %4402 = vmatpush1.bf16.msra.mxu0 %v3352
        %4403 = vmatprep.subr.bf16.mxu0 %v3361
        %4404 = vmatpush1.bf16.msra.mxu0 %v3360
        %4405 = vmatprep.subr.bf16.mxu0 %v3369
        %4406 = vmatpush1.bf16.msra.mxu0 %v3368
        %4407 = vmatprep.subr.bf16.mxu0 %v3377
        %4408 = vmatpush1.bf16.msra.mxu0 %v3376
        %4409 = vmatprep.subr.bf16.mxu0 %v3385
        %4410 = vmatpush1.bf16.msra.mxu0 %v3384
        %4411 = vmatprep.subr.bf16.mxu0 %v3393
        %4412 = vmatpush1.bf16.msra.mxu0 %v3392
        %4413 = vmatprep.mubr.bf16.mxu0 %v1047
        %4414 = vmatmul.mubr.bf16.gmra.mrb[0].mxu0 %v1046
        %v4415 = vpop.f32.mrb[0].mxu0
        %v4416 = vadd.f32 %v4373, %v4415
        %v4417 = vpop.f32.mrb[0].mxu0
        %v4418 = vadd.f32 %v4375, %v4417
        %v4419 = vpop.f32.mrb[0].mxu0
        %v4420 = vadd.f32 %v4377, %v4419
        %v4421 = vpop.f32.mrb[0].mxu0
        %v4422 = vadd.f32 %v4379, %v4421
        %4423 = vdwg.mxu0
        %4424 = vmatprep.subr.bf16.mxu0 %v3401
        %4425 = vmatpush1.bf16.msra.mxu0 %v3400
        %4426 = vmatprep.subr.bf16.mxu0 %v3409
        %4427 = vmatpush1.bf16.msra.mxu0 %v3408
        %4428 = vmatprep.subr.bf16.mxu0 %v3417
        %4429 = vmatpush1.bf16.msra.mxu0 %v3416
        %4430 = vmatprep.subr.bf16.mxu0 %v3425
        %4431 = vmatpush1.bf16.msra.mxu0 %v3424
        %4432 = vmatprep.subr.bf16.mxu0 %v3433
        %4433 = vmatpush1.bf16.msra.mxu0 %v3432
        %4434 = vmatprep.subr.bf16.mxu0 %v3441
        %4435 = vmatpush1.bf16.msra.mxu0 %v3440
        %4436 = vmatprep.subr.bf16.mxu0 %v3449
        %4437 = vmatpush1.bf16.msra.mxu0 %v3448
        %4438 = vmatprep.subr.bf16.mxu0 %v3457
        %4439 = vmatpush1.bf16.msra.mxu0 %v3456
        %4440 = vmatprep.subr.bf16.mxu0 %v3465
        %4441 = vmatpush1.bf16.msra.mxu0 %v3464
        %4442 = vmatprep.subr.bf16.mxu0 %v3473
        %4443 = vmatpush1.bf16.msra.mxu0 %v3472
        %4444 = vmatprep.subr.bf16.mxu0 %v3481
        %4445 = vmatpush1.bf16.msra.mxu0 %v3480
        %4446 = vmatprep.subr.bf16.mxu0 %v3489
        %4447 = vmatpush1.bf16.msra.mxu0 %v3488
        %4448 = vmatprep.subr.bf16.mxu0 %v3497
        %4449 = vmatpush1.bf16.msra.mxu0 %v3496
        %4450 = vmatprep.subr.bf16.mxu0 %v3505
        %4451 = vmatpush1.bf16.msra.mxu0 %v3504
        %4452 = vmatprep.subr.bf16.mxu0 %v3513
        %4453 = vmatpush1.bf16.msra.mxu0 %v3512
        %4454 = vmatprep.subr.bf16.mxu0 %v3521
        %4455 = vmatpush1.bf16.msra.mxu0 %v3520
        %4456 = vmatprep.mubr.bf16.mxu0 %v1049
        %4457 = vmatmul.mubr.bf16.gmra.mrb[0].mxu0 %v1048
        %v4458 = vpop.f32.mrb[0].mxu0
        %v4459 = vadd.f32 %v4416, %v4458
        %v4460 = vpop.f32.mrb[0].mxu0
        %v4461 = vadd.f32 %v4418, %v4460
        %v4462 = vpop.f32.mrb[0].mxu0
        %v4463 = vadd.f32 %v4420, %v4462
        %v4464 = vpop.f32.mrb[0].mxu0
        %v4465 = vadd.f32 %v4422, %v4464
        %4466 = vdwg.mxu0
        %4467 = vmatprep.subr.bf16.mxu0 %v3529
        %4468 = vmatpush1.bf16.msra.mxu0 %v3528
        %4469 = vmatprep.subr.bf16.mxu0 %v3537
        %4470 = vmatpush1.bf16.msra.mxu0 %v3536
        %4471 = vmatprep.subr.bf16.mxu0 %v3545
        %4472 = vmatpush1.bf16.msra.mxu0 %v3544
        %4473 = vmatprep.subr.bf16.mxu0 %v3553
        %4474 = vmatpush1.bf16.msra.mxu0 %v3552
        %4475 = vmatprep.subr.bf16.mxu0 %v3561
        %4476 = vmatpush1.bf16.msra.mxu0 %v3560
        %4477 = vmatprep.subr.bf16.mxu0 %v3569
        %4478 = vmatpush1.bf16.msra.mxu0 %v3568
        %4479 = vmatprep.subr.bf16.mxu0 %v3577
        %4480 = vmatpush1.bf16.msra.mxu0 %v3576
        %4481 = vmatprep.subr.bf16.mxu0 %v3585
        %4482 = vmatpush1.bf16.msra.mxu0 %v3584
        %4483 = vmatprep.subr.bf16.mxu0 %v3593
        %4484 = vmatpush1.bf16.msra.mxu0 %v3592
        %4485 = vmatprep.subr.bf16.mxu0 %v3601
        %4486 = vmatpush1.bf16.msra.mxu0 %v3600
        %4487 = vmatprep.subr.bf16.mxu0 %v3609
        %4488 = vmatpush1.bf16.msra.mxu0 %v3608
        %4489 = vmatprep.subr.bf16.mxu0 %v3617
        %4490 = vmatpush1.bf16.msra.mxu0 %v3616
        %4491 = vmatprep.subr.bf16.mxu0 %v3625
        %4492 = vmatpush1.bf16.msra.mxu0 %v3624
        %4493 = vmatprep.subr.bf16.mxu0 %v3633
        %4494 = vmatpush1.bf16.msra.mxu0 %v3632
        %4495 = vmatprep.subr.bf16.mxu0 %v3641
        %4496 = vmatpush1.bf16.msra.mxu0 %v3640
        %4497 = vmatprep.subr.bf16.mxu0 %v3649
        %4498 = vmatpush1.bf16.msra.mxu0 %v3648
        %4499 = vmatprep.mubr.bf16.mxu0 %v1051
        %4500 = vmatmul.mubr.bf16.gmra.mrb[0].mxu0 %v1050
        %v4501 = vpop.f32.mrb[0].mxu0
        %v4502 = vadd.f32 %v4459, %v4501
        %v4503 = vpop.f32.mrb[0].mxu0
        %v4504 = vadd.f32 %v4461, %v4503
        %v4505 = vpop.f32.mrb[0].mxu0
        %v4506 = vadd.f32 %v4463, %v4505
        %v4507 = vpop.f32.mrb[0].mxu0
        %v4508 = vadd.f32 %v4465, %v4507
        %4509 = vdwg.mxu0
        %4510 = vmatprep.subr.bf16.mxu0 %v3147
        %4511 = vmatpush1.bf16.msra.mxu0 %v3146
        %4512 = vmatprep.subr.bf16.mxu0 %v3155
        %4513 = vmatpush1.bf16.msra.mxu0 %v3154
        %4514 = vmatprep.subr.bf16.mxu0 %v3163
        %4515 = vmatpush1.bf16.msra.mxu0 %v3162
        %4516 = vmatprep.subr.bf16.mxu0 %v3171
        %4517 = vmatpush1.bf16.msra.mxu0 %v3170
        %4518 = vmatprep.subr.bf16.mxu0 %v3179
        %4519 = vmatpush1.bf16.msra.mxu0 %v3178
        %4520 = vmatprep.subr.bf16.mxu0 %v3187
        %4521 = vmatpush1.bf16.msra.mxu0 %v3186
        %4522 = vmatprep.subr.bf16.mxu0 %v3195
        %4523 = vmatpush1.bf16.msra.mxu0 %v3194
        %4524 = vmatprep.subr.bf16.mxu0 %v3203
        %4525 = vmatpush1.bf16.msra.mxu0 %v3202
        %4526 = vmatprep.subr.bf16.mxu0 %v3211
        %4527 = vmatpush1.bf16.msra.mxu0 %v3210
        %4528 = vmatprep.subr.bf16.mxu0 %v3219
        %4529 = vmatpush1.bf16.msra.mxu0 %v3218
        %4530 = vmatprep.subr.bf16.mxu0 %v3227
        %4531 = vmatpush1.bf16.msra.mxu0 %v3226
        %4532 = vmatprep.subr.bf16.mxu0 %v3235
        %4533 = vmatpush1.bf16.msra.mxu0 %v3234
        %4534 = vmatprep.subr.bf16.mxu0 %v3243
        %4535 = vmatpush1.bf16.msra.mxu0 %v3242
        %4536 = vmatprep.subr.bf16.mxu0 %v3251
        %4537 = vmatpush1.bf16.msra.mxu0 %v3250
        %4538 = vmatprep.subr.bf16.mxu0 %v3259
        %4539 = vmatpush1.bf16.msra.mxu0 %v3258
        %4540 = vmatprep.subr.bf16.mxu0 %v3267
        %4541 = vmatpush1.bf16.msra.mxu0 %v3266
        %4542 = vmatprep.mubr.bf16.mxu0 %v1045
        %4543 = vmatmul.mubr.bf16.gmra.mrb[0].mxu0 %v1044
        %v4544 = vpop.f32.mrb[0].mxu0
        %v4545 = vadd.f32 %v1585, %v4544
        %v4546 = vpop.f32.mrb[0].mxu0
        %v4547 = vadd.f32 %v1589, %v4546
        %v4548 = vpop.f32.mrb[0].mxu0
        %v4549 = vadd.f32 %v1585, %v4548
        %v4550 = vpop.f32.mrb[0].mxu0
        %v4551 = vadd.f32 %v1589, %v4550
        %4552 = vdwg.mxu0
        %4553 = vmatprep.subr.bf16.mxu0 %v3275
        %4554 = vmatpush1.bf16.msra.mxu0 %v3274
        %4555 = vmatprep.subr.bf16.mxu0 %v3283
        %4556 = vmatpush1.bf16.msra.mxu0 %v3282
        %4557 = vmatprep.subr.bf16.mxu0 %v3291
        %4558 = vmatpush1.bf16.msra.mxu0 %v3290
        %4559 = vmatprep.subr.bf16.mxu0 %v3299
        %4560 = vmatpush1.bf16.msra.mxu0 %v3298
        %4561 = vmatprep.subr.bf16.mxu0 %v3307
        %4562 = vmatpush1.bf16.msra.mxu0 %v3306
        %4563 = vmatprep.subr.bf16.mxu0 %v3315
        %4564 = vmatpush1.bf16.msra.mxu0 %v3314
        %4565 = vmatprep.subr.bf16.mxu0 %v3323
        %4566 = vmatpush1.bf16.msra.mxu0 %v3322
        %4567 = vmatprep.subr.bf16.mxu0 %v3331
        %4568 = vmatpush1.bf16.msra.mxu0 %v3330
        %4569 = vmatprep.subr.bf16.mxu0 %v3339
        %4570 = vmatpush1.bf16.msra.mxu0 %v3338
        %4571 = vmatprep.subr.bf16.mxu0 %v3347
        %4572 = vmatpush1.bf16.msra.mxu0 %v3346
        %4573 = vmatprep.subr.bf16.mxu0 %v3355
        %4574 = vmatpush1.bf16.msra.mxu0 %v3354
        %4575 = vmatprep.subr.bf16.mxu0 %v3363
        %4576 = vmatpush1.bf16.msra.mxu0 %v3362
        %4577 = vmatprep.subr.bf16.mxu0 %v3371
        %4578 = vmatpush1.bf16.msra.mxu0 %v3370
        %4579 = vmatprep.subr.bf16.mxu0 %v3379
        %4580 = vmatpush1.bf16.msra.mxu0 %v3378
        %4581 = vmatprep.subr.bf16.mxu0 %v3387
        %4582 = vmatpush1.bf16.msra.mxu0 %v3386
        %4583 = vmatprep.subr.bf16.mxu0 %v3395
        %4584 = vmatpush1.bf16.msra.mxu0 %v3394
        %4585 = vmatprep.mubr.bf16.mxu0 %v1047
        %4586 = vmatmul.mubr.bf16.gmra.mrb[0].mxu0 %v1046
        %v4587 = vpop.f32.mrb[0].mxu0
        %v4588 = vadd.f32 %v4545, %v4587
        %v4589 = vpop.f32.mrb[0].mxu0
        %v4590 = vadd.f32 %v4547, %v4589
        %v4591 = vpop.f32.mrb[0].mxu0
        %v4592 = vadd.f32 %v4549, %v4591
        %v4593 = vpop.f32.mrb[0].mxu0
        %v4594 = vadd.f32 %v4551, %v4593
        %4595 = vdwg.mxu0
        %4596 = vmatprep.subr.bf16.mxu0 %v3403
        %4597 = vmatpush1.bf16.msra.mxu0 %v3402
        %4598 = vmatprep.subr.bf16.mxu0 %v3411
        %4599 = vmatpush1.bf16.msra.mxu0 %v3410
        %4600 = vmatprep.subr.bf16.mxu0 %v3419
        %4601 = vmatpush1.bf16.msra.mxu0 %v3418
        %4602 = vmatprep.subr.bf16.mxu0 %v3427
        %4603 = vmatpush1.bf16.msra.mxu0 %v3426
        %4604 = vmatprep.subr.bf16.mxu0 %v3435
        %4605 = vmatpush1.bf16.msra.mxu0 %v3434
        %4606 = vmatprep.subr.bf16.mxu0 %v3443
        %4607 = vmatpush1.bf16.msra.mxu0 %v3442
        %4608 = vmatprep.subr.bf16.mxu0 %v3451
        %4609 = vmatpush1.bf16.msra.mxu0 %v3450
        %4610 = vmatprep.subr.bf16.mxu0 %v3459
        %4611 = vmatpush1.bf16.msra.mxu0 %v3458
        %4612 = vmatprep.subr.bf16.mxu0 %v3467
        %4613 = vmatpush1.bf16.msra.mxu0 %v3466
        %4614 = vmatprep.subr.bf16.mxu0 %v3475
        %4615 = vmatpush1.bf16.msra.mxu0 %v3474
        %4616 = vmatprep.subr.bf16.mxu0 %v3483
        %4617 = vmatpush1.bf16.msra.mxu0 %v3482
        %4618 = vmatprep.subr.bf16.mxu0 %v3491
        %4619 = vmatpush1.bf16.msra.mxu0 %v3490
        %4620 = vmatprep.subr.bf16.mxu0 %v3499
        %4621 = vmatpush1.bf16.msra.mxu0 %v3498
        %4622 = vmatprep.subr.bf16.mxu0 %v3507
        %4623 = vmatpush1.bf16.msra.mxu0 %v3506
        %4624 = vmatprep.subr.bf16.mxu0 %v3515
        %4625 = vmatpush1.bf16.msra.mxu0 %v3514
        %4626 = vmatprep.subr.bf16.mxu0 %v3523
        %4627 = vmatpush1.bf16.msra.mxu0 %v3522
        %4628 = vmatprep.mubr.bf16.mxu0 %v1049
        %4629 = vmatmul.mubr.bf16.gmra.mrb[0].mxu0 %v1048
        %v4630 = vpop.f32.mrb[0].mxu0
        %v4631 = vadd.f32 %v4588, %v4630
        %v4632 = vpop.f32.mrb[0].mxu0
        %v4633 = vadd.f32 %v4590, %v4632
        %v4634 = vpop.f32.mrb[0].mxu0
        %v4635 = vadd.f32 %v4592, %v4634
        %v4636 = vpop.f32.mrb[0].mxu0
        %v4637 = vadd.f32 %v4594, %v4636
        %4638 = vdwg.mxu0
        %4639 = vmatprep.subr.bf16.mxu0 %v3531
        %4640 = vmatpush1.bf16.msra.mxu0 %v3530
        %4641 = vmatprep.subr.bf16.mxu0 %v3539
        %4642 = vmatpush1.bf16.msra.mxu0 %v3538
        %4643 = vmatprep.subr.bf16.mxu0 %v3547
        %4644 = vmatpush1.bf16.msra.mxu0 %v3546
        %4645 = vmatprep.subr.bf16.mxu0 %v3555
        %4646 = vmatpush1.bf16.msra.mxu0 %v3554
        %4647 = vmatprep.subr.bf16.mxu0 %v3563
        %4648 = vmatpush1.bf16.msra.mxu0 %v3562
        %4649 = vmatprep.subr.bf16.mxu0 %v3571
        %4650 = vmatpush1.bf16.msra.mxu0 %v3570
        %4651 = vmatprep.subr.bf16.mxu0 %v3579
        %4652 = vmatpush1.bf16.msra.mxu0 %v3578
        %4653 = vmatprep.subr.bf16.mxu0 %v3587
        %4654 = vmatpush1.bf16.msra.mxu0 %v3586
        %4655 = vmatprep.subr.bf16.mxu0 %v3595
        %4656 = vmatpush1.bf16.msra.mxu0 %v3594
        %4657 = vmatprep.subr.bf16.mxu0 %v3603
        %4658 = vmatpush1.bf16.msra.mxu0 %v3602
        %4659 = vmatprep.subr.bf16.mxu0 %v3611
        %4660 = vmatpush1.bf16.msra.mxu0 %v3610
        %4661 = vmatprep.subr.bf16.mxu0 %v3619
        %4662 = vmatpush1.bf16.msra.mxu0 %v3618
        %4663 = vmatprep.subr.bf16.mxu0 %v3627
        %4664 = vmatpush1.bf16.msra.mxu0 %v3626
        %4665 = vmatprep.subr.bf16.mxu0 %v3635
        %4666 = vmatpush1.bf16.msra.mxu0 %v3634
        %4667 = vmatprep.subr.bf16.mxu0 %v3643
        %4668 = vmatpush1.bf16.msra.mxu0 %v3642
        %4669 = vmatprep.subr.bf16.mxu0 %v3651
        %4670 = vmatpush1.bf16.msra.mxu0 %v3650
        %4671 = vmatprep.mubr.bf16.mxu0 %v1051
        %4672 = vmatmul.mubr.bf16.gmra.mrb[0].mxu0 %v1050
        %v4673 = vpop.f32.mrb[0].mxu0
        %v4674 = vadd.f32 %v4631, %v4673
        %v4675 = vpop.f32.mrb[0].mxu0
        %v4676 = vadd.f32 %v4633, %v4675
        %v4677 = vpop.f32.mrb[0].mxu0
        %v4678 = vadd.f32 %v4635, %v4677
        %v4679 = vpop.f32.mrb[0].mxu0
        %v4680 = vadd.f32 %v4637, %v4679
        %4681 = vdwg.mxu0
        %4682 = vmatprep.subr.bf16.mxu0 %v3149
        %4683 = vmatpush1.bf16.msra.mxu0 %v3148
        %4684 = vmatprep.subr.bf16.mxu0 %v3157
        %4685 = vmatpush1.bf16.msra.mxu0 %v3156
        %4686 = vmatprep.subr.bf16.mxu0 %v3165
        %4687 = vmatpush1.bf16.msra.mxu0 %v3164
        %4688 = vmatprep.subr.bf16.mxu0 %v3173
        %4689 = vmatpush1.bf16.msra.mxu0 %v3172
        %4690 = vmatprep.subr.bf16.mxu0 %v3181
        %4691 = vmatpush1.bf16.msra.mxu0 %v3180
        %4692 = vmatprep.subr.bf16.mxu0 %v3189
        %4693 = vmatpush1.bf16.msra.mxu0 %v3188
        %4694 = vmatprep.subr.bf16.mxu0 %v3197
        %4695 = vmatpush1.bf16.msra.mxu0 %v3196
        %4696 = vmatprep.subr.bf16.mxu0 %v3205
        %4697 = vmatpush1.bf16.msra.mxu0 %v3204
        %4698 = vmatprep.subr.bf16.mxu0 %v3213
        %4699 = vmatpush1.bf16.msra.mxu0 %v3212
        %4700 = vmatprep.subr.bf16.mxu0 %v3221
        %4701 = vmatpush1.bf16.msra.mxu0 %v3220
        %4702 = vmatprep.subr.bf16.mxu0 %v3229
        %4703 = vmatpush1.bf16.msra.mxu0 %v3228
        %4704 = vmatprep.subr.bf16.mxu0 %v3237
        %4705 = vmatpush1.bf16.msra.mxu0 %v3236
        %4706 = vmatprep.subr.bf16.mxu0 %v3245
        %4707 = vmatpush1.bf16.msra.mxu0 %v3244
        %4708 = vmatprep.subr.bf16.mxu0 %v3253
        %4709 = vmatpush1.bf16.msra.mxu0 %v3252
        %4710 = vmatprep.subr.bf16.mxu0 %v3261
        %4711 = vmatpush1.bf16.msra.mxu0 %v3260
        %4712 = vmatprep.subr.bf16.mxu0 %v3269
        %4713 = vmatpush1.bf16.msra.mxu0 %v3268
        %4714 = vmatprep.mubr.bf16.mxu0 %v1045
        %4715 = vmatmul.mubr.bf16.gmra.mrb[0].mxu0 %v1044
        %v4716 = vpop.f32.mrb[0].mxu0
        %v4717 = vadd.f32 %v1593, %v4716
        %v4718 = vpop.f32.mrb[0].mxu0
        %v4719 = vadd.f32 %v1597, %v4718
        %v4720 = vpop.f32.mrb[0].mxu0
        %v4721 = vadd.f32 %v1593, %v4720
        %v4722 = vpop.f32.mrb[0].mxu0
        %v4723 = vadd.f32 %v1597, %v4722
        %4724 = vdwg.mxu0
        %4725 = vmatprep.subr.bf16.mxu0 %v3277
        %4726 = vmatpush1.bf16.msra.mxu0 %v3276
        %4727 = vmatprep.subr.bf16.mxu0 %v3285
        %4728 = vmatpush1.bf16.msra.mxu0 %v3284
        %4729 = vmatprep.subr.bf16.mxu0 %v3293
        %4730 = vmatpush1.bf16.msra.mxu0 %v3292
        %4731 = vmatprep.subr.bf16.mxu0 %v3301
        %4732 = vmatpush1.bf16.msra.mxu0 %v3300
        %4733 = vmatprep.subr.bf16.mxu0 %v3309
        %4734 = vmatpush1.bf16.msra.mxu0 %v3308
        %4735 = vmatprep.subr.bf16.mxu0 %v3317
        %4736 = vmatpush1.bf16.msra.mxu0 %v3316
        %4737 = vmatprep.subr.bf16.mxu0 %v3325
        %4738 = vmatpush1.bf16.msra.mxu0 %v3324
        %4739 = vmatprep.subr.bf16.mxu0 %v3333
        %4740 = vmatpush1.bf16.msra.mxu0 %v3332
        %4741 = vmatprep.subr.bf16.mxu0 %v3341
        %4742 = vmatpush1.bf16.msra.mxu0 %v3340
        %4743 = vmatprep.subr.bf16.mxu0 %v3349
        %4744 = vmatpush1.bf16.msra.mxu0 %v3348
        %4745 = vmatprep.subr.bf16.mxu0 %v3357
        %4746 = vmatpush1.bf16.msra.mxu0 %v3356
        %4747 = vmatprep.subr.bf16.mxu0 %v3365
        %4748 = vmatpush1.bf16.msra.mxu0 %v3364
        %4749 = vmatprep.subr.bf16.mxu0 %v3373
        %4750 = vmatpush1.bf16.msra.mxu0 %v3372
        %4751 = vmatprep.subr.bf16.mxu0 %v3381
        %4752 = vmatpush1.bf16.msra.mxu0 %v3380
        %4753 = vmatprep.subr.bf16.mxu0 %v3389
        %4754 = vmatpush1.bf16.msra.mxu0 %v3388
        %4755 = vmatprep.subr.bf16.mxu0 %v3397
        %4756 = vmatpush1.bf16.msra.mxu0 %v3396
        %4757 = vmatprep.mubr.bf16.mxu0 %v1047
        %4758 = vmatmul.mubr.bf16.gmra.mrb[0].mxu0 %v1046
        %v4759 = vpop.f32.mrb[0].mxu0
        %v4760 = vadd.f32 %v4717, %v4759
        %v4761 = vpop.f32.mrb[0].mxu0
        %v4762 = vadd.f32 %v4719, %v4761
        %v4763 = vpop.f32.mrb[0].mxu0
        %v4764 = vadd.f32 %v4721, %v4763
        %v4765 = vpop.f32.mrb[0].mxu0
        %v4766 = vadd.f32 %v4723, %v4765
        %4767 = vdwg.mxu0
        %4768 = vmatprep.subr.bf16.mxu0 %v3405
        %4769 = vmatpush1.bf16.msra.mxu0 %v3404
        %4770 = vmatprep.subr.bf16.mxu0 %v3413
        %4771 = vmatpush1.bf16.msra.mxu0 %v3412
        %4772 = vmatprep.subr.bf16.mxu0 %v3421
        %4773 = vmatpush1.bf16.msra.mxu0 %v3420
        %4774 = vmatprep.subr.bf16.mxu0 %v3429
        %4775 = vmatpush1.bf16.msra.mxu0 %v3428
        %4776 = vmatprep.subr.bf16.mxu0 %v3437
        %4777 = vmatpush1.bf16.msra.mxu0 %v3436
        %4778 = vmatprep.subr.bf16.mxu0 %v3445
        %4779 = vmatpush1.bf16.msra.mxu0 %v3444
        %4780 = vmatprep.subr.bf16.mxu0 %v3453
        %4781 = vmatpush1.bf16.msra.mxu0 %v3452
        %4782 = vmatprep.subr.bf16.mxu0 %v3461
        %4783 = vmatpush1.bf16.msra.mxu0 %v3460
        %4784 = vmatprep.subr.bf16.mxu0 %v3469
        %4785 = vmatpush1.bf16.msra.mxu0 %v3468
        %4786 = vmatprep.subr.bf16.mxu0 %v3477
        %4787 = vmatpush1.bf16.msra.mxu0 %v3476
        %4788 = vmatprep.subr.bf16.mxu0 %v3485
        %4789 = vmatpush1.bf16.msra.mxu0 %v3484
        %4790 = vmatprep.subr.bf16.mxu0 %v3493
        %4791 = vmatpush1.bf16.msra.mxu0 %v3492
        %4792 = vmatprep.subr.bf16.mxu0 %v3501
        %4793 = vmatpush1.bf16.msra.mxu0 %v3500
        %4794 = vmatprep.subr.bf16.mxu0 %v3509
        %4795 = vmatpush1.bf16.msra.mxu0 %v3508
        %4796 = vmatprep.subr.bf16.mxu0 %v3517
        %4797 = vmatpush1.bf16.msra.mxu0 %v3516
        %4798 = vmatprep.subr.bf16.mxu0 %v3525
        %4799 = vmatpush1.bf16.msra.mxu0 %v3524
        %4800 = vmatprep.mubr.bf16.mxu0 %v1049
        %4801 = vmatmul.mubr.bf16.gmra.mrb[0].mxu0 %v1048
        %v4802 = vpop.f32.mrb[0].mxu0
        %v4803 = vadd.f32 %v4760, %v4802
        %v4804 = vpop.f32.mrb[0].mxu0
        %v4805 = vadd.f32 %v4762, %v4804
        %v4806 = vpop.f32.mrb[0].mxu0
        %v4807 = vadd.f32 %v4764, %v4806
        %v4808 = vpop.f32.mrb[0].mxu0
        %v4809 = vadd.f32 %v4766, %v4808
        %4810 = vdwg.mxu0
        %4811 = vmatprep.subr.bf16.mxu0 %v3533
        %4812 = vmatpush1.bf16.msra.mxu0 %v3532
        %4813 = vmatprep.subr.bf16.mxu0 %v3541
        %4814 = vmatpush1.bf16.msra.mxu0 %v3540
        %4815 = vmatprep.subr.bf16.mxu0 %v3549
        %4816 = vmatpush1.bf16.msra.mxu0 %v3548
        %4817 = vmatprep.subr.bf16.mxu0 %v3557
        %4818 = vmatpush1.bf16.msra.mxu0 %v3556
        %4819 = vmatprep.subr.bf16.mxu0 %v3565
        %4820 = vmatpush1.bf16.msra.mxu0 %v3564
        %4821 = vmatprep.subr.bf16.mxu0 %v3573
        %4822 = vmatpush1.bf16.msra.mxu0 %v3572
        %4823 = vmatprep.subr.bf16.mxu0 %v3581
        %4824 = vmatpush1.bf16.msra.mxu0 %v3580
        %4825 = vmatprep.subr.bf16.mxu0 %v3589
        %4826 = vmatpush1.bf16.msra.mxu0 %v3588
        %4827 = vmatprep.subr.bf16.mxu0 %v3597
        %4828 = vmatpush1.bf16.msra.mxu0 %v3596
        %4829 = vmatprep.subr.bf16.mxu0 %v3605
        %4830 = vmatpush1.bf16.msra.mxu0 %v3604
        %4831 = vmatprep.subr.bf16.mxu0 %v3613
        %4832 = vmatpush1.bf16.msra.mxu0 %v3612
        %4833 = vmatprep.subr.bf16.mxu0 %v3621
        %4834 = vmatpush1.bf16.msra.mxu0 %v3620
        %4835 = vmatprep.subr.bf16.mxu0 %v3629
        %4836 = vmatpush1.bf16.msra.mxu0 %v3628
        %4837 = vmatprep.subr.bf16.mxu0 %v3637
        %4838 = vmatpush1.bf16.msra.mxu0 %v3636
        %4839 = vmatprep.subr.bf16.mxu0 %v3645
        %4840 = vmatpush1.bf16.msra.mxu0 %v3644
        %4841 = vmatprep.subr.bf16.mxu0 %v3653
        %4842 = vmatpush1.bf16.msra.mxu0 %v3652
        %4843 = vmatprep.mubr.bf16.mxu0 %v1051
        %4844 = vmatmul.mubr.bf16.gmra.mrb[0].mxu0 %v1050
        %v4845 = vpop.f32.mrb[0].mxu0
        %v4846 = vadd.f32 %v4803, %v4845
        %v4847 = vpop.f32.mrb[0].mxu0
        %v4848 = vadd.f32 %v4805, %v4847
        %v4849 = vpop.f32.mrb[0].mxu0
        %v4850 = vadd.f32 %v4807, %v4849
        %v4851 = vpop.f32.mrb[0].mxu0
        %v4852 = vadd.f32 %v4809, %v4851
        %4853 = vdwg.mxu0
        %v4854 = vmul.f32 %v4330, 0.5
        %v4855 = vmul.f32 %v4332, 0.5
        %v4856 = vmul.f32 %v4502, 0.5
        %v4857 = vmul.f32 %v4504, 0.5
        %v4858 = vmul.f32 %v4674, 0.5
        %v4859 = vmul.f32 %v4676, 0.5
        %v4860 = vmul.f32 %v4846, 0.5
        %v4861 = vmul.f32 %v4848, 0.5
        %v4862 = vmul.f32 %v4334, 0.5
        %v4863 = vmul.f32 %v4336, 0.5
        %v4864 = vmul.f32 %v4506, 0.5
        %v4865 = vmul.f32 %v4508, 0.5
        %v4866 = vmul.f32 %v4678, 0.5
        %v4867 = vmul.f32 %v4680, 0.5
        %v4868 = vmul.f32 %v4850, 0.5
        %v4869 = vmul.f32 %v4852, 0.5
        %v4870 = vmul.f32 %v4330, 0.70710677
        %v4871 = vmul.f32 %v4332, 0.70710677
        %v4872 = vmul.f32 %v4502, 0.70710677
        %v4873 = vmul.f32 %v4504, 0.70710677
        %v4874 = vmul.f32 %v4674, 0.70710677
        %v4875 = vmul.f32 %v4676, 0.70710677
        %v4876 = vmul.f32 %v4846, 0.70710677
        %v4877 = vmul.f32 %v4848, 0.70710677
        %v4878 = vmul.f32 %v4334, 0.70710677
        %v4879 = vmul.f32 %v4336, 0.70710677
        %v4880 = vmul.f32 %v4506, 0.70710677
        %v4881 = vmul.f32 %v4508, 0.70710677
        %v4882 = vmul.f32 %v4678, 0.70710677
        %v4883 = vmul.f32 %v4680, 0.70710677
        %v4884 = vmul.f32 %v4850, 0.70710677
        %v4885 = vmul.f32 %v4852, 0.70710677
        %v4886 = verf.f32.pop %v4870
        %v4887 = verf.f32.pop %v4871
        %v4888 = verf.f32.pop %v4872
        %v4889 = verf.f32.pop %v4873
        %v4890 = verf.f32.pop %v4874
        %v4891 = verf.f32.pop %v4875
        %v4892 = verf.f32.pop %v4876
        %v4893 = verf.f32.pop %v4877
        %v4894 = verf.f32.pop %v4878
        %v4895 = verf.f32.pop %v4879
        %v4896 = verf.f32.pop %v4880
        %v4897 = verf.f32.pop %v4881
        %v4898 = verf.f32.pop %v4882
        %v4899 = verf.f32.pop %v4883
        %v4900 = verf.f32.pop %v4884
        %v4901 = verf.f32.pop %v4885
        %v4902 = vadd.f32 %v4886, 1.0
        %v4903 = vadd.f32 %v4887, 1.0
        %v4904 = vadd.f32 %v4888, 1.0
        %v4905 = vadd.f32 %v4889, 1.0
        %v4906 = vadd.f32 %v4890, 1.0
        %v4907 = vadd.f32 %v4891, 1.0
        %v4908 = vadd.f32 %v4892, 1.0
        %v4909 = vadd.f32 %v4893, 1.0
        %v4910 = vadd.f32 %v4894, 1.0
        %v4911 = vadd.f32 %v4895, 1.0
        %v4912 = vadd.f32 %v4896, 1.0
        %v4913 = vadd.f32 %v4897, 1.0
        %v4914 = vadd.f32 %v4898, 1.0
        %v4915 = vadd.f32 %v4899, 1.0
        %v4916 = vadd.f32 %v4900, 1.0
        %v4917 = vadd.f32 %v4901, 1.0
        %v4918 = vmul.f32 %v4854, %v4902
        %v4919 = vmul.f32 %v4855, %v4903
        %v4920 = vmul.f32 %v4856, %v4904
        %v4921 = vmul.f32 %v4857, %v4905
        %v4922 = vmul.f32 %v4858, %v4906
        %v4923 = vmul.f32 %v4859, %v4907
        %v4924 = vmul.f32 %v4860, %v4908
        %v4925 = vmul.f32 %v4861, %v4909
        %v4926 = vmul.f32 %v4862, %v4910
        %v4927 = vmul.f32 %v4863, %v4911
        %v4928 = vmul.f32 %v4864, %v4912
        %v4929 = vmul.f32 %v4865, %v4913
        %v4930 = vmul.f32 %v4866, %v4914
        %v4931 = vmul.f32 %v4867, %v4915
        %v4932 = vmul.f32 %v4868, %v4916
        %v4933 = vmul.f32 %v4869, %v4917
        %v4934 = vld [vmem:[#allocation9] sm:$0xff]
        %v4935 = vunpack.c.l.bf16 %v4934
        %v4936 = vunpack.c.h.bf16 %v4934
        %v4939 = vlaneseq
        %v4940 = vshrl.u32 %v4939, 7
        %v4941 = vsub.s32 0, %v4940
        %v4942 = vrot.slane %v4935, %v4941
        %v4943 = vlaneseq
        %v4944 = vshrl.u32 %v4943, 7
        %v4945 = vsub.s32 2, %v4944
        %v4946 = vrot.slane %v4935, %v4945
        %v4947 = vlaneseq
        %v4948 = vshrl.u32 %v4947, 7
        %v4949 = vsub.s32 4, %v4948
        %v4950 = vrot.slane %v4935, %v4949
        %v4951 = vlaneseq
        %v4952 = vshrl.u32 %v4951, 7
        %v4953 = vsub.s32 6, %v4952
        %v4954 = vrot.slane %v4935, %v4953
        %v4955 = vlaneseq
        %v4956 = vshrl.u32 %v4955, 7
        %v4957 = vsub.s32 0, %v4956
        %v4958 = vrot.slane %v4936, %v4957
        %v4959 = vlaneseq
        %v4960 = vshrl.u32 %v4959, 7
        %v4961 = vsub.s32 2, %v4960
        %v4962 = vrot.slane %v4936, %v4961
        %v4963 = vlaneseq
        %v4964 = vshrl.u32 %v4963, 7
        %v4965 = vsub.s32 4, %v4964
        %v4966 = vrot.slane %v4936, %v4965
        %v4967 = vlaneseq
        %v4968 = vshrl.u32 %v4967, 7
        %v4969 = vsub.s32 6, %v4968
        %v4970 = vrot.slane %v4936, %v4969
        %v4979 = vlaneseq
        %v4980 = vshrl.u32 %v4979, 7
        %v4981 = vsub.s32 0, %v4980
        %v4982 = vrot.slane %v4942, %v4981
        %v4983 = vlaneseq
        %v4984 = vshrl.u32 %v4983, 7
        %v4985 = vsub.s32 0, %v4984
        %v4986 = vrot.slane %v4946, %v4985
        %v4987 = vlaneseq
        %v4988 = vshrl.u32 %v4987, 7
        %v4989 = vsub.s32 0, %v4988
        %v4990 = vrot.slane %v4950, %v4989
        %v4991 = vlaneseq
        %v4992 = vshrl.u32 %v4991, 7
        %v4993 = vsub.s32 0, %v4992
        %v4994 = vrot.slane %v4954, %v4993
        %v4995 = vlaneseq
        %v4996 = vshrl.u32 %v4995, 7
        %v4997 = vsub.s32 0, %v4996
        %v4998 = vrot.slane %v4958, %v4997
        %v4999 = vlaneseq
        %v5000 = vshrl.u32 %v4999, 7
        %v5001 = vsub.s32 0, %v5000
        %v5002 = vrot.slane %v4962, %v5001
        %v5003 = vlaneseq
        %v5004 = vshrl.u32 %v5003, 7
        %v5005 = vsub.s32 0, %v5004
        %v5006 = vrot.slane %v4966, %v5005
        %v5007 = vlaneseq
        %v5008 = vshrl.u32 %v5007, 7
        %v5009 = vsub.s32 0, %v5008
        %v5010 = vrot.slane %v4970, %v5009
        %v5011 = vmul.f32 %v4918, %v4982
        %v5012 = vmul.f32 %v4919, %v4986
        %v5013 = vmul.f32 %v4920, %v4990
        %v5014 = vmul.f32 %v4921, %v4994
        %v5015 = vmul.f32 %v4922, %v4998
        %v5016 = vmul.f32 %v4923, %v5002
        %v5017 = vmul.f32 %v4924, %v5006
        %v5018 = vmul.f32 %v4925, %v5010
        %v5019 = vmul.f32 %v4926, %v4982
        %v5020 = vmul.f32 %v4927, %v4986
        %v5021 = vmul.f32 %v4928, %v4990
        %v5022 = vmul.f32 %v4929, %v4994
        %v5023 = vmul.f32 %v4930, %v4998
        %v5024 = vmul.f32 %v4931, %v5002
        %v5025 = vmul.f32 %v4932, %v5006
        %v5026 = vmul.f32 %v4933, %v5010
        %v5027 = vadd.f32 %v5011, %v5012
        %v5028 = vadd.f32 %v5027, %v5013
        %v5029 = vadd.f32 %v5028, %v5014
        %v5030 = vadd.f32 %v5029, %v5015
        %v5031 = vadd.f32 %v5030, %v5016
        %v5032 = vadd.f32 %v5031, %v5017
        %v5033 = vadd.f32 %v5032, %v5018
        %5034 = vadd.xlane.f32.xlu0 %v5033
        %v5035 = vpop.xlane.xlu0 %5034
        %v5036 = vadd.f32 %v5019, %v5020
        %v5037 = vadd.f32 %v5036, %v5021
        %v5038 = vadd.f32 %v5037, %v5022
        %v5039 = vadd.f32 %v5038, %v5023
        %v5040 = vadd.f32 %v5039, %v5024
        %v5041 = vadd.f32 %v5040, %v5025
        %v5042 = vadd.f32 %v5041, %v5026
        %5043 = vadd.xlane.f32.xlu0 %v5042
        %v5044 = vpop.xlane.xlu0 %5043
        %v5045 = vld [vmem:[#allocation10] sm:$0x1]
        %v5047 = vlaneseq
        %v5048 = vshrl.u32 %v5047, 7
        %v5049 = vsub.s32 0, %v5048
        %v5050 = vrot.slane %v5045, %v5049
        %v5052 = vadd.f32 %v5035, %v5050
        %v5053 = vadd.f32 %v5044, %v5050
        %5054 = vst [vmem:[%s360] sm:$0xff] %v5052
        %5055 = vst [vmem:[%s360 + $0x8] sm:$0xff] %v5053
        %s5056 = smul.u32 2, %s22
        %p5057 = scmp.lt.s32.totalorder %s5056, 5
        %s5058 = scalar_select %p5057, %s5056, 5
        %s5059 = smul.addr %s5058, 8
        %s5060 = scalar_lea.vmem %s7, %s5059
        // Predicated region
        $region73: #{e_func_forward.1} parent=47 // pred_check
          %p5061 = pneg %p192
        $region74: #{e_func_forward.1} parent=47 // pred_check_branch
          %5063 = sbr.rel (%p5061) target = $region76
        $region75: #{e_func_forward.1} parent=47 // pred_region
          %s5064 = smul.u32 2, %s22
        $region76: #{e_func_forward.1} parent=47 // pred_fallthru
          _
      $region48: #{e_func_forward.1} parent=5 // pred_fallthru
        _
      %p5065 = scmp.le.s32.totalorder 2, %s17
      // Predicated region
      $region77: #{e_func_forward.1} parent=5 // pred_check
        %p5066 = pneg %p5065
      $region78: #{e_func_forward.1} parent=5 // pred_check_branch
        %5068 = sbr.rel (%p5066) target = $region80
      $region79: #{e_func_forward.1} parent=5 // pred_region
        %s5069 = ssub.s32 %s17, 2
        // Predicated region
        $region81: #{e_func_forward.1} parent=79 // pred_check
          %p5070 = pneg %p198
        $region82: #{e_func_forward.1} parent=79 // pred_check_branch
          %5072 = sbr.rel (%p5070) target = $region84
        $region83: #{e_func_forward.1} parent=79 // pred_region
          %s5073 = smul.u32 2, %s23
          %p5074 = scmp.lt.s32.totalorder %s5073, 5
          %s5075 = scalar_select %p5074, %s5073, 5
          %s5076 = smul.addr %s5075, 8
          %s5077 = scalar_lea.vmem %s7, %s5076
        $region84: #{e_func_forward.1} parent=79 // pred_fallthru
          _
      $region80: #{e_func_forward.1} parent=5 // pred_fallthru
        _
    $region6: #{e_func_forward.1} parent=1 // loop_footer
      %s21 = sadd.s32 1, %s17
    $region7: #{e_func_forward.1} parent=1 // loop_footer_branch
      %16 = sbr.rel target = $region3
    $region8: #{e_func_forward.1} parent=1 // loop_exit
      _
    %5078 = vsyncpa [#allocation3], 1
    %s5079 = scalar_lea.sflag [#allocation3], 1
    %5080 = vsyncpa %s5079, 1
    %5081 = vsyncpa [#allocation5], 1
    %5082 = vsyncpa [#allocation8], 1
    %5083 = vsyncpa [#allocation11], 1

</llo_original>
